<compile_context>
chip_gen: v7x
topology: tpu7x:2x2x1
jax: 0.10.0
libtpu: 0.0.40
codegen_flags: <defaults>
</compile_context>

<pallas_src>
import functools

import numpy as np
import jax
import jax.numpy as jnp
from jax.experimental import pallas as pl
from jax.experimental.pallas import tpu as pltpu

BN_EPS = 1e-5
EXPANSION = 4


# ---------------------------------------------------------------------------
# Fused Bottleneck kernel
# ---------------------------------------------------------------------------
def _bottleneck_kernel(stride, has_sc, B, OH, OW, Cin, Cmid, Cout,
                       x_ref, w1_ref, b1_ref, w2_ref, b2_ref, w3_ref, b3_ref,
                       o_ref, p1_ref):
    f32 = jnp.float32
    bf16 = jnp.bfloat16
    S = OH * OW
    M = B * S
    HW = x_ref.shape[1]          # full-resolution spatial size (H*W)

    # --- conv1 (1x1) + bn1 + relu: one big-M matmul over the full input -----
    x2d = x_ref[...].reshape(B * HW, Cin)                                # bf16
    a = jnp.dot(x2d, w1_ref[...], preferred_element_type=f32) + b1_ref[...]
    a = jnp.maximum(a, 0.0).astype(bf16)                                 # (B*HW, Cmid)

    # --- scatter conv1 output into the zero-padded bf16 scratch --------------
    if stride == 2:
        # Scratch: (4, B, OH+1, OW+1, Cmid).  Plane ph*2+pw holds conv1 output
        # at input positions (2r - ph, 2c - pw); row 0 / col 0 of the odd-phase
        # planes supply the 3x3 zero padding.  Border-only zeroing.
        p1_ref[2:4, :, 0:1, :, :] = jnp.zeros((2, B, 1, OW + 1, Cmid), bf16)
        p1_ref[1, :, :, 0:1, :] = jnp.zeros((B, OH + 1, 1, Cmid), bf16)
        p1_ref[3, :, :, 0:1, :] = jnp.zeros((B, OH + 1, 1, Cmid), bf16)
        a3 = a.reshape(B * 2 * OH * OW, 2, Cmid)          # split column parity
        for pw in range(2):
            a4 = a3[:, pw, :].reshape(B * OH, 2, OW, Cmid)  # split row parity
            for ph in range(2):
                val = a4[:, ph, :, :].reshape(B, OH, OW, Cmid)
                p1_ref[ph * 2 + pw, :, ph:ph + OH, pw:pw + OW, :] = val
    else:
        # Scratch: (B, OH+2, OW+2, Cmid); conv1 output at [1:OH+1, 1:OW+1].
        p1_ref[:, 0:1, :, :] = jnp.zeros((B, 1, OW + 2, Cmid), bf16)
        p1_ref[:, OH + 1:OH + 2, :, :] = jnp.zeros((B, 1, OW + 2, Cmid), bf16)
        p1_ref[:, :, 0:1, :] = jnp.zeros((B, OH + 2, 1, Cmid), bf16)
        p1_ref[:, :, OW + 1:OW + 2, :] = jnp.zeros((B, OH + 2, 1, Cmid), bf16)
        p1_ref[:, 1:OH + 1, 1:OW + 1, :] = a.reshape(B, OH, OW, Cmid)

    # --- conv2 (3x3, stride, pad=1) + bn2 + relu: im2col -> ONE K=9*Cmid dot --
    taps = []
    for kh in range(3):
        if stride == 2:
            ph_sel = 0 if kh == 1 else 1
            r0 = 1 if kh == 2 else 0
        else:
            ph_sel, r0 = 0, kh
        for kw in range(3):
            if stride == 2:
                pw_sel = 0 if kw == 1 else 1
                c0 = 1 if kw == 2 else 0
                patch = p1_ref[ph_sel * 2 + pw_sel, :, r0:r0 + OH, c0:c0 + OW, :]
            else:
                patch = p1_ref[:, r0:r0 + OH, kw:kw + OW, :]
            taps.append(patch.reshape(M, Cmid))
    col = jnp.concatenate(taps, axis=-1)                                 # (M, 9*Cmid) bf16
    out2 = jnp.dot(col, w2_ref[...], preferred_element_type=f32) + b2_ref[...]
    out2 = jnp.maximum(out2, 0.0).astype(bf16)                           # (M, Cmid)

    # --- conv3 (1x1) + bn3, fused with projection shortcut when present ------
    if has_sc:
        if stride == 2:
            xs = x2d.reshape(B * 2 * OH * OW, 2, Cin)[:, 0, :]
            xs = xs.reshape(B * OH, 2, OW, Cin)[:, 0, :, :].reshape(M, Cin)
        else:
            xs = x2d
        cat = jnp.concatenate([out2, xs], axis=-1)                       # (M, Cmid+Cin)
        y = jnp.dot(cat, w3_ref[...], preferred_element_type=f32) + b3_ref[...]
    else:
        y = jnp.dot(out2, w3_ref[...], preferred_element_type=f32) + b3_ref[...]
        y = y + x2d.astype(f32)                                          # identity shortcut
    y = jnp.maximum(y, 0.0)                                              # (M, Cout) f32
    o_ref[...] = y.reshape(B, S, Cout).astype(o_ref.dtype)


def _full_spec(a):
    idx = (0,) * a.ndim
    return pl.BlockSpec(a.shape, lambda n, _idx=idx: _idx)


def _choose_btile(N, S, HW, Cin, Cmid, Cout, OH, OW, stride):
    """Pick images-per-grid-step: fill M, keep >=2 grid steps, fit VMEM budget."""
    budget = 24 * 1024 * 1024   # conservative: under 32 MiB default scoped / v7x 64 MiB

    def est(b):
        x_blk = b * HW * Cin * 2
        out_blk = b * S * Cout * 4
        scr_rows = b * 4 * (OH + 1) * (OW + 1) if stride == 2 else b * (OH + 2) * (OW + 2)
        scr = scr_rows * Cmid * 2
        temps = b * HW * Cmid * 4 + b * S * 9 * Cmid * 2 + b * S * Cout * 4
        return 2 * (x_blk + out_blk) + scr + temps + (1 << 20)

    divs = [d for d in range(1, N + 1) if N % d == 0 and est(d) <= budget] or [1]
    pref = [d for d in divs if N // d >= 2] or divs     # keep both TCs busy (v7x)
    for d in pref:
        if d * S >= 256:                                # fill the MXU M dimension
            return d, est(d)
    return pref[-1], est(pref[-1])


def bottleneck_pallas(x_in, params, *, stride, OH, OW):
    N, HW, Cin = x_in.shape
    Cmid = params["b1"].shape[-1]
    Cout = params["b3"].shape[-1]
    has_sc = "w3sc" in params
    S = OH * OW
    if not has_sc:
        assert stride == 1 and Cin == Cout, "identity shortcut needs stride=1, Cin==Cout"

    B, est = _choose_btile(N, S, HW, Cin, Cmid, Cout, OH, OW, stride)

    if stride == 2:
        scratch = pltpu.VMEM((4, B, OH + 1, OW + 1, Cmid), jnp.bfloat16)
    else:
        scratch = pltpu.VMEM((B, OH + 2, OW + 2, Cmid), jnp.bfloat16)

    w3 = params["w3sc"] if has_sc else params["w3"]
    args = [x_in, params["w1"], params["b1"], params["w2"], params["b2"], w3, params["b3"]]
    in_specs = ([pl.BlockSpec((B, HW, Cin), lambda n: (n, 0, 0))]
                + [_full_spec(a) for a in args[1:]])

    cp_kwargs = dict(dimension_semantics=("parallel",))
    if est > 24 * 1024 * 1024:
        cp_kwargs["vmem_limit_bytes"] = int(min(est * 1.3, 100 * 1024 * 1024))

    kernel = functools.partial(_bottleneck_kernel, stride, has_sc, B, OH, OW,
                               Cin, Cmid, Cout)
    return pl.pallas_call(
        kernel,
        grid=(N // B,),
        in_specs=in_specs,
        out_specs=pl.BlockSpec((B, S, Cout), lambda n: (n, 0, 0)),
        out_shape=jax.ShapeDtypeStruct((N, S, Cout), jnp.float32),
        scratch_shapes=[scratch],
        compiler_params=pltpu.CompilerParams(**cp_kwargs),
    )(*args)


# ---------------------------------------------------------------------------
# Top-level forward (NCHW in / NCHW out, like the PyTorch module)
# ---------------------------------------------------------------------------
@functools.partial(jax.jit, static_argnames=("stride",))
def bottleneck_forward(params, x_nchw, *, stride):
    x = jnp.transpose(x_nchw, (0, 2, 3, 1))                    # NHWC
    N, H, W, Cin = x.shape
    if stride == 2:
        assert H % 2 == 0 and W % 2 == 0
        OH, OW = H // 2, W // 2
    elif stride == 1:
        OH, OW = H, W
    else:
        raise NotImplementedError("stride must be 1 or 2")

    x_in = x.astype(jnp.bfloat16).reshape(N, H * W, Cin)        # single relayout pass
    out = bottleneck_pallas(x_in, params, stride=stride, OH=OH, OW=OW)
    Cout = params["b3"].shape[-1]
    y = out.reshape(N, OH, OW, Cout)
    return jnp.transpose(y, (0, 3, 1, 2))                       # back to NCHW


# ---------------------------------------------------------------------------
# Parameter init (deterministic, eval-mode BN folded into conv weights)
# ---------------------------------------------------------------------------
def init_bottleneck_params(key, in_planes, planes, stride):
    cout = EXPANSION * planes
    ks = jax.random.split(key, 12)

    def conv_w(k, kh, kw, cin, co):
        std = 1.0 / np.sqrt(kh * kw * cin)
        return std * jax.random.normal(k, (kh, kw, cin, co), jnp.float32)

    def bn_fold(kg, kb, c):
        gamma = 1.0 + 0.1 * jax.random.normal(kg, (c,), jnp.float32)
        beta = 0.1 * jax.random.normal(kb, (c,), jnp.float32)
        running_mean = jnp.zeros((c,), jnp.float32)
        running_var = jnp.ones((c,), jnp.float32)
        scale = gamma / jnp.sqrt(running_var + BN_EPS)
        bias = beta - running_mean * scale
        return scale, bias

    w1 = conv_w(ks[0], 1, 1, in_planes, planes); s1, b1 = bn_fold(ks[1], ks[2], planes)
    w2 = conv_w(ks[3], 3, 3, planes, planes);    s2, b2 = bn_fold(ks[4], ks[5], planes)
    w3 = conv_w(ks[6], 1, 1, planes, cout);      s3, b3 = bn_fold(ks[7], ks[8], cout)

    params = {
        "w1": (w1[0, 0] * s1[None, :]).astype(jnp.bfloat16),                        # (Cin, Cmid)
        "b1": b1.reshape(1, planes),
        "w2": (w2 * s2[None, None, None, :]).astype(jnp.bfloat16)
              .reshape(9 * planes, planes),                                          # (9*Cmid, Cmid)
        "b2": b2.reshape(1, planes),
    }
    w3f = (w3[0, 0] * s3[None, :]).astype(jnp.bfloat16)                              # (Cmid, Cout)
    if stride != 1 or in_planes != cout:
        wsc = conv_w(ks[9], 1, 1, in_planes, cout); ssc, bsc = bn_fold(ks[10], ks[11], cout)
        wscf = (wsc[0, 0] * ssc[None, :]).astype(jnp.bfloat16)                       # (Cin, Cout)
        params["w3sc"] = jnp.concatenate([w3f, wscf], axis=0)                        # (Cmid+Cin, Cout)
        params["b3"] = (b3 + bsc).reshape(1, cout)
    else:
        params["w3"] = w3f
        params["b3"] = b3.reshape(1, cout)
    return params


# ---------------------------------------------------------------------------
# Plain-JAX reference (same bf16 quantization points) for validation
# ---------------------------------------------------------------------------
def bottleneck_reference(params, x_nchw, *, stride):
    x = jnp.transpose(x_nchw, (0, 2, 3, 1)).astype(jnp.bfloat16)
    Cin = params["w1"].shape[0]
    Cmid = params["b1"].shape[-1]

    def conv(inp, w, s, pad):
        return jax.lax.conv_general_dilated(
            inp, w, (s, s), ((pad, pad), (pad, pad)),
            dimension_numbers=("NHWC", "HWIO", "NHWC"),
            preferred_element_type=jnp.float32)

    w1 = params["w1"].reshape(1, 1, Cin, Cmid)
    w2 = params["w2"].reshape(3, 3, Cmid, Cmid)
    o = jnp.maximum(conv(x, w1, 1, 0) + params["b1"][0], 0.0)
    o = jnp.maximum(conv(o.astype(jnp.bfloat16), w2, stride, 1) + params["b2"][0], 0.0)
    if "w3sc" in params:
        cout = params["b3"].shape[-1]
        w3 = params["w3sc"][:Cmid].reshape(1, 1, Cmid, cout)
        wsc = params["w3sc"][Cmid:].reshape(1, 1, Cin, cout)
        o = conv(o.astype(jnp.bfloat16), w3, 1, 0) + params["b3"][0]
        sc = conv(x, wsc, stride, 0)
    else:
        cout = params["b3"].shape[-1]
        w3 = params["w3"].reshape(1, 1, Cmid, cout)
        o = conv(o.astype(jnp.bfloat16), w3, 1, 0) + params["b3"][0]
        sc = x.astype(jnp.float32)
    y = jnp.maximum(o + sc, 0.0)
    return jnp.transpose(y, (0, 3, 1, 2))


# ---------------------------------------------------------------------------
if __name__ == "__main__":
    key = jax.random.PRNGKey(0)
    k_params, k_input, k_params2, k_input2 = jax.random.split(key, 4)

    # Case 1: Bottleneck(in_planes=64, planes=32, stride=2) -> projection shortcut
    in_planes, planes, stride = 64, 32, 2
    params = init_bottleneck_params(k_params, in_planes, planes, stride)
    x = jax.random.normal(k_input, (2, in_planes, 16, 16), jnp.float32)
    y = bottleneck_forward(params, x, stride=stride)
    jax.block_until_ready(y)
    assert y.shape == (2, EXPANSION * planes, 8, 8)
    assert y.dtype == jnp.float32
    assert bool(jnp.all(jnp.isfinite(y)))
    y_ref = bottleneck_reference(params, x, stride=stride)
    np.testing.assert_allclose(np.asarray(y), np.asarray(y_ref), rtol=2e-2, atol=2e-2)

    # Case 2: Bottleneck(in_planes=128, planes=32, stride=1) -> identity shortcut
    in_planes2, planes2, stride2 = 128, 32, 1
    params2 = init_bottleneck_params(k_params2, in_planes2, planes2, stride2)
    x2 = jax.random.normal(k_input2, (2, in_planes2, 8, 8), jnp.float32)
    y2 = bottleneck_forward(params2, x2, stride=stride2)
    jax.block_until_ready(y2)
    assert y2.shape == (2, EXPANSION * planes2, 8, 8)
    y2_ref = bottleneck_reference(params2, x2, stride=stride2)
    np.testing.assert_allclose(np.asarray(y2), np.asarray(y2_ref), rtol=2e-2, atol=2e-2)

    print("KERNEL_OK")
</pallas_src>

<mosaic_0001>
module attributes {stable_mosaic.version = 11 : i64} {
  func.func @_bottleneck_kernel(%arg0: i32, %arg1: memref<1x256x64xbf16, #tpu.memory_space<vmem>>, %arg2: memref<64x32xbf16, #tpu.memory_space<vmem>>, %arg3: memref<1x32xf32, #tpu.memory_space<vmem>>, %arg4: memref<288x32xbf16, #tpu.memory_space<vmem>>, %arg5: memref<1x32xf32, #tpu.memory_space<vmem>>, %arg6: memref<96x128xbf16, #tpu.memory_space<vmem>>, %arg7: memref<1x128xf32, #tpu.memory_space<vmem>>, %arg8: memref<1x64x128xf32, #tpu.memory_space<vmem>>, %arg9: memref<4x1x9x9x32xbf16, #tpu.memory_space<vmem>>) attributes {dimension_semantics = [#tpu.dimension_semantics<parallel>], iteration_bounds = array<i64: 2>, scalar_prefetch = 0 : i64, scratch_operands = 1 : i64, tpu.core_type = #tpu.core_type<tc>, window_params = [{transform_indices = @transform_0, window_bounds = array<i64: 1, 256, 64>}, {pipeline_mode = #tpu.pipeline_mode<synchronous>, transform_indices = @transform_1, window_bounds = array<i64: 64, 32>}, {pipeline_mode = #tpu.pipeline_mode<synchronous>, transform_indices = @transform_2, window_bounds = array<i64: 1, 32>}, {pipeline_mode = #tpu.pipeline_mode<synchronous>, transform_indices = @transform_3, window_bounds = array<i64: 288, 32>}, {pipeline_mode = #tpu.pipeline_mode<synchronous>, transform_indices = @transform_4, window_bounds = array<i64: 1, 32>}, {pipeline_mode = #tpu.pipeline_mode<synchronous>, transform_indices = @transform_5, window_bounds = array<i64: 96, 128>}, {pipeline_mode = #tpu.pipeline_mode<synchronous>, transform_indices = @transform_6, window_bounds = array<i64: 1, 128>}, {transform_indices = @transform_7, window_bounds = array<i64: 1, 64, 128>}]} {
    %c0 = arith.constant 0 : index
    %c0_0 = arith.constant 0 : index
    %c0_1 = arith.constant 0 : index
    %0 = vector.load %arg1[%c0, %c0_0, %c0_1] : memref<1x256x64xbf16, #tpu.memory_space<vmem>>, vector<1x256x64xbf16>
    %1 = vector.shape_cast %0 : vector<1x256x64xbf16> to vector<256x64xbf16>
    %c0_2 = arith.constant 0 : index
    %c0_3 = arith.constant 0 : index
    %2 = vector.load %arg2[%c0_2, %c0_3] : memref<64x32xbf16, #tpu.memory_space<vmem>>, vector<64x32xbf16>
    %cst = arith.constant dense<0.000000e+00> : vector<256x32xf32>
    %3 = tpu.matmul %1, %2, %cst {dimension_numbers = #tpu.dot_dimension_numbers<[1], [0], [0], [1], [0, 0, 1, 1], [], []>} : vector<256x64xbf16>, vector<64x32xbf16>, vector<256x32xf32> -> vector<256x32xf32>
    %c0_4 = arith.constant 0 : index
    %c0_5 = arith.constant 0 : index
    %4 = vector.load %arg3[%c0_4, %c0_5] : memref<1x32xf32, #tpu.memory_space<vmem>>, vector<1x32xf32>
    %5 = vector.broadcast %4 : vector<1x32xf32> to vector<256x32xf32>
    %6 = arith.addf %3, %5 : vector<256x32xf32>
    %cst_6 = arith.constant 0.000000e+00 : f32
    %7 = vector.broadcast %cst_6 : f32 to vector<256x32xf32>
    %8 = arith.maximumf %6, %7 : vector<256x32xf32>
    %9 = arith.truncf %8 : vector<256x32xf32> to vector<256x32xbf16>
    %cst_7 = arith.constant 0.000000e+00 : bf16
    %10 = vector.broadcast %cst_7 : bf16 to vector<2x1x1x9x32xbf16>
    %c2 = arith.constant 2 : index
    %c0_8 = arith.constant 0 : index
    %c0_9 = arith.constant 0 : index
    %c0_10 = arith.constant 0 : index
    %c0_11 = arith.constant 0 : index
    %11 = vector.load %arg9[%c2, %c0_8, %c0_9, %c0_10, %c0_11] : memref<4x1x9x9x32xbf16, #tpu.memory_space<vmem>>, vector<2x1x1x9x32xbf16>
    tpu.vector_store %arg9[%c2, %c0_8, %c0_9, %c0_10, %c0_11], %10 {strides = array<i32>} : memref<4x1x9x9x32xbf16, #tpu.memory_space<vmem>>, vector<2x1x1x9x32xbf16>,
    %cst_12 = arith.constant 0.000000e+00 : bf16
    %12 = vector.broadcast %cst_12 : bf16 to vector<1x9x1x32xbf16>
    %c1 = arith.constant 1 : index
    %c0_13 = arith.constant 0 : index
    %c0_14 = arith.constant 0 : index
    %c0_15 = arith.constant 0 : index
    %c0_16 = arith.constant 0 : index
    %13 = vector.load %arg9[%c1, %c0_13, %c0_14, %c0_15, %c0_16] : memref<4x1x9x9x32xbf16, #tpu.memory_space<vmem>>, vector<1x1x9x1x32xbf16>
    %14 = vector.shape_cast %13 : vector<1x1x9x1x32xbf16> to vector<1x9x1x32xbf16>
    %15 = vector.shape_cast %12 : vector<1x9x1x32xbf16> to vector<1x1x9x1x32xbf16>
    tpu.vector_store %arg9[%c1, %c0_13, %c0_14, %c0_15, %c0_16], %15 {strides = array<i32>} : memref<4x1x9x9x32xbf16, #tpu.memory_space<vmem>>, vector<1x1x9x1x32xbf16>,
    %cst_17 = arith.constant 0.000000e+00 : bf16
    %16 = vector.broadcast %cst_17 : bf16 to vector<1x9x1x32xbf16>
    %c3 = arith.constant 3 : index
    %c0_18 = arith.constant 0 : index
    %c0_19 = arith.constant 0 : index
    %c0_20 = arith.constant 0 : index
    %c0_21 = arith.constant 0 : index
    %17 = vector.load %arg9[%c3, %c0_18, %c0_19, %c0_20, %c0_21] : memref<4x1x9x9x32xbf16, #tpu.memory_space<vmem>>, vector<1x1x9x1x32xbf16>
    %18 = vector.shape_cast %17 : vector<1x1x9x1x32xbf16> to vector<1x9x1x32xbf16>
    %19 = vector.shape_cast %16 : vector<1x9x1x32xbf16> to vector<1x1x9x1x32xbf16>
    tpu.vector_store %arg9[%c3, %c0_18, %c0_19, %c0_20, %c0_21], %19 {strides = array<i32>} : memref<4x1x9x9x32xbf16, #tpu.memory_space<vmem>>, vector<1x1x9x1x32xbf16>,
    %20 = vector.shape_cast %9 : vector<256x32xbf16> to vector<128x2x32xbf16>
    %21 = vector.extract_strided_slice %20 {offsets = [0, 0, 0], sizes = [128, 1, 32], strides = [1, 1, 1]} : vector<128x2x32xbf16> to vector<128x1x32xbf16>
    %22 = vector.shape_cast %21 : vector<128x1x32xbf16> to vector<128x32xbf16>
    %23 = vector.shape_cast %22 : vector<128x32xbf16> to vector<8x2x8x32xbf16>
    %24 = vector.extract_strided_slice %23 {offsets = [0, 0, 0, 0], sizes = [8, 1, 8, 32], strides = [1, 1, 1, 1]} : vector<8x2x8x32xbf16> to vector<8x1x8x32xbf16>
    %25 = vector.shape_cast %24 : vector<8x1x8x32xbf16> to vector<8x8x32xbf16>
    %26 = vector.shape_cast %25 : vector<8x8x32xbf16> to vector<1x8x8x32xbf16>
    %c0_22 = arith.constant 0 : index
    %c0_23 = arith.constant 0 : index
    %c0_24 = arith.constant 0 : index
    %c0_25 = arith.constant 0 : index
    %c0_26 = arith.constant 0 : index
    %27 = vector.load %arg9[%c0_22, %c0_23, %c0_24, %c0_25, %c0_26] : memref<4x1x9x9x32xbf16, #tpu.memory_space<vmem>>, vector<1x1x8x8x32xbf16>
    %28 = vector.shape_cast %27 : vector<1x1x8x8x32xbf16> to vector<1x8x8x32xbf16>
    %29 = vector.shape_cast %26 : vector<1x8x8x32xbf16> to vector<1x1x8x8x32xbf16>
    tpu.vector_store %arg9[%c0_22, %c0_23, %c0_24, %c0_25, %c0_26], %29 {strides = array<i32>} : memref<4x1x9x9x32xbf16, #tpu.memory_space<vmem>>, vector<1x1x8x8x32xbf16>,
    %30 = vector.extract_strided_slice %23 {offsets = [0, 1, 0, 0], sizes = [8, 1, 8, 32], strides = [1, 1, 1, 1]} : vector<8x2x8x32xbf16> to vector<8x1x8x32xbf16>
    %31 = vector.shape_cast %30 : vector<8x1x8x32xbf16> to vector<8x8x32xbf16>
    %32 = vector.shape_cast %31 : vector<8x8x32xbf16> to vector<1x8x8x32xbf16>
    %c2_27 = arith.constant 2 : index
    %c0_28 = arith.constant 0 : index
    %c1_29 = arith.constant 1 : index
    %c0_30 = arith.constant 0 : index
    %c0_31 = arith.constant 0 : index
    %33 = vector.load %arg9[%c2_27, %c0_28, %c1_29, %c0_30, %c0_31] : memref<4x1x9x9x32xbf16, #tpu.memory_space<vmem>>, vector<1x1x8x8x32xbf16>
    %34 = vector.shape_cast %33 : vector<1x1x8x8x32xbf16> to vector<1x8x8x32xbf16>
    %35 = vector.shape_cast %32 : vector<1x8x8x32xbf16> to vector<1x1x8x8x32xbf16>
    tpu.vector_store %arg9[%c2_27, %c0_28, %c1_29, %c0_30, %c0_31], %35 {strides = array<i32>} : memref<4x1x9x9x32xbf16, #tpu.memory_space<vmem>>, vector<1x1x8x8x32xbf16>,
    %36 = vector.extract_strided_slice %20 {offsets = [0, 1, 0], sizes = [128, 1, 32], strides = [1, 1, 1]} : vector<128x2x32xbf16> to vector<128x1x32xbf16>
    %37 = vector.shape_cast %36 : vector<128x1x32xbf16> to vector<128x32xbf16>
    %38 = vector.shape_cast %37 : vector<128x32xbf16> to vector<8x2x8x32xbf16>
    %39 = vector.extract_strided_slice %38 {offsets = [0, 0, 0, 0], sizes = [8, 1, 8, 32], strides = [1, 1, 1, 1]} : vector<8x2x8x32xbf16> to vector<8x1x8x32xbf16>
    %40 = vector.shape_cast %39 : vector<8x1x8x32xbf16> to vector<8x8x32xbf16>
    %41 = vector.shape_cast %40 : vector<8x8x32xbf16> to vector<1x8x8x32xbf16>
    %c1_32 = arith.constant 1 : index
    %c0_33 = arith.constant 0 : index
    %c0_34 = arith.constant 0 : index
    %c1_35 = arith.constant 1 : index
    %c0_36 = arith.constant 0 : index
    %42 = vector.load %arg9[%c1_32, %c0_33, %c0_34, %c1_35, %c0_36] : memref<4x1x9x9x32xbf16, #tpu.memory_space<vmem>>, vector<1x1x8x8x32xbf16>
    %43 = vector.shape_cast %42 : vector<1x1x8x8x32xbf16> to vector<1x8x8x32xbf16>
    %44 = vector.shape_cast %41 : vector<1x8x8x32xbf16> to vector<1x1x8x8x32xbf16>
    tpu.vector_store %arg9[%c1_32, %c0_33, %c0_34, %c1_35, %c0_36], %44 {strides = array<i32>} : memref<4x1x9x9x32xbf16, #tpu.memory_space<vmem>>, vector<1x1x8x8x32xbf16>,
    %45 = vector.extract_strided_slice %38 {offsets = [0, 1, 0, 0], sizes = [8, 1, 8, 32], strides = [1, 1, 1, 1]} : vector<8x2x8x32xbf16> to vector<8x1x8x32xbf16>
    %46 = vector.shape_cast %45 : vector<8x1x8x32xbf16> to vector<8x8x32xbf16>
    %47 = vector.shape_cast %46 : vector<8x8x32xbf16> to vector<1x8x8x32xbf16>
    %c3_37 = arith.constant 3 : index
    %c0_38 = arith.constant 0 : index
    %c1_39 = arith.constant 1 : index
    %c1_40 = arith.constant 1 : index
    %c0_41 = arith.constant 0 : index
    %48 = vector.load %arg9[%c3_37, %c0_38, %c1_39, %c1_40, %c0_41] : memref<4x1x9x9x32xbf16, #tpu.memory_space<vmem>>, vector<1x1x8x8x32xbf16>
    %49 = vector.shape_cast %48 : vector<1x1x8x8x32xbf16> to vector<1x8x8x32xbf16>
    %50 = vector.shape_cast %47 : vector<1x8x8x32xbf16> to vector<1x1x8x8x32xbf16>
    tpu.vector_store %arg9[%c3_37, %c0_38, %c1_39, %c1_40, %c0_41], %50 {strides = array<i32>} : memref<4x1x9x9x32xbf16, #tpu.memory_space<vmem>>, vector<1x1x8x8x32xbf16>,
    %c3_42 = arith.constant 3 : index
    %c0_43 = arith.constant 0 : index
    %c0_44 = arith.constant 0 : index
    %c0_45 = arith.constant 0 : index
    %c0_46 = arith.constant 0 : index
    %51 = vector.load %arg9[%c3_42, %c0_43, %c0_44, %c0_45, %c0_46] : memref<4x1x9x9x32xbf16, #tpu.memory_space<vmem>>, vector<1x1x8x8x32xbf16>
    %52 = vector.shape_cast %51 : vector<1x1x8x8x32xbf16> to vector<1x8x8x32xbf16>
    %53 = vector.shape_cast %52 : vector<1x8x8x32xbf16> to vector<64x32xbf16>
    %c2_47 = arith.constant 2 : index
    %c0_48 = arith.constant 0 : index
    %c0_49 = arith.constant 0 : index
    %c0_50 = arith.constant 0 : index
    %c0_51 = arith.constant 0 : index
    %54 = vector.load %arg9[%c2_47, %c0_48, %c0_49, %c0_50, %c0_51] : memref<4x1x9x9x32xbf16, #tpu.memory_space<vmem>>, vector<1x1x8x8x32xbf16>
    %55 = vector.shape_cast %54 : vector<1x1x8x8x32xbf16> to vector<1x8x8x32xbf16>
    %56 = vector.shape_cast %55 : vector<1x8x8x32xbf16> to vector<64x32xbf16>
    %c3_52 = arith.constant 3 : index
    %c0_53 = arith.constant 0 : index
    %c0_54 = arith.constant 0 : index
    %c1_55 = arith.constant 1 : index
    %c0_56 = arith.constant 0 : index
    %57 = vector.load %arg9[%c3_52, %c0_53, %c0_54, %c1_55, %c0_56] : memref<4x1x9x9x32xbf16, #tpu.memory_space<vmem>>, vector<1x1x8x8x32xbf16>
    %58 = vector.shape_cast %57 : vector<1x1x8x8x32xbf16> to vector<1x8x8x32xbf16>
    %59 = vector.shape_cast %58 : vector<1x8x8x32xbf16> to vector<64x32xbf16>
    %c1_57 = arith.constant 1 : index
    %c0_58 = arith.constant 0 : index
    %c0_59 = arith.constant 0 : index
    %c0_60 = arith.constant 0 : index
    %c0_61 = arith.constant 0 : index
    %60 = vector.load %arg9[%c1_57, %c0_58, %c0_59, %c0_60, %c0_61] : memref<4x1x9x9x32xbf16, #tpu.memory_space<vmem>>, vector<1x1x8x8x32xbf16>
    %61 = vector.shape_cast %60 : vector<1x1x8x8x32xbf16> to vector<1x8x8x32xbf16>
    %62 = vector.shape_cast %61 : vector<1x8x8x32xbf16> to vector<64x32xbf16>
    %c0_62 = arith.constant 0 : index
    %c0_63 = arith.constant 0 : index
    %c0_64 = arith.constant 0 : index
    %c0_65 = arith.constant 0 : index
    %c0_66 = arith.constant 0 : index
    %63 = vector.load %arg9[%c0_62, %c0_63, %c0_64, %c0_65, %c0_66] : memref<4x1x9x9x32xbf16, #tpu.memory_space<vmem>>, vector<1x1x8x8x32xbf16>
    %64 = vector.shape_cast %63 : vector<1x1x8x8x32xbf16> to vector<1x8x8x32xbf16>
    %65 = vector.shape_cast %64 : vector<1x8x8x32xbf16> to vector<64x32xbf16>
    %c1_67 = arith.constant 1 : index
    %c0_68 = arith.constant 0 : index
    %c0_69 = arith.constant 0 : index
    %c1_70 = arith.constant 1 : index
    %c0_71 = arith.constant 0 : index
    %66 = vector.load %arg9[%c1_67, %c0_68, %c0_69, %c1_70, %c0_71] : memref<4x1x9x9x32xbf16, #tpu.memory_space<vmem>>, vector<1x1x8x8x32xbf16>
    %67 = vector.shape_cast %66 : vector<1x1x8x8x32xbf16> to vector<1x8x8x32xbf16>
    %68 = vector.shape_cast %67 : vector<1x8x8x32xbf16> to vector<64x32xbf16>
    %c3_72 = arith.constant 3 : index
    %c0_73 = arith.constant 0 : index
    %c1_74 = arith.constant 1 : index
    %c0_75 = arith.constant 0 : index
    %c0_76 = arith.constant 0 : index
    %69 = vector.load %arg9[%c3_72, %c0_73, %c1_74, %c0_75, %c0_76] : memref<4x1x9x9x32xbf16, #tpu.memory_space<vmem>>, vector<1x1x8x8x32xbf16>
    %70 = vector.shape_cast %69 : vector<1x1x8x8x32xbf16> to vector<1x8x8x32xbf16>
    %71 = vector.shape_cast %70 : vector<1x8x8x32xbf16> to vector<64x32xbf16>
    %c2_77 = arith.constant 2 : index
    %c0_78 = arith.constant 0 : index
    %c1_79 = arith.constant 1 : index
    %c0_80 = arith.constant 0 : index
    %c0_81 = arith.constant 0 : index
    %72 = vector.load %arg9[%c2_77, %c0_78, %c1_79, %c0_80, %c0_81] : memref<4x1x9x9x32xbf16, #tpu.memory_space<vmem>>, vector<1x1x8x8x32xbf16>
    %73 = vector.shape_cast %72 : vector<1x1x8x8x32xbf16> to vector<1x8x8x32xbf16>
    %74 = vector.shape_cast %73 : vector<1x8x8x32xbf16> to vector<64x32xbf16>
    %c3_82 = arith.constant 3 : index
    %c0_83 = arith.constant 0 : index
    %c1_84 = arith.constant 1 : index
    %c1_85 = arith.constant 1 : index
    %c0_86 = arith.constant 0 : index
    %75 = vector.load %arg9[%c3_82, %c0_83, %c1_84, %c1_85, %c0_86] : memref<4x1x9x9x32xbf16, #tpu.memory_space<vmem>>, vector<1x1x8x8x32xbf16>
    %76 = vector.shape_cast %75 : vector<1x1x8x8x32xbf16> to vector<1x8x8x32xbf16>
    %77 = vector.shape_cast %76 : vector<1x8x8x32xbf16> to vector<64x32xbf16>
    %78 = tpu.concatenate %53, %56, %59, %62, %65, %68, %71, %74, %77 in 1 : vector<64x32xbf16>, vector<64x32xbf16>, vector<64x32xbf16>, vector<64x32xbf16>, vector<64x32xbf16>, vector<64x32xbf16>, vector<64x32xbf16>, vector<64x32xbf16>, vector<64x32xbf16> -> vector<64x288xbf16>
    %c0_87 = arith.constant 0 : index
    %c0_88 = arith.constant 0 : index
    %79 = vector.load %arg4[%c0_87, %c0_88] : memref<288x32xbf16, #tpu.memory_space<vmem>>, vector<288x32xbf16>
    %cst_89 = arith.constant dense<0.000000e+00> : vector<64x32xf32>
    %80 = tpu.matmul %78, %79, %cst_89 {dimension_numbers = #tpu.dot_dimension_numbers<[1], [0], [0], [1], [0, 0, 1, 1], [], []>} : vector<64x288xbf16>, vector<288x32xbf16>, vector<64x32xf32> -> vector<64x32xf32>
    %c0_90 = arith.constant 0 : index
    %c0_91 = arith.constant 0 : index
    %81 = vector.load %arg5[%c0_90, %c0_91] : memref<1x32xf32, #tpu.memory_space<vmem>>, vector<1x32xf32>
    %82 = vector.broadcast %81 : vector<1x32xf32> to vector<64x32xf32>
    %83 = arith.addf %80, %82 : vector<64x32xf32>
    %cst_92 = arith.constant 0.000000e+00 : f32
    %84 = vector.broadcast %cst_92 : f32 to vector<64x32xf32>
    %85 = arith.maximumf %83, %84 : vector<64x32xf32>
    %86 = arith.truncf %85 : vector<64x32xf32> to vector<64x32xbf16>
    %87 = vector.shape_cast %1 : vector<256x64xbf16> to vector<128x2x64xbf16>
    %88 = vector.extract_strided_slice %87 {offsets = [0, 0, 0], sizes = [128, 1, 64], strides = [1, 1, 1]} : vector<128x2x64xbf16> to vector<128x1x64xbf16>
    %89 = vector.shape_cast %88 : vector<128x1x64xbf16> to vector<128x64xbf16>
    %90 = vector.shape_cast %89 : vector<128x64xbf16> to vector<8x2x8x64xbf16>
    %91 = vector.extract_strided_slice %90 {offsets = [0, 0, 0, 0], sizes = [8, 1, 8, 64], strides = [1, 1, 1, 1]} : vector<8x2x8x64xbf16> to vector<8x1x8x64xbf16>
    %92 = vector.shape_cast %91 : vector<8x1x8x64xbf16> to vector<8x8x64xbf16>
    %93 = vector.shape_cast %92 : vector<8x8x64xbf16> to vector<64x64xbf16>
    %94 = tpu.concatenate %86, %93 in 1 : vector<64x32xbf16>, vector<64x64xbf16> -> vector<64x96xbf16>
    %c0_93 = arith.constant 0 : index
    %c0_94 = arith.constant 0 : index
    %95 = vector.load %arg6[%c0_93, %c0_94] : memref<96x128xbf16, #tpu.memory_space<vmem>>, vector<96x128xbf16>
    %cst_95 = arith.constant dense<0.000000e+00> : vector<64x128xf32>
    %96 = tpu.matmul %94, %95, %cst_95 {dimension_numbers = #tpu.dot_dimension_numbers<[1], [0], [0], [1], [0, 0, 1, 1], [], []>} : vector<64x96xbf16>, vector<96x128xbf16>, vector<64x128xf32> -> vector<64x128xf32>
    %c0_96 = arith.constant 0 : index
    %c0_97 = arith.constant 0 : index
    %97 = vector.load %arg7[%c0_96, %c0_97] : memref<1x128xf32, #tpu.memory_space<vmem>>, vector<1x128xf32>
    %98 = vector.broadcast %97 : vector<1x128xf32> to vector<64x128xf32>
    %99 = arith.addf %96, %98 : vector<64x128xf32>
    %cst_98 = arith.constant 0.000000e+00 : f32
    %100 = vector.broadcast %cst_98 : f32 to vector<64x128xf32>
    %101 = arith.maximumf %99, %100 : vector<64x128xf32>
    %102 = vector.shape_cast %101 : vector<64x128xf32> to vector<1x64x128xf32>
    %c0_99 = arith.constant 0 : index
    %c0_100 = arith.constant 0 : index
    %c0_101 = arith.constant 0 : index
    %103 = vector.load %arg8[%c0_99, %c0_100, %c0_101] : memref<1x64x128xf32, #tpu.memory_space<vmem>>, vector<1x64x128xf32>
    tpu.vector_store %arg8[%c0_99, %c0_100, %c0_101], %102 {strides = array<i32>} : memref<1x64x128xf32, #tpu.memory_space<vmem>>, vector<1x64x128xf32>,
    return
  }
  func.func @transform_0(%arg0: i32) -> (i32, i32, i32) {
    %c0_i32 = arith.constant 0 : i32
    %c0_i32_0 = arith.constant 0 : i32
    %c0_i32_1 = arith.constant 0 : i32
    return %arg0, %c0_i32, %c0_i32_0 : i32, i32, i32
  }
  func.func @transform_1(%arg0: i32) -> (i32, i32) {
    %c0_i32 = arith.constant 0 : i32
    %c0_i32_0 = arith.constant 0 : i32
    %c0_i32_1 = arith.constant 0 : i32
    return %c0_i32, %c0_i32_0 : i32, i32
  }
  func.func @transform_2(%arg0: i32) -> (i32, i32) {
    %c0_i32 = arith.constant 0 : i32
    %c0_i32_0 = arith.constant 0 : i32
    %c0_i32_1 = arith.constant 0 : i32
    return %c0_i32, %c0_i32_0 : i32, i32
  }
  func.func @transform_3(%arg0: i32) -> (i32, i32) {
    %c0_i32 = arith.constant 0 : i32
    %c0_i32_0 = arith.constant 0 : i32
    %c0_i32_1 = arith.constant 0 : i32
    return %c0_i32, %c0_i32_0 : i32, i32
  }
  func.func @transform_4(%arg0: i32) -> (i32, i32) {
    %c0_i32 = arith.constant 0 : i32
    %c0_i32_0 = arith.constant 0 : i32
    %c0_i32_1 = arith.constant 0 : i32
    return %c0_i32, %c0_i32_0 : i32, i32
  }
  func.func @transform_5(%arg0: i32) -> (i32, i32) {
    %c0_i32 = arith.constant 0 : i32
    %c0_i32_0 = arith.constant 0 : i32
    %c0_i32_1 = arith.constant 0 : i32
    return %c0_i32, %c0_i32_0 : i32, i32
  }
  func.func @transform_6(%arg0: i32) -> (i32, i32) {
    %c0_i32 = arith.constant 0 : i32
    %c0_i32_0 = arith.constant 0 : i32
    %c0_i32_1 = arith.constant 0 : i32
    return %c0_i32, %c0_i32_0 : i32, i32
  }
  func.func @transform_7(%arg0: i32) -> (i32, i32, i32) {
    %c0_i32 = arith.constant 0 : i32
    %c0_i32_0 = arith.constant 0 : i32
    %c0_i32_1 = arith.constant 0 : i32
    return %arg0, %c0_i32, %c0_i32_0 : i32, i32, i32
  }
}

</mosaic_0001>

<llo_original>
// kernel: bottleneck_forward.1
$region0: #{bottleneck_forward.1}
  #allocation0 [shape = 'u32[]', space=smem, size = 0x4, offset = 0x4, fixed_abs, tag = 'smem constant byte address 0x4 - core index']
  #allocation1 [shape = 'u32[144,128]{1,0:T(1,128)}', space=vmem, size = 0x12000, scoped, tag = 'internal scratch']
  #allocation2 [shape = 'bf16[4,1,9,9,32]{4,3,2,1,0:T(8,128)(2,1)}', space=vmem, size = 0x24000, scoped, tag = 'scratch operand']
  %s0 = inlined_call_operand.vmem [shape: bf16[2,256,64], index: 0, kind: input, shape index: {}]
  %s1 = inlined_call_operand.vmem [shape: bf16[64,32], index: 1, kind: input, shape index: {}]
  %s2 = inlined_call_operand.vmem [shape: f32[1,32], index: 2, kind: input, shape index: {}]
  %s3 = inlined_call_operand.vmem [shape: bf16[288,32], index: 3, kind: input, shape index: {}]
  %s4 = inlined_call_operand.vmem [shape: f32[1,32], index: 4, kind: input, shape index: {}]
  %s5 = inlined_call_operand.vmem [shape: bf16[96,128], index: 5, kind: input, shape index: {}]
  %s6 = inlined_call_operand.vmem [shape: f32[1,128], index: 6, kind: input, shape index: {}]
  %s7 = inlined_call_operand.hbm [shape: f32[2,64,128], index: 7, kind: output, shape index: {}]
  %s8 = sld [smem:[#allocation0]]
  $region61: #{bottleneck_forward.1} parent=0
    _
  %s10 = ssub.s32 1, %s8
  %s11 = scalar_select 0, %s10, %s8
  $region1: #{bottleneck_forward.1} parent=0
    #allocation3 [shape = 'u8[65536]{0}', space=vmem, size = 0x10000, scoped, tag = 'output window, operand 0']
    #allocation4 [shape = 's32[2]{0}', space=sflag, size = 0x8, scoped, tag = 'scoped memory for bottleneck_forward.1']
    %12 = vsyncpa [#allocation4], 0
    %s13 = scalar_lea.sflag [#allocation4], 1
    %14 = vsyncpa %s13, 0
    loop: start=0, step=1, limit=4
    $region2: #{bottleneck_forward.1} parent=1 // loop_pre_header
      _
    $region3: #{bottleneck_forward.1} parent=1 // loop_header
      %s16 = sphi 0, %s20
      %p17 = scmp.ge.s32.totalorder %s16, 4
      %s26 = sphi 0, %s28
      %s29 = sphi 0, %s26
      %s30 = sphi 0, %s29
      %s46 = sphi 0, %s30
      %s50 = sphi 0, %s50
      %s52 = sphi 0, %s50
      %s53 = sphi 0, %s52
      %s67 = sphi 0, %s53
      %s71 = sphi 0, %s71
      %s73 = sphi 0, %s71
      %s74 = sphi 0, %s73
      %s88 = sphi 0, %s74
      %s92 = sphi 0, %s92
      %s94 = sphi 0, %s92
      %s95 = sphi 0, %s94
      %s109 = sphi 0, %s95
      %s113 = sphi 0, %s113
      %s115 = sphi 0, %s113
      %s116 = sphi 0, %s115
      %s130 = sphi 0, %s116
      %s134 = sphi 0, %s134
      %s136 = sphi 0, %s134
      %s137 = sphi 0, %s136
      %s151 = sphi 0, %s137
      %s155 = sphi 0, %s155
      %s157 = sphi 0, %s155
      %s158 = sphi 0, %s157
      %s172 = sphi 0, %s158
      %s178 = sphi 0, %s180
      %s181 = sphi 0, %s178
      %s182 = sphi 0, %s181
      %s198 = sphi 0, %s182
    $region4: #{bottleneck_forward.1} parent=1 // loop_header_branch
      %19 = sbr.rel (%p17) target = $region8
    $region5: #{bottleneck_forward.1} parent=1 // loop_body
      %s21 = ssub.s32 %s16, 1
      %s22 = ssub.s32 %s16, 2
      %s23 = sadd.s32 %s16, 1
      %s24 = ssub.s32 %s16, %s23
      %p25 = scmp.eq.s32.totalorder %s24, 0
      %s27 = sadd.s32 %s26, 1
      %s28 = scalar_select %p25, %s26, %s27
      %p31 = pneg %p25
      %p32 = scmp.eq.s32.totalorder %s16, 1
      %p33 = por %p31, %p32
      %p34 = scmp.ne.s32.totalorder %s26, %s29
      %p35 = scmp.eq.s32.totalorder %s16, 0
      %p36 = por %p34, %p35
      %p37 = scmp.ne.s32.totalorder %s26, %s29
      %p38 = scmp.eq.s32.totalorder %s21, 1
      %p39 = por %p37, %p38
      %p40 = scmp.ne.s32.totalorder %s29, %s30
      %p41 = scmp.eq.s32.totalorder %s21, 0
      %p42 = por %p40, %p41
      %p43 = scmp.ne.s32.totalorder %s29, %s30
      %p44 = scmp.eq.s32.totalorder %s22, 1
      %p45 = por %p43, %p44
      %p47 = scmp.ne.s32.totalorder %s30, %s46
      %p48 = scmp.eq.s32.totalorder %s22, 0
      %p49 = por %p47, %p48
      %s51 = sadd.s32 %s50, 1
      %p54 = scmp.eq.s32.totalorder %s16, 1
      %p55 = scmp.ne.s32.totalorder %s50, %s52
      %p56 = scmp.eq.s32.totalorder %s16, 0
      %p57 = por %p55, %p56
      %p58 = scmp.ne.s32.totalorder %s50, %s52
      %p59 = scmp.eq.s32.totalorder %s21, 1
      %p60 = por %p58, %p59
      %p61 = scmp.ne.s32.totalorder %s52, %s53
      %p62 = scmp.eq.s32.totalorder %s21, 0
      %p63 = por %p61, %p62
      %p64 = scmp.ne.s32.totalorder %s52, %s53
      %p65 = scmp.eq.s32.totalorder %s22, 1
      %p66 = por %p64, %p65
      %p68 = scmp.ne.s32.totalorder %s53, %s67
      %p69 = scmp.eq.s32.totalorder %s22, 0
      %p70 = por %p68, %p69
      %s72 = sadd.s32 %s71, 1
      %p75 = scmp.eq.s32.totalorder %s16, 1
      %p76 = scmp.ne.s32.totalorder %s71, %s73
      %p77 = scmp.eq.s32.totalorder %s16, 0
      %p78 = por %p76, %p77
      %p79 = scmp.ne.s32.totalorder %s71, %s73
      %p80 = scmp.eq.s32.totalorder %s21, 1
      %p81 = por %p79, %p80
      %p82 = scmp.ne.s32.totalorder %s73, %s74
      %p83 = scmp.eq.s32.totalorder %s21, 0
      %p84 = por %p82, %p83
      %p85 = scmp.ne.s32.totalorder %s73, %s74
      %p86 = scmp.eq.s32.totalorder %s22, 1
      %p87 = por %p85, %p86
      %p89 = scmp.ne.s32.totalorder %s74, %s88
      %p90 = scmp.eq.s32.totalorder %s22, 0
      %p91 = por %p89, %p90
      %s93 = sadd.s32 %s92, 1
      %p96 = scmp.eq.s32.totalorder %s16, 1
      %p97 = scmp.ne.s32.totalorder %s92, %s94
      %p98 = scmp.eq.s32.totalorder %s16, 0
      %p99 = por %p97, %p98
      %p100 = scmp.ne.s32.totalorder %s92, %s94
      %p101 = scmp.eq.s32.totalorder %s21, 1
      %p102 = por %p100, %p101
      %p103 = scmp.ne.s32.totalorder %s94, %s95
      %p104 = scmp.eq.s32.totalorder %s21, 0
      %p105 = por %p103, %p104
      %p106 = scmp.ne.s32.totalorder %s94, %s95
      %p107 = scmp.eq.s32.totalorder %s22, 1
      %p108 = por %p106, %p107
      %p110 = scmp.ne.s32.totalorder %s95, %s109
      %p111 = scmp.eq.s32.totalorder %s22, 0
      %p112 = por %p110, %p111
      %s114 = sadd.s32 %s113, 1
      %p117 = scmp.eq.s32.totalorder %s16, 1
      %p118 = scmp.ne.s32.totalorder %s113, %s115
      %p119 = scmp.eq.s32.totalorder %s16, 0
      %p120 = por %p118, %p119
      %p121 = scmp.ne.s32.totalorder %s113, %s115
      %p122 = scmp.eq.s32.totalorder %s21, 1
      %p123 = por %p121, %p122
      %p124 = scmp.ne.s32.totalorder %s115, %s116
      %p125 = scmp.eq.s32.totalorder %s21, 0
      %p126 = por %p124, %p125
      %p127 = scmp.ne.s32.totalorder %s115, %s116
      %p128 = scmp.eq.s32.totalorder %s22, 1
      %p129 = por %p127, %p128
      %p131 = scmp.ne.s32.totalorder %s116, %s130
      %p132 = scmp.eq.s32.totalorder %s22, 0
      %p133 = por %p131, %p132
      %s135 = sadd.s32 %s134, 1
      %p138 = scmp.eq.s32.totalorder %s16, 1
      %p139 = scmp.ne.s32.totalorder %s134, %s136
      %p140 = scmp.eq.s32.totalorder %s16, 0
      %p141 = por %p139, %p140
      %p142 = scmp.ne.s32.totalorder %s134, %s136
      %p143 = scmp.eq.s32.totalorder %s21, 1
      %p144 = por %p142, %p143
      %p145 = scmp.ne.s32.totalorder %s136, %s137
      %p146 = scmp.eq.s32.totalorder %s21, 0
      %p147 = por %p145, %p146
      %p148 = scmp.ne.s32.totalorder %s136, %s137
      %p149 = scmp.eq.s32.totalorder %s22, 1
      %p150 = por %p148, %p149
      %p152 = scmp.ne.s32.totalorder %s137, %s151
      %p153 = scmp.eq.s32.totalorder %s22, 0
      %p154 = por %p152, %p153
      %s156 = sadd.s32 %s155, 1
      %p159 = scmp.eq.s32.totalorder %s16, 1
      %p160 = scmp.ne.s32.totalorder %s155, %s157
      %p161 = scmp.eq.s32.totalorder %s16, 0
      %p162 = por %p160, %p161
      %p163 = scmp.ne.s32.totalorder %s155, %s157
      %p164 = scmp.eq.s32.totalorder %s21, 1
      %p165 = por %p163, %p164
      %p166 = scmp.ne.s32.totalorder %s157, %s158
      %p167 = scmp.eq.s32.totalorder %s21, 0
      %p168 = por %p166, %p167
      %p169 = scmp.ne.s32.totalorder %s157, %s158
      %p170 = scmp.eq.s32.totalorder %s22, 1
      %p171 = por %p169, %p170
      %p173 = scmp.ne.s32.totalorder %s158, %s172
      %p174 = scmp.eq.s32.totalorder %s22, 0
      %p175 = por %p173, %p174
      %s176 = ssub.s32 %s16, %s23
      %p177 = scmp.eq.s32.totalorder %s176, 0
      %s179 = sadd.s32 %s178, 1
      %s180 = scalar_select %p177, %s178, %s179
      %p183 = pneg %p177
      %p184 = scmp.eq.s32.totalorder %s16, 1
      %p185 = por %p183, %p184
      %p186 = scmp.ne.s32.totalorder %s178, %s181
      %p187 = scmp.eq.s32.totalorder %s16, 0
      %p188 = por %p186, %p187
      %p189 = scmp.ne.s32.totalorder %s178, %s181
      %p190 = scmp.eq.s32.totalorder %s21, 1
      %p191 = por %p189, %p190
      %p192 = scmp.ne.s32.totalorder %s181, %s182
      %p193 = scmp.eq.s32.totalorder %s21, 0
      %p194 = por %p192, %p193
      %p195 = scmp.ne.s32.totalorder %s181, %s182
      %p196 = scmp.eq.s32.totalorder %s22, 1
      %p197 = por %p195, %p196
      %p199 = scmp.ne.s32.totalorder %s182, %s198
      %p200 = scmp.eq.s32.totalorder %s22, 0
      %p201 = por %p199, %p200
      %p202 = scmp.le.s32.totalorder 1, %s16
      %p203 = scmp.lt.s32.totalorder %s16, 3
      %p204 = pnand %p202, %p203
      %p205 = pneg %p204
      // Predicated region
      $region9: #{bottleneck_forward.1} parent=5 // pred_check
        _
      $region10: #{bottleneck_forward.1} parent=5 // pred_check_branch
        %207 = sbr.rel (%p204) target = $region12
      $region11: #{bottleneck_forward.1} parent=5 // pred_region
        %s208 = ssub.s32 %s16, 1
        // Predicated region
        $region13: #{bottleneck_forward.1} parent=11 // pred_check
          %p209 = pneg %p63
        $region14: #{bottleneck_forward.1} parent=11 // pred_check_branch
          %211 = sbr.rel (%p209) target = $region16
        $region15: #{bottleneck_forward.1} parent=11 // pred_region
          _
        $region16: #{bottleneck_forward.1} parent=11 // pred_fallthru
          _
        // Predicated region
        $region17: #{bottleneck_forward.1} parent=11 // pred_check
          %p212 = pneg %p84
        $region18: #{bottleneck_forward.1} parent=11 // pred_check_branch
          %214 = sbr.rel (%p212) target = $region20
        $region19: #{bottleneck_forward.1} parent=11 // pred_region
          _
        $region20: #{bottleneck_forward.1} parent=11 // pred_fallthru
          _
        // Predicated region
        $region21: #{bottleneck_forward.1} parent=11 // pred_check
          %p215 = pneg %p105
        $region22: #{bottleneck_forward.1} parent=11 // pred_check_branch
          %217 = sbr.rel (%p215) target = $region24
        $region23: #{bottleneck_forward.1} parent=11 // pred_region
          _
        $region24: #{bottleneck_forward.1} parent=11 // pred_fallthru
          _
        // Predicated region
        $region25: #{bottleneck_forward.1} parent=11 // pred_check
          %p218 = pneg %p126
        $region26: #{bottleneck_forward.1} parent=11 // pred_check_branch
          %220 = sbr.rel (%p218) target = $region28
        $region27: #{bottleneck_forward.1} parent=11 // pred_region
          _
        $region28: #{bottleneck_forward.1} parent=11 // pred_fallthru
          _
        // Predicated region
        $region29: #{bottleneck_forward.1} parent=11 // pred_check
          %p221 = pneg %p147
        $region30: #{bottleneck_forward.1} parent=11 // pred_check_branch
          %223 = sbr.rel (%p221) target = $region32
        $region31: #{bottleneck_forward.1} parent=11 // pred_region
          _
        $region32: #{bottleneck_forward.1} parent=11 // pred_fallthru
          _
        // Predicated region
        $region33: #{bottleneck_forward.1} parent=11 // pred_check
          %p224 = pneg %p168
        $region34: #{bottleneck_forward.1} parent=11 // pred_check_branch
          %226 = sbr.rel (%p224) target = $region36
        $region35: #{bottleneck_forward.1} parent=11 // pred_region
          _
        $region36: #{bottleneck_forward.1} parent=11 // pred_fallthru
          _
      $region12: #{bottleneck_forward.1} parent=5 // pred_fallthru
        _
      %p227 = scmp.lt.s32.totalorder %s16, 2
      // Predicated region
      $region37: #{bottleneck_forward.1} parent=5 // pred_check
        %p228 = pneg %p227
      $region38: #{bottleneck_forward.1} parent=5 // pred_check_branch
        %230 = sbr.rel (%p228) target = $region40
      $region39: #{bottleneck_forward.1} parent=5 // pred_region
        // Predicated region
        $region41: #{bottleneck_forward.1} parent=39 // pred_check
          %p231 = pneg %p36
        $region42: #{bottleneck_forward.1} parent=39 // pred_check_branch
          %233 = sbr.rel (%p231) target = $region44
        $region43: #{bottleneck_forward.1} parent=39 // pred_region
          %p234 = scmp.lt.s32.totalorder %s16, 1
          %s235 = scalar_select %p234, %s16, 1
          %s236 = smul.addr %s235, 32
          %s237 = smul.addr %s236, 4
          %s238 = scalar_lea.vmem %s0, %s237
        $region44: #{bottleneck_forward.1} parent=39 // pred_fallthru
          _
      $region40: #{bottleneck_forward.1} parent=5 // pred_fallthru
        _
      %p239 = scmp.le.s32.totalorder 1, %s16
      %p240 = scmp.lt.s32.totalorder %s16, 3
      %p241 = pnand %p239, %p240
      %p242 = pneg %p241
      // Predicated region
      $region45: #{bottleneck_forward.1} parent=5 // pred_check
        _
      $region46: #{bottleneck_forward.1} parent=5 // pred_check_branch
        %244 = sbr.rel (%p241) target = $region48
      $region47: #{bottleneck_forward.1} parent=5 // pred_region
        %s245 = ssub.s32 %s16, 1
        %p246 = scmp.lt.s32.totalorder %s21, 1
        %s247 = scalar_select %p246, %s21, 1
        %s248 = smul.addr %s247, 32
        %s249 = smul.addr %s248, 4
        %s250 = scalar_lea.vmem %s0, %s249
        %p251 = pneg %p42
        %p252 = pneg %p39
        %p253 = pneg %p63
        %p254 = pneg %p60
        %p255 = pneg %p84
        %p256 = pneg %p81
        %p257 = pneg %p105
        %p258 = pneg %p102
        %p259 = pneg %p126
        %p260 = pneg %p123
        %p261 = pneg %p147
        %p262 = pneg %p144
        %p263 = pneg %p168
        %p264 = pneg %p165
        %p265 = pneg %p194
        %p266 = pneg %p191
        %s267 = sand.u32 %s181, 1
        %s268 = scalar_lea.sflag [#allocation4], %s267
        %s269 = sand.u32 %s181, 1
        %s270 = smul.addr %s269, 64
        %s271 = scalar_lea.vmem [#allocation3], %s270
        %p272 = scmp.lt.s32.totalorder %s21, 1
        %s273 = scalar_select %p272, %s21, 1
        %s274 = smul.addr %s273, 32
        %s275 = smul.addr %s274, 4
        %s276 = scalar_lea.vmem %s0, %s275
        %v278 = vld [vmem:[%s276] sm:$0xf]
        %v279 = vld [vmem:[%s276 + $0x4] sm:$0xf]
        %v280 = vld [vmem:[%s276 + $0x8] sm:$0xf]
        %v281 = vld [vmem:[%s276 + $0xc] sm:$0xf]
        %v282 = vld [vmem:[%s276 + $0x10] sm:$0xf]
        %v283 = vld [vmem:[%s276 + $0x14] sm:$0xf]
        %v284 = vld [vmem:[%s276 + $0x18] sm:$0xf]
        %v285 = vld [vmem:[%s276 + $0x1c] sm:$0xf]
        %v286 = vld [vmem:[%s276 + $0x20] sm:$0xf]
        %v287 = vld [vmem:[%s276 + $0x24] sm:$0xf]
        %v288 = vld [vmem:[%s276 + $0x28] sm:$0xf]
        %v289 = vld [vmem:[%s276 + $0x2c] sm:$0xf]
        %v290 = vld [vmem:[%s276 + $0x30] sm:$0xf]
        %v291 = vld [vmem:[%s276 + $0x34] sm:$0xf]
        %v292 = vld [vmem:[%s276 + $0x38] sm:$0xf]
        %v293 = vld [vmem:[%s276 + $0x3c] sm:$0xf]
        %v294 = vld [vmem:[%s276 + $0x40] sm:$0xf]
        %v295 = vld [vmem:[%s276 + $0x44] sm:$0xf]
        %v296 = vld [vmem:[%s276 + $0x48] sm:$0xf]
        %v297 = vld [vmem:[%s276 + $0x4c] sm:$0xf]
        %v298 = vld [vmem:[%s276 + $0x50] sm:$0xf]
        %v299 = vld [vmem:[%s276 + $0x54] sm:$0xf]
        %v300 = vld [vmem:[%s276 + $0x58] sm:$0xf]
        %v301 = vld [vmem:[%s276 + $0x5c] sm:$0xf]
        %v302 = vld [vmem:[%s276 + $0x60] sm:$0xf]
        %v303 = vld [vmem:[%s276 + $0x64] sm:$0xf]
        %v304 = vld [vmem:[%s276 + $0x68] sm:$0xf]
        %v305 = vld [vmem:[%s276 + $0x6c] sm:$0xf]
        %v306 = vld [vmem:[%s276 + $0x70] sm:$0xf]
        %v307 = vld [vmem:[%s276 + $0x74] sm:$0xf]
        %v308 = vld [vmem:[%s276 + $0x78] sm:$0xf]
        %v309 = vld [vmem:[%s276 + $0x7c] sm:$0xf]
        %v310 = vld [vmem:[%s1] sm:$0xf]
        %v311 = vld [vmem:[%s1 + $0x4] sm:$0xf]
        %v312 = vld [vmem:[%s1 + $0x8] sm:$0xf]
        %v313 = vld [vmem:[%s1 + $0xc] sm:$0xf]
        %v314 = vld [vmem:[%s1 + $0x10] sm:$0xf]
        %v315 = vld [vmem:[%s1 + $0x14] sm:$0xf]
        %v316 = vld [vmem:[%s1 + $0x18] sm:$0xf]
        %v317 = vld [vmem:[%s1 + $0x1c] sm:$0xf]
        %v318 = vld [vmem:[%s2] sm:$0x1]
        %v320 = vlaneseq
        %v321 = vshrl.u32 %v320, 7
        %v322 = vsub.s32 0, %v321
        %v323 = vrot.slane %v318, %v322
        %v357 = vunpack.c.l.b16 %v278
        %v358 = vunpack.c.l.b16 %v279
        %v359 = vunpack.c.l.b16 %v280
        %v360 = vunpack.c.l.b16 %v281
        %v361 = vunpack.c.l.b16 %v282
        %v362 = vunpack.c.l.b16 %v283
        %v363 = vunpack.c.l.b16 %v284
        %v364 = vunpack.c.l.b16 %v285
        %v365 = vunpack.c.l.b16 %v286
        %v366 = vunpack.c.l.b16 %v287
        %v367 = vunpack.c.l.b16 %v288
        %v368 = vunpack.c.l.b16 %v289
        %v369 = vunpack.c.l.b16 %v290
        %v370 = vunpack.c.l.b16 %v291
        %v371 = vunpack.c.l.b16 %v292
        %v372 = vunpack.c.l.b16 %v293
        %v373 = vunpack.c.l.b16 %v294
        %v374 = vunpack.c.l.b16 %v295
        %v375 = vunpack.c.l.b16 %v296
        %v376 = vunpack.c.l.b16 %v297
        %v377 = vunpack.c.l.b16 %v298
        %v378 = vunpack.c.l.b16 %v299
        %v379 = vunpack.c.l.b16 %v300
        %v380 = vunpack.c.l.b16 %v301
        %v381 = vunpack.c.l.b16 %v302
        %v382 = vunpack.c.l.b16 %v303
        %v383 = vunpack.c.l.b16 %v304
        %v384 = vunpack.c.l.b16 %v305
        %v385 = vunpack.c.l.b16 %v306
        %v386 = vunpack.c.l.b16 %v307
        %v387 = vunpack.c.l.b16 %v308
        %v388 = vunpack.c.l.b16 %v309
        %v389 = vpack.c.b16 %v358, %v357
        %v390 = vpack.c.b16 %v360, %v359
        %v391 = vpack.c.b16 %v362, %v361
        %v392 = vpack.c.b16 %v364, %v363
        %v393 = vpack.c.b16 %v366, %v365
        %v394 = vpack.c.b16 %v368, %v367
        %v395 = vpack.c.b16 %v370, %v369
        %v396 = vpack.c.b16 %v372, %v371
        %v397 = vpack.c.b16 %v374, %v373
        %v398 = vpack.c.b16 %v376, %v375
        %v399 = vpack.c.b16 %v378, %v377
        %v400 = vpack.c.b16 %v380, %v379
        %v401 = vpack.c.b16 %v382, %v381
        %v402 = vpack.c.b16 %v384, %v383
        %v403 = vpack.c.b16 %v386, %v385
        %v404 = vpack.c.b16 %v388, %v387
        %v413 = vunpack.c.l.b16 %v310
        %v414 = vunpack.c.l.b16 %v311
        %v415 = vunpack.c.l.b16 %v312
        %v416 = vunpack.c.l.b16 %v313
        %v417 = vunpack.c.l.b16 %v314
        %v418 = vunpack.c.l.b16 %v315
        %v419 = vunpack.c.l.b16 %v316
        %v420 = vunpack.c.l.b16 %v317
        %v421 = vpack.c.b16 %v414, %v413
        %v422 = vpack.c.b16 %v416, %v415
        %v423 = vpack.c.b16 %v418, %v417
        %v424 = vpack.c.b16 %v420, %v419
        %vm429 = vcmask 523264
        %v431 = vsel %vm429, %v389, 0
        %v434 = vsel %vm429, %v390, 0
        %v437 = vsel %vm429, %v391, 0
        %v440 = vsel %vm429, %v392, 0
        %v443 = vsel %vm429, %v393, 0
        %v446 = vsel %vm429, %v394, 0
        %v449 = vsel %vm429, %v395, 0
        %v452 = vsel %vm429, %v396, 0
        %v455 = vsel %vm429, %v397, 0
        %v458 = vsel %vm429, %v398, 0
        %v461 = vsel %vm429, %v399, 0
        %v464 = vsel %vm429, %v400, 0
        %v467 = vsel %vm429, %v401, 0
        %v470 = vsel %vm429, %v402, 0
        %v473 = vsel %vm429, %v403, 0
        %v476 = vsel %vm429, %v404, 0
        %478 = vmatprep.subr.bf16.mxu0 0
        %479 = vmatpush1.bf16.msra.mxu0 %v421
        %480 = vmatprep.subr.bf16.mxu0 0
        %481 = vmatpush1.bf16.msra.mxu0 %v422
        %482 = vmatprep.subr.bf16.mxu0 0
        %483 = vmatpush1.bf16.msra.mxu0 %v423
        %484 = vmatprep.subr.bf16.mxu0 0
        %485 = vmatpush1.bf16.msra.mxu0 %v424
        %486 = vmatprep.subr.bf16.mxu0 0
        %487 = vmatpush1.bf16.msra.mxu0 0
        %488 = vmatprep.subr.bf16.mxu0 0
        %489 = vmatpush1.bf16.msra.mxu0 0
        %490 = vmatprep.subr.bf16.mxu0 0
        %491 = vmatpush1.bf16.msra.mxu0 0
        %492 = vmatprep.subr.bf16.mxu0 0
        %493 = vmatpush1.bf16.msra.mxu0 0
        %494 = vmatprep.subr.bf16.mxu0 0
        %495 = vmatpush1.bf16.msra.mxu0 0
        %496 = vmatprep.subr.bf16.mxu0 0
        %497 = vmatpush1.bf16.msra.mxu0 0
        %498 = vmatprep.subr.bf16.mxu0 0
        %499 = vmatpush1.bf16.msra.mxu0 0
        %500 = vmatprep.subr.bf16.mxu0 0
        %501 = vmatpush1.bf16.msra.mxu0 0
        %502 = vmatprep.subr.bf16.mxu0 0
        %503 = vmatpush1.bf16.msra.mxu0 0
        %504 = vmatprep.subr.bf16.mxu0 0
        %505 = vmatpush1.bf16.msra.mxu0 0
        %506 = vmatprep.subr.bf16.mxu0 0
        %507 = vmatpush1.bf16.msra.mxu0 0
        %508 = vmatprep.subr.bf16.mxu0 0
        %509 = vmatpush1.bf16.msra.mxu0 0
        %510 = vmatprep.mubr.bf16.mxu0 0
        %511 = vmatmul.mubr.bf16.gmra.mrb[0].mxu0 %v431
        %v512 = vpop.f32.mrb[0].mxu0
        %v513 = vadd.f32 %v323, %v512
        %v514 = vpop.f32.mrb[0].mxu0
        %v515 = vpop.f32.mrb[0].mxu0
        %v516 = vadd.f32 %v323, %v515
        %v517 = vpop.f32.mrb[0].mxu0
        %518 = vmatprep.mubr.bf16.mxu0 0
        %519 = vmatmul.mubr.bf16.gmra.mrb[0].mxu0 %v434
        %v520 = vpop.f32.mrb[0].mxu0
        %v521 = vadd.f32 %v323, %v520
        %v522 = vpop.f32.mrb[0].mxu0
        %v523 = vpop.f32.mrb[0].mxu0
        %v524 = vadd.f32 %v323, %v523
        %v525 = vpop.f32.mrb[0].mxu0
        %526 = vmatprep.mubr.bf16.mxu0 0
        %527 = vmatmul.mubr.bf16.gmra.mrb[0].mxu0 %v437
        %v528 = vpop.f32.mrb[0].mxu0
        %v529 = vadd.f32 %v323, %v528
        %v530 = vpop.f32.mrb[0].mxu0
        %v531 = vpop.f32.mrb[0].mxu0
        %v532 = vadd.f32 %v323, %v531
        %v533 = vpop.f32.mrb[0].mxu0
        %534 = vmatprep.mubr.bf16.mxu0 0
        %535 = vmatmul.mubr.bf16.gmra.mrb[0].mxu0 %v440
        %v536 = vpop.f32.mrb[0].mxu0
        %v537 = vadd.f32 %v323, %v536
        %v538 = vpop.f32.mrb[0].mxu0
        %v539 = vpop.f32.mrb[0].mxu0
        %v540 = vadd.f32 %v323, %v539
        %v541 = vpop.f32.mrb[0].mxu0
        %542 = vmatprep.mubr.bf16.mxu0 0
        %543 = vmatmul.mubr.bf16.gmra.mrb[0].mxu0 %v443
        %v544 = vpop.f32.mrb[0].mxu0
        %v545 = vadd.f32 %v323, %v544
        %v546 = vpop.f32.mrb[0].mxu0
        %v547 = vpop.f32.mrb[0].mxu0
        %v548 = vadd.f32 %v323, %v547
        %v549 = vpop.f32.mrb[0].mxu0
        %550 = vmatprep.mubr.bf16.mxu0 0
        %551 = vmatmul.mubr.bf16.gmra.mrb[0].mxu0 %v446
        %v552 = vpop.f32.mrb[0].mxu0
        %v553 = vadd.f32 %v323, %v552
        %v554 = vpop.f32.mrb[0].mxu0
        %v555 = vpop.f32.mrb[0].mxu0
        %v556 = vadd.f32 %v323, %v555
        %v557 = vpop.f32.mrb[0].mxu0
        %558 = vmatprep.mubr.bf16.mxu0 0
        %559 = vmatmul.mubr.bf16.gmra.mrb[0].mxu0 %v449
        %v560 = vpop.f32.mrb[0].mxu0
        %v561 = vadd.f32 %v323, %v560
        %v562 = vpop.f32.mrb[0].mxu0
        %v563 = vpop.f32.mrb[0].mxu0
        %v564 = vadd.f32 %v323, %v563
        %v565 = vpop.f32.mrb[0].mxu0
        %566 = vmatprep.mubr.bf16.mxu0 0
        %567 = vmatmul.mubr.bf16.gmra.mrb[0].mxu0 %v452
        %v568 = vpop.f32.mrb[0].mxu0
        %v569 = vadd.f32 %v323, %v568
        %v570 = vpop.f32.mrb[0].mxu0
        %v571 = vpop.f32.mrb[0].mxu0
        %v572 = vadd.f32 %v323, %v571
        %v573 = vpop.f32.mrb[0].mxu0
        %574 = vmatprep.mubr.bf16.mxu0 0
        %575 = vmatmul.mubr.bf16.gmra.mrb[0].mxu0 %v455
        %v576 = vpop.f32.mrb[0].mxu0
        %v577 = vadd.f32 %v323, %v576
        %v578 = vpop.f32.mrb[0].mxu0
        %v579 = vpop.f32.mrb[0].mxu0
        %v580 = vadd.f32 %v323, %v579
        %v581 = vpop.f32.mrb[0].mxu0
        %582 = vmatprep.mubr.bf16.mxu0 0
        %583 = vmatmul.mubr.bf16.gmra.mrb[0].mxu0 %v458
        %v584 = vpop.f32.mrb[0].mxu0
        %v585 = vadd.f32 %v323, %v584
        %v586 = vpop.f32.mrb[0].mxu0
        %v587 = vpop.f32.mrb[0].mxu0
        %v588 = vadd.f32 %v323, %v587
        %v589 = vpop.f32.mrb[0].mxu0
        %590 = vmatprep.mubr.bf16.mxu0 0
        %591 = vmatmul.mubr.bf16.gmra.mrb[0].mxu0 %v461
        %v592 = vpop.f32.mrb[0].mxu0
        %v593 = vadd.f32 %v323, %v592
        %v594 = vpop.f32.mrb[0].mxu0
        %v595 = vpop.f32.mrb[0].mxu0
        %v596 = vadd.f32 %v323, %v595
        %v597 = vpop.f32.mrb[0].mxu0
        %598 = vmatprep.mubr.bf16.mxu0 0
        %599 = vmatmul.mubr.bf16.gmra.mrb[0].mxu0 %v464
        %v600 = vpop.f32.mrb[0].mxu0
        %v601 = vadd.f32 %v323, %v600
        %v602 = vpop.f32.mrb[0].mxu0
        %v603 = vpop.f32.mrb[0].mxu0
        %v604 = vadd.f32 %v323, %v603
        %v605 = vpop.f32.mrb[0].mxu0
        %606 = vmatprep.mubr.bf16.mxu0 0
        %607 = vmatmul.mubr.bf16.gmra.mrb[0].mxu0 %v467
        %v608 = vpop.f32.mrb[0].mxu0
        %v609 = vadd.f32 %v323, %v608
        %v610 = vpop.f32.mrb[0].mxu0
        %v611 = vpop.f32.mrb[0].mxu0
        %v612 = vadd.f32 %v323, %v611
        %v613 = vpop.f32.mrb[0].mxu0
        %614 = vmatprep.mubr.bf16.mxu0 0
        %615 = vmatmul.mubr.bf16.gmra.mrb[0].mxu0 %v470
        %v616 = vpop.f32.mrb[0].mxu0
        %v617 = vadd.f32 %v323, %v616
        %v618 = vpop.f32.mrb[0].mxu0
        %v619 = vpop.f32.mrb[0].mxu0
        %v620 = vadd.f32 %v323, %v619
        %v621 = vpop.f32.mrb[0].mxu0
        %622 = vmatprep.mubr.bf16.mxu0 0
        %623 = vmatmul.mubr.bf16.gmra.mrb[0].mxu0 %v473
        %v624 = vpop.f32.mrb[0].mxu0
        %v625 = vadd.f32 %v323, %v624
        %v626 = vpop.f32.mrb[0].mxu0
        %v627 = vpop.f32.mrb[0].mxu0
        %v628 = vadd.f32 %v323, %v627
        %v629 = vpop.f32.mrb[0].mxu0
        %630 = vmatprep.mubr.bf16.mxu0 0
        %631 = vmatmul.mubr.bf16.gmra.mrb[0].mxu0 %v476
        %v632 = vpop.f32.mrb[0].mxu0
        %v633 = vadd.f32 %v323, %v632
        %v634 = vpop.f32.mrb[0].mxu0
        %v635 = vpop.f32.mrb[0].mxu0
        %v636 = vadd.f32 %v323, %v635
        %v637 = vpop.f32.mrb[0].mxu0
        %638 = vdwg.mxu0
        %v639 = vmax.f32 %v513, 0.0
        %v640 = vmax.f32 %v516, 0.0
        %v641 = vmax.f32 %v521, 0.0
        %v642 = vmax.f32 %v524, 0.0
        %v643 = vmax.f32 %v529, 0.0
        %v644 = vmax.f32 %v532, 0.0
        %v645 = vmax.f32 %v537, 0.0
        %v646 = vmax.f32 %v540, 0.0
        %v647 = vmax.f32 %v545, 0.0
        %v648 = vmax.f32 %v548, 0.0
        %v649 = vmax.f32 %v553, 0.0
        %v650 = vmax.f32 %v556, 0.0
        %v651 = vmax.f32 %v561, 0.0
        %v652 = vmax.f32 %v564, 0.0
        %v653 = vmax.f32 %v569, 0.0
        %v654 = vmax.f32 %v572, 0.0
        %v655 = vmax.f32 %v577, 0.0
        %v656 = vmax.f32 %v580, 0.0
        %v657 = vmax.f32 %v585, 0.0
        %v658 = vmax.f32 %v588, 0.0
        %v659 = vmax.f32 %v593, 0.0
        %v660 = vmax.f32 %v596, 0.0
        %v661 = vmax.f32 %v601, 0.0
        %v662 = vmax.f32 %v604, 0.0
        %v663 = vmax.f32 %v609, 0.0
        %v664 = vmax.f32 %v612, 0.0
        %v665 = vmax.f32 %v617, 0.0
        %v666 = vmax.f32 %v620, 0.0
        %v667 = vmax.f32 %v625, 0.0
        %v668 = vmax.f32 %v628, 0.0
        %v669 = vmax.f32 %v633, 0.0
        %v670 = vmax.f32 %v636, 0.0
        %v671 = vpack.c.bf16 %v640, %v639
        %v672 = vpack.c.bf16 %v642, %v641
        %v673 = vpack.c.bf16 %v644, %v643
        %v674 = vpack.c.bf16 %v646, %v645
        %v675 = vpack.c.bf16 %v648, %v647
        %v676 = vpack.c.bf16 %v650, %v649
        %v677 = vpack.c.bf16 %v652, %v651
        %v678 = vpack.c.bf16 %v654, %v653
        %v679 = vpack.c.bf16 %v656, %v655
        %v680 = vpack.c.bf16 %v658, %v657
        %v681 = vpack.c.bf16 %v660, %v659
        %v682 = vpack.c.bf16 %v662, %v661
        %v683 = vpack.c.bf16 %v664, %v663
        %v684 = vpack.c.bf16 %v666, %v665
        %v685 = vpack.c.bf16 %v668, %v667
        %v686 = vpack.c.bf16 %v670, %v669
        %s687 = scalar_lea.vmem [#allocation2], 144
        %vm688 = vcmask 257024
        %689 = vst.msk [vmem:[%s687] sm:$0xf] %vm688, 0
        %vm690 = vcmask 253952
        %vm691 = vsmask.f32 256
        %vm692 = vmand %vm690, %vm691
        %v693 = vld [vmem:[%s687 + $0x4] sm:$0x1]
        %v694 = vsel %vm692, 0, %v693
        %695 = vst [vmem:[%s687 + $0x4] sm:$0x1] %v694
        %696 = vst.msk [vmem:[%s687 + $0x48] sm:$0xf] %vm688, 0
        %v697 = vld [vmem:[%s687 + $0x4c] sm:$0x1]
        %v698 = vsel %vm692, 0, %v697
        %699 = vst [vmem:[%s687 + $0x4c] sm:$0x1] %v698
        %s700 = scalar_lea.vmem [#allocation2], 72
        %v701 = vld [vmem:[%s700] sm:$0x1]
        %v702 = vsel %vm692, 0, %v701
        %703 = vst [vmem:[%s700] sm:$0x1] %v702
        %v704 = vld [vmem:[%s700 + $0x8] sm:$0x1]
        %v705 = vsel %vm692, 0, %v704
        %706 = vst [vmem:[%s700 + $0x8] sm:$0x1] %v705
        %v707 = vld [vmem:[%s700 + $0x10] sm:$0x1]
        %v708 = vsel %vm692, 0, %v707
        %709 = vst [vmem:[%s700 + $0x10] sm:$0x1] %v708
        %v710 = vld [vmem:[%s700 + $0x18] sm:$0x1]
        %v711 = vsel %vm692, 0, %v710
        %712 = vst [vmem:[%s700 + $0x18] sm:$0x1] %v711
        %v713 = vld [vmem:[%s700 + $0x20] sm:$0x1]
        %v714 = vsel %vm692, 0, %v713
        %715 = vst [vmem:[%s700 + $0x20] sm:$0x1] %v714
        %v716 = vld [vmem:[%s700 + $0x28] sm:$0x1]
        %v717 = vsel %vm692, 0, %v716
        %718 = vst [vmem:[%s700 + $0x28] sm:$0x1] %v717
        %v719 = vld [vmem:[%s700 + $0x30] sm:$0x1]
        %v720 = vsel %vm692, 0, %v719
        %721 = vst [vmem:[%s700 + $0x30] sm:$0x1] %v720
        %v722 = vld [vmem:[%s700 + $0x38] sm:$0x1]
        %v723 = vsel %vm692, 0, %v722
        %724 = vst [vmem:[%s700 + $0x38] sm:$0x1] %v723
        %v725 = vld [vmem:[%s700 + $0x40] sm:$0x1]
        %v726 = vsel %vm692, 0, %v725
        %727 = vst [vmem:[%s700 + $0x40] sm:$0x1] %v726
        %s728 = scalar_lea.vmem [#allocation2], 216
        %v729 = vld [vmem:[%s728] sm:$0x1]
        %v730 = vsel %vm692, 0, %v729
        %731 = vst [vmem:[%s728] sm:$0x1] %v730
        %v732 = vld [vmem:[%s728 + $0x8] sm:$0x1]
        %v733 = vsel %vm692, 0, %v732
        %734 = vst [vmem:[%s728 + $0x8] sm:$0x1] %v733
        %v735 = vld [vmem:[%s728 + $0x10] sm:$0x1]
        %v736 = vsel %vm692, 0, %v735
        %737 = vst [vmem:[%s728 + $0x10] sm:$0x1] %v736
        %v738 = vld [vmem:[%s728 + $0x18] sm:$0x1]
        %v739 = vsel %vm692, 0, %v738
        %740 = vst [vmem:[%s728 + $0x18] sm:$0x1] %v739
        %v741 = vld [vmem:[%s728 + $0x20] sm:$0x1]
        %v742 = vsel %vm692, 0, %v741
        %743 = vst [vmem:[%s728 + $0x20] sm:$0x1] %v742
        %v744 = vld [vmem:[%s728 + $0x28] sm:$0x1]
        %v745 = vsel %vm692, 0, %v744
        %746 = vst [vmem:[%s728 + $0x28] sm:$0x1] %v745
        %v747 = vld [vmem:[%s728 + $0x30] sm:$0x1]
        %v748 = vsel %vm692, 0, %v747
        %749 = vst [vmem:[%s728 + $0x30] sm:$0x1] %v748
        %v750 = vld [vmem:[%s728 + $0x38] sm:$0x1]
        %v751 = vsel %vm692, 0, %v750
        %752 = vst [vmem:[%s728 + $0x38] sm:$0x1] %v751
        %v753 = vld [vmem:[%s728 + $0x40] sm:$0x1]
        %v754 = vsel %vm692, 0, %v753
        %755 = vst [vmem:[%s728 + $0x40] sm:$0x1] %v754
        %v772 = vcombine.high %v671, %v671
        %v774 = vunpack.c.l.s4 1966171168
        %v775 = vunpack.c.0.s8 %v774
        %v776 = vlaneseq
        %v777 = vshrl.u32 %v776, 7
        %v778 = vsub.s32 %v775, %v777
        %v779 = vrot.slane %v671, %v778
        %v781 = vunpack.c.l.s4 1966171168
        %v782 = vunpack.c.0.s8 %v781
        %v783 = vlaneseq
        %v784 = vshrl.u32 %v783, 7
        %v785 = vsub.s32 %v782, %v784
        %v786 = vrot.slane %v772, %v785
        %v787 = vcombine.high %v779, %v779
        %v788 = vcombine.high %v786, %v786
        %v790 = vunpack.c.l.s4 1966171168
        %v791 = vunpack.c.0.s8 %v790
        %v792 = vlaneseq
        %v793 = vshrl.u32 %v792, 7
        %v794 = vsub.s32 %v791, %v793
        %v795 = vrot.slane %v779, %v794
        %v797 = vunpack.c.l.s4 1966171168
        %v798 = vunpack.c.0.s8 %v797
        %v799 = vlaneseq
        %v800 = vshrl.u32 %v799, 7
        %v801 = vsub.s32 %v798, %v800
        %v802 = vrot.slane %v786, %v801
        %v804 = vunpack.c.l.s4 1966171168
        %v805 = vunpack.c.0.s8 %v804
        %v806 = vlaneseq
        %v807 = vshrl.u32 %v806, 7
        %v808 = vsub.s32 %v805, %v807
        %v809 = vrot.slane %v787, %v808
        %v811 = vunpack.c.l.s4 1966171168
        %v812 = vunpack.c.0.s8 %v811
        %v813 = vlaneseq
        %v814 = vshrl.u32 %v813, 7
        %v815 = vsub.s32 %v812, %v814
        %v816 = vrot.slane %v788, %v815
        %v817 = vcombine.high %v795, %v795
        %v818 = vcombine.high %v802, %v802
        %v819 = vcombine.high %v809, %v809
        %v820 = vcombine.high %v816, %v816
        %v821 = vcombine.high %v672, %v672
        %v823 = vunpack.c.l.s4 1966171168
        %v824 = vunpack.c.0.s8 %v823
        %v825 = vlaneseq
        %v826 = vshrl.u32 %v825, 7
        %v827 = vsub.s32 %v824, %v826
        %v828 = vrot.slane %v672, %v827
        %v830 = vunpack.c.l.s4 1966171168
        %v831 = vunpack.c.0.s8 %v830
        %v832 = vlaneseq
        %v833 = vshrl.u32 %v832, 7
        %v834 = vsub.s32 %v831, %v833
        %v835 = vrot.slane %v821, %v834
        %v836 = vcombine.high %v828, %v828
        %v837 = vcombine.high %v835, %v835
        %v839 = vunpack.c.l.s4 1966171168
        %v840 = vunpack.c.0.s8 %v839
        %v841 = vlaneseq
        %v842 = vshrl.u32 %v841, 7
        %v843 = vsub.s32 %v840, %v842
        %v844 = vrot.slane %v828, %v843
        %v846 = vunpack.c.l.s4 1966171168
        %v847 = vunpack.c.0.s8 %v846
        %v848 = vlaneseq
        %v849 = vshrl.u32 %v848, 7
        %v850 = vsub.s32 %v847, %v849
        %v851 = vrot.slane %v835, %v850
        %v853 = vunpack.c.l.s4 1966171168
        %v854 = vunpack.c.0.s8 %v853
        %v855 = vlaneseq
        %v856 = vshrl.u32 %v855, 7
        %v857 = vsub.s32 %v854, %v856
        %v858 = vrot.slane %v836, %v857
        %v860 = vunpack.c.l.s4 1966171168
        %v861 = vunpack.c.0.s8 %v860
        %v862 = vlaneseq
        %v863 = vshrl.u32 %v862, 7
        %v864 = vsub.s32 %v861, %v863
        %v865 = vrot.slane %v837, %v864
        %v866 = vcombine.high %v844, %v844
        %v867 = vcombine.high %v851, %v851
        %v868 = vcombine.high %v858, %v858
        %v869 = vcombine.high %v865, %v865
        %v870 = vcombine.high %v673, %v673
        %v872 = vunpack.c.l.s4 1966171168
        %v873 = vunpack.c.0.s8 %v872
        %v874 = vlaneseq
        %v875 = vshrl.u32 %v874, 7
        %v876 = vsub.s32 %v873, %v875
        %v877 = vrot.slane %v673, %v876
        %v879 = vunpack.c.l.s4 1966171168
        %v880 = vunpack.c.0.s8 %v879
        %v881 = vlaneseq
        %v882 = vshrl.u32 %v881, 7
        %v883 = vsub.s32 %v880, %v882
        %v884 = vrot.slane %v870, %v883
        %v885 = vcombine.high %v877, %v877
        %v886 = vcombine.high %v884, %v884
        %v888 = vunpack.c.l.s4 1966171168
        %v889 = vunpack.c.0.s8 %v888
        %v890 = vlaneseq
        %v891 = vshrl.u32 %v890, 7
        %v892 = vsub.s32 %v889, %v891
        %v893 = vrot.slane %v877, %v892
        %v895 = vunpack.c.l.s4 1966171168
        %v896 = vunpack.c.0.s8 %v895
        %v897 = vlaneseq
        %v898 = vshrl.u32 %v897, 7
        %v899 = vsub.s32 %v896, %v898
        %v900 = vrot.slane %v884, %v899
        %v902 = vunpack.c.l.s4 1966171168
        %v903 = vunpack.c.0.s8 %v902
        %v904 = vlaneseq
        %v905 = vshrl.u32 %v904, 7
        %v906 = vsub.s32 %v903, %v905
        %v907 = vrot.slane %v885, %v906
        %v909 = vunpack.c.l.s4 1966171168
        %v910 = vunpack.c.0.s8 %v909
        %v911 = vlaneseq
        %v912 = vshrl.u32 %v911, 7
        %v913 = vsub.s32 %v910, %v912
        %v914 = vrot.slane %v886, %v913
        %v915 = vcombine.high %v893, %v893
        %v916 = vcombine.high %v900, %v900
        %v917 = vcombine.high %v907, %v907
        %v918 = vcombine.high %v914, %v914
        %v919 = vcombine.high %v674, %v674
        %v921 = vunpack.c.l.s4 1966171168
        %v922 = vunpack.c.0.s8 %v921
        %v923 = vlaneseq
        %v924 = vshrl.u32 %v923, 7
        %v925 = vsub.s32 %v922, %v924
        %v926 = vrot.slane %v674, %v925
        %v928 = vunpack.c.l.s4 1966171168
        %v929 = vunpack.c.0.s8 %v928
        %v930 = vlaneseq
        %v931 = vshrl.u32 %v930, 7
        %v932 = vsub.s32 %v929, %v931
        %v933 = vrot.slane %v919, %v932
        %v934 = vcombine.high %v926, %v926
        %v935 = vcombine.high %v933, %v933
        %v937 = vunpack.c.l.s4 1966171168
        %v938 = vunpack.c.0.s8 %v937
        %v939 = vlaneseq
        %v940 = vshrl.u32 %v939, 7
        %v941 = vsub.s32 %v938, %v940
        %v942 = vrot.slane %v926, %v941
        %v944 = vunpack.c.l.s4 1966171168
        %v945 = vunpack.c.0.s8 %v944
        %v946 = vlaneseq
        %v947 = vshrl.u32 %v946, 7
        %v948 = vsub.s32 %v945, %v947
        %v949 = vrot.slane %v933, %v948
        %v951 = vunpack.c.l.s4 1966171168
        %v952 = vunpack.c.0.s8 %v951
        %v953 = vlaneseq
        %v954 = vshrl.u32 %v953, 7
        %v955 = vsub.s32 %v952, %v954
        %v956 = vrot.slane %v934, %v955
        %v958 = vunpack.c.l.s4 1966171168
        %v959 = vunpack.c.0.s8 %v958
        %v960 = vlaneseq
        %v961 = vshrl.u32 %v960, 7
        %v962 = vsub.s32 %v959, %v961
        %v963 = vrot.slane %v935, %v962
        %v964 = vcombine.high %v942, %v942
        %v965 = vcombine.high %v949, %v949
        %v966 = vcombine.high %v956, %v956
        %v967 = vcombine.high %v963, %v963
        %v968 = vcombine.high %v675, %v675
        %v970 = vunpack.c.l.s4 1966171168
        %v971 = vunpack.c.0.s8 %v970
        %v972 = vlaneseq
        %v973 = vshrl.u32 %v972, 7
        %v974 = vsub.s32 %v971, %v973
        %v975 = vrot.slane %v675, %v974
        %v977 = vunpack.c.l.s4 1966171168
        %v978 = vunpack.c.0.s8 %v977
        %v979 = vlaneseq
        %v980 = vshrl.u32 %v979, 7
        %v981 = vsub.s32 %v978, %v980
        %v982 = vrot.slane %v968, %v981
        %v983 = vcombine.high %v975, %v975
        %v984 = vcombine.high %v982, %v982
        %v986 = vunpack.c.l.s4 1966171168
        %v987 = vunpack.c.0.s8 %v986
        %v988 = vlaneseq
        %v989 = vshrl.u32 %v988, 7
        %v990 = vsub.s32 %v987, %v989
        %v991 = vrot.slane %v975, %v990
        %v993 = vunpack.c.l.s4 1966171168
        %v994 = vunpack.c.0.s8 %v993
        %v995 = vlaneseq
        %v996 = vshrl.u32 %v995, 7
        %v997 = vsub.s32 %v994, %v996
        %v998 = vrot.slane %v982, %v997
        %v1000 = vunpack.c.l.s4 1966171168
        %v1001 = vunpack.c.0.s8 %v1000
        %v1002 = vlaneseq
        %v1003 = vshrl.u32 %v1002, 7
        %v1004 = vsub.s32 %v1001, %v1003
        %v1005 = vrot.slane %v983, %v1004
        %v1007 = vunpack.c.l.s4 1966171168
        %v1008 = vunpack.c.0.s8 %v1007
        %v1009 = vlaneseq
        %v1010 = vshrl.u32 %v1009, 7
        %v1011 = vsub.s32 %v1008, %v1010
        %v1012 = vrot.slane %v984, %v1011
        %v1013 = vcombine.high %v991, %v991
        %v1014 = vcombine.high %v998, %v998
        %v1015 = vcombine.high %v1005, %v1005
        %v1016 = vcombine.high %v1012, %v1012
        %v1017 = vcombine.high %v676, %v676
        %v1019 = vunpack.c.l.s4 1966171168
        %v1020 = vunpack.c.0.s8 %v1019
        %v1021 = vlaneseq
        %v1022 = vshrl.u32 %v1021, 7
        %v1023 = vsub.s32 %v1020, %v1022
        %v1024 = vrot.slane %v676, %v1023
        %v1026 = vunpack.c.l.s4 1966171168
        %v1027 = vunpack.c.0.s8 %v1026
        %v1028 = vlaneseq
        %v1029 = vshrl.u32 %v1028, 7
        %v1030 = vsub.s32 %v1027, %v1029
        %v1031 = vrot.slane %v1017, %v1030
        %v1032 = vcombine.high %v1024, %v1024
        %v1033 = vcombine.high %v1031, %v1031
        %v1035 = vunpack.c.l.s4 1966171168
        %v1036 = vunpack.c.0.s8 %v1035
        %v1037 = vlaneseq
        %v1038 = vshrl.u32 %v1037, 7
        %v1039 = vsub.s32 %v1036, %v1038
        %v1040 = vrot.slane %v1024, %v1039
        %v1042 = vunpack.c.l.s4 1966171168
        %v1043 = vunpack.c.0.s8 %v1042
        %v1044 = vlaneseq
        %v1045 = vshrl.u32 %v1044, 7
        %v1046 = vsub.s32 %v1043, %v1045
        %v1047 = vrot.slane %v1031, %v1046
        %v1049 = vunpack.c.l.s4 1966171168
        %v1050 = vunpack.c.0.s8 %v1049
        %v1051 = vlaneseq
        %v1052 = vshrl.u32 %v1051, 7
        %v1053 = vsub.s32 %v1050, %v1052
        %v1054 = vrot.slane %v1032, %v1053
        %v1056 = vunpack.c.l.s4 1966171168
        %v1057 = vunpack.c.0.s8 %v1056
        %v1058 = vlaneseq
        %v1059 = vshrl.u32 %v1058, 7
        %v1060 = vsub.s32 %v1057, %v1059
        %v1061 = vrot.slane %v1033, %v1060
        %v1062 = vcombine.high %v1040, %v1040
        %v1063 = vcombine.high %v1047, %v1047
        %v1064 = vcombine.high %v1054, %v1054
        %v1065 = vcombine.high %v1061, %v1061
        %v1066 = vcombine.high %v677, %v677
        %v1068 = vunpack.c.l.s4 1966171168
        %v1069 = vunpack.c.0.s8 %v1068
        %v1070 = vlaneseq
        %v1071 = vshrl.u32 %v1070, 7
        %v1072 = vsub.s32 %v1069, %v1071
        %v1073 = vrot.slane %v677, %v1072
        %v1075 = vunpack.c.l.s4 1966171168
        %v1076 = vunpack.c.0.s8 %v1075
        %v1077 = vlaneseq
        %v1078 = vshrl.u32 %v1077, 7
        %v1079 = vsub.s32 %v1076, %v1078
        %v1080 = vrot.slane %v1066, %v1079
        %v1081 = vcombine.high %v1073, %v1073
        %v1082 = vcombine.high %v1080, %v1080
        %v1084 = vunpack.c.l.s4 1966171168
        %v1085 = vunpack.c.0.s8 %v1084
        %v1086 = vlaneseq
        %v1087 = vshrl.u32 %v1086, 7
        %v1088 = vsub.s32 %v1085, %v1087
        %v1089 = vrot.slane %v1073, %v1088
        %v1091 = vunpack.c.l.s4 1966171168
        %v1092 = vunpack.c.0.s8 %v1091
        %v1093 = vlaneseq
        %v1094 = vshrl.u32 %v1093, 7
        %v1095 = vsub.s32 %v1092, %v1094
        %v1096 = vrot.slane %v1080, %v1095
        %v1098 = vunpack.c.l.s4 1966171168
        %v1099 = vunpack.c.0.s8 %v1098
        %v1100 = vlaneseq
        %v1101 = vshrl.u32 %v1100, 7
        %v1102 = vsub.s32 %v1099, %v1101
        %v1103 = vrot.slane %v1081, %v1102
        %v1105 = vunpack.c.l.s4 1966171168
        %v1106 = vunpack.c.0.s8 %v1105
        %v1107 = vlaneseq
        %v1108 = vshrl.u32 %v1107, 7
        %v1109 = vsub.s32 %v1106, %v1108
        %v1110 = vrot.slane %v1082, %v1109
        %v1111 = vcombine.high %v1089, %v1089
        %v1112 = vcombine.high %v1096, %v1096
        %v1113 = vcombine.high %v1103, %v1103
        %v1114 = vcombine.high %v1110, %v1110
        %v1115 = vcombine.high %v678, %v678
        %v1117 = vunpack.c.l.s4 1966171168
        %v1118 = vunpack.c.0.s8 %v1117
        %v1119 = vlaneseq
        %v1120 = vshrl.u32 %v1119, 7
        %v1121 = vsub.s32 %v1118, %v1120
        %v1122 = vrot.slane %v678, %v1121
        %v1124 = vunpack.c.l.s4 1966171168
        %v1125 = vunpack.c.0.s8 %v1124
        %v1126 = vlaneseq
        %v1127 = vshrl.u32 %v1126, 7
        %v1128 = vsub.s32 %v1125, %v1127
        %v1129 = vrot.slane %v1115, %v1128
        %v1130 = vcombine.high %v1122, %v1122
        %v1131 = vcombine.high %v1129, %v1129
        %v1133 = vunpack.c.l.s4 1966171168
        %v1134 = vunpack.c.0.s8 %v1133
        %v1135 = vlaneseq
        %v1136 = vshrl.u32 %v1135, 7
        %v1137 = vsub.s32 %v1134, %v1136
        %v1138 = vrot.slane %v1122, %v1137
        %v1140 = vunpack.c.l.s4 1966171168
        %v1141 = vunpack.c.0.s8 %v1140
        %v1142 = vlaneseq
        %v1143 = vshrl.u32 %v1142, 7
        %v1144 = vsub.s32 %v1141, %v1143
        %v1145 = vrot.slane %v1129, %v1144
        %v1147 = vunpack.c.l.s4 1966171168
        %v1148 = vunpack.c.0.s8 %v1147
        %v1149 = vlaneseq
        %v1150 = vshrl.u32 %v1149, 7
        %v1151 = vsub.s32 %v1148, %v1150
        %v1152 = vrot.slane %v1130, %v1151
        %v1154 = vunpack.c.l.s4 1966171168
        %v1155 = vunpack.c.0.s8 %v1154
        %v1156 = vlaneseq
        %v1157 = vshrl.u32 %v1156, 7
        %v1158 = vsub.s32 %v1155, %v1157
        %v1159 = vrot.slane %v1131, %v1158
        %v1160 = vcombine.high %v1138, %v1138
        %v1161 = vcombine.high %v1145, %v1145
        %v1162 = vcombine.high %v1152, %v1152
        %v1163 = vcombine.high %v1159, %v1159
        %v1164 = vcombine.high %v679, %v679
        %v1166 = vunpack.c.l.s4 1966171168
        %v1167 = vunpack.c.0.s8 %v1166
        %v1168 = vlaneseq
        %v1169 = vshrl.u32 %v1168, 7
        %v1170 = vsub.s32 %v1167, %v1169
        %v1171 = vrot.slane %v679, %v1170
        %v1173 = vunpack.c.l.s4 1966171168
        %v1174 = vunpack.c.0.s8 %v1173
        %v1175 = vlaneseq
        %v1176 = vshrl.u32 %v1175, 7
        %v1177 = vsub.s32 %v1174, %v1176
        %v1178 = vrot.slane %v1164, %v1177
        %v1179 = vcombine.high %v1171, %v1171
        %v1180 = vcombine.high %v1178, %v1178
        %v1182 = vunpack.c.l.s4 1966171168
        %v1183 = vunpack.c.0.s8 %v1182
        %v1184 = vlaneseq
        %v1185 = vshrl.u32 %v1184, 7
        %v1186 = vsub.s32 %v1183, %v1185
        %v1187 = vrot.slane %v1171, %v1186
        %v1189 = vunpack.c.l.s4 1966171168
        %v1190 = vunpack.c.0.s8 %v1189
        %v1191 = vlaneseq
        %v1192 = vshrl.u32 %v1191, 7
        %v1193 = vsub.s32 %v1190, %v1192
        %v1194 = vrot.slane %v1178, %v1193
        %v1196 = vunpack.c.l.s4 1966171168
        %v1197 = vunpack.c.0.s8 %v1196
        %v1198 = vlaneseq
        %v1199 = vshrl.u32 %v1198, 7
        %v1200 = vsub.s32 %v1197, %v1199
        %v1201 = vrot.slane %v1179, %v1200
        %v1203 = vunpack.c.l.s4 1966171168
        %v1204 = vunpack.c.0.s8 %v1203
        %v1205 = vlaneseq
        %v1206 = vshrl.u32 %v1205, 7
        %v1207 = vsub.s32 %v1204, %v1206
        %v1208 = vrot.slane %v1180, %v1207
        %v1209 = vcombine.high %v1187, %v1187
        %v1210 = vcombine.high %v1194, %v1194
        %v1211 = vcombine.high %v1201, %v1201
        %v1212 = vcombine.high %v1208, %v1208
        %v1213 = vcombine.high %v680, %v680
        %v1215 = vunpack.c.l.s4 1966171168
        %v1216 = vunpack.c.0.s8 %v1215
        %v1217 = vlaneseq
        %v1218 = vshrl.u32 %v1217, 7
        %v1219 = vsub.s32 %v1216, %v1218
        %v1220 = vrot.slane %v680, %v1219
        %v1222 = vunpack.c.l.s4 1966171168
        %v1223 = vunpack.c.0.s8 %v1222
        %v1224 = vlaneseq
        %v1225 = vshrl.u32 %v1224, 7
        %v1226 = vsub.s32 %v1223, %v1225
        %v1227 = vrot.slane %v1213, %v1226
        %v1228 = vcombine.high %v1220, %v1220
        %v1229 = vcombine.high %v1227, %v1227
        %v1231 = vunpack.c.l.s4 1966171168
        %v1232 = vunpack.c.0.s8 %v1231
        %v1233 = vlaneseq
        %v1234 = vshrl.u32 %v1233, 7
        %v1235 = vsub.s32 %v1232, %v1234
        %v1236 = vrot.slane %v1220, %v1235
        %v1238 = vunpack.c.l.s4 1966171168
        %v1239 = vunpack.c.0.s8 %v1238
        %v1240 = vlaneseq
        %v1241 = vshrl.u32 %v1240, 7
        %v1242 = vsub.s32 %v1239, %v1241
        %v1243 = vrot.slane %v1227, %v1242
        %v1245 = vunpack.c.l.s4 1966171168
        %v1246 = vunpack.c.0.s8 %v1245
        %v1247 = vlaneseq
        %v1248 = vshrl.u32 %v1247, 7
        %v1249 = vsub.s32 %v1246, %v1248
        %v1250 = vrot.slane %v1228, %v1249
        %v1252 = vunpack.c.l.s4 1966171168
        %v1253 = vunpack.c.0.s8 %v1252
        %v1254 = vlaneseq
        %v1255 = vshrl.u32 %v1254, 7
        %v1256 = vsub.s32 %v1253, %v1255
        %v1257 = vrot.slane %v1229, %v1256
        %v1258 = vcombine.high %v1236, %v1236
        %v1259 = vcombine.high %v1243, %v1243
        %v1260 = vcombine.high %v1250, %v1250
        %v1261 = vcombine.high %v1257, %v1257
        %v1262 = vcombine.high %v681, %v681
        %v1264 = vunpack.c.l.s4 1966171168
        %v1265 = vunpack.c.0.s8 %v1264
        %v1266 = vlaneseq
        %v1267 = vshrl.u32 %v1266, 7
        %v1268 = vsub.s32 %v1265, %v1267
        %v1269 = vrot.slane %v681, %v1268
        %v1271 = vunpack.c.l.s4 1966171168
        %v1272 = vunpack.c.0.s8 %v1271
        %v1273 = vlaneseq
        %v1274 = vshrl.u32 %v1273, 7
        %v1275 = vsub.s32 %v1272, %v1274
        %v1276 = vrot.slane %v1262, %v1275
        %v1277 = vcombine.high %v1269, %v1269
        %v1278 = vcombine.high %v1276, %v1276
        %v1280 = vunpack.c.l.s4 1966171168
        %v1281 = vunpack.c.0.s8 %v1280
        %v1282 = vlaneseq
        %v1283 = vshrl.u32 %v1282, 7
        %v1284 = vsub.s32 %v1281, %v1283
        %v1285 = vrot.slane %v1269, %v1284
        %v1287 = vunpack.c.l.s4 1966171168
        %v1288 = vunpack.c.0.s8 %v1287
        %v1289 = vlaneseq
        %v1290 = vshrl.u32 %v1289, 7
        %v1291 = vsub.s32 %v1288, %v1290
        %v1292 = vrot.slane %v1276, %v1291
        %v1294 = vunpack.c.l.s4 1966171168
        %v1295 = vunpack.c.0.s8 %v1294
        %v1296 = vlaneseq
        %v1297 = vshrl.u32 %v1296, 7
        %v1298 = vsub.s32 %v1295, %v1297
        %v1299 = vrot.slane %v1277, %v1298
        %v1301 = vunpack.c.l.s4 1966171168
        %v1302 = vunpack.c.0.s8 %v1301
        %v1303 = vlaneseq
        %v1304 = vshrl.u32 %v1303, 7
        %v1305 = vsub.s32 %v1302, %v1304
        %v1306 = vrot.slane %v1278, %v1305
        %v1307 = vcombine.high %v1285, %v1285
        %v1308 = vcombine.high %v1292, %v1292
        %v1309 = vcombine.high %v1299, %v1299
        %v1310 = vcombine.high %v1306, %v1306
        %v1311 = vcombine.high %v682, %v682
        %v1313 = vunpack.c.l.s4 1966171168
        %v1314 = vunpack.c.0.s8 %v1313
        %v1315 = vlaneseq
        %v1316 = vshrl.u32 %v1315, 7
        %v1317 = vsub.s32 %v1314, %v1316
        %v1318 = vrot.slane %v682, %v1317
        %v1320 = vunpack.c.l.s4 1966171168
        %v1321 = vunpack.c.0.s8 %v1320
        %v1322 = vlaneseq
        %v1323 = vshrl.u32 %v1322, 7
        %v1324 = vsub.s32 %v1321, %v1323
        %v1325 = vrot.slane %v1311, %v1324
        %v1326 = vcombine.high %v1318, %v1318
        %v1327 = vcombine.high %v1325, %v1325
        %v1329 = vunpack.c.l.s4 1966171168
        %v1330 = vunpack.c.0.s8 %v1329
        %v1331 = vlaneseq
        %v1332 = vshrl.u32 %v1331, 7
        %v1333 = vsub.s32 %v1330, %v1332
        %v1334 = vrot.slane %v1318, %v1333
        %v1336 = vunpack.c.l.s4 1966171168
        %v1337 = vunpack.c.0.s8 %v1336
        %v1338 = vlaneseq
        %v1339 = vshrl.u32 %v1338, 7
        %v1340 = vsub.s32 %v1337, %v1339
        %v1341 = vrot.slane %v1325, %v1340
        %v1343 = vunpack.c.l.s4 1966171168
        %v1344 = vunpack.c.0.s8 %v1343
        %v1345 = vlaneseq
        %v1346 = vshrl.u32 %v1345, 7
        %v1347 = vsub.s32 %v1344, %v1346
        %v1348 = vrot.slane %v1326, %v1347
        %v1350 = vunpack.c.l.s4 1966171168
        %v1351 = vunpack.c.0.s8 %v1350
        %v1352 = vlaneseq
        %v1353 = vshrl.u32 %v1352, 7
        %v1354 = vsub.s32 %v1351, %v1353
        %v1355 = vrot.slane %v1327, %v1354
        %v1356 = vcombine.high %v1334, %v1334
        %v1357 = vcombine.high %v1341, %v1341
        %v1358 = vcombine.high %v1348, %v1348
        %v1359 = vcombine.high %v1355, %v1355
        %v1360 = vcombine.high %v683, %v683
        %v1362 = vunpack.c.l.s4 1966171168
        %v1363 = vunpack.c.0.s8 %v1362
        %v1364 = vlaneseq
        %v1365 = vshrl.u32 %v1364, 7
        %v1366 = vsub.s32 %v1363, %v1365
        %v1367 = vrot.slane %v683, %v1366
        %v1369 = vunpack.c.l.s4 1966171168
        %v1370 = vunpack.c.0.s8 %v1369
        %v1371 = vlaneseq
        %v1372 = vshrl.u32 %v1371, 7
        %v1373 = vsub.s32 %v1370, %v1372
        %v1374 = vrot.slane %v1360, %v1373
        %v1375 = vcombine.high %v1367, %v1367
        %v1376 = vcombine.high %v1374, %v1374
        %v1378 = vunpack.c.l.s4 1966171168
        %v1379 = vunpack.c.0.s8 %v1378
        %v1380 = vlaneseq
        %v1381 = vshrl.u32 %v1380, 7
        %v1382 = vsub.s32 %v1379, %v1381
        %v1383 = vrot.slane %v1367, %v1382
        %v1385 = vunpack.c.l.s4 1966171168
        %v1386 = vunpack.c.0.s8 %v1385
        %v1387 = vlaneseq
        %v1388 = vshrl.u32 %v1387, 7
        %v1389 = vsub.s32 %v1386, %v1388
        %v1390 = vrot.slane %v1374, %v1389
        %v1392 = vunpack.c.l.s4 1966171168
        %v1393 = vunpack.c.0.s8 %v1392
        %v1394 = vlaneseq
        %v1395 = vshrl.u32 %v1394, 7
        %v1396 = vsub.s32 %v1393, %v1395
        %v1397 = vrot.slane %v1375, %v1396
        %v1399 = vunpack.c.l.s4 1966171168
        %v1400 = vunpack.c.0.s8 %v1399
        %v1401 = vlaneseq
        %v1402 = vshrl.u32 %v1401, 7
        %v1403 = vsub.s32 %v1400, %v1402
        %v1404 = vrot.slane %v1376, %v1403
        %v1405 = vcombine.high %v1383, %v1383
        %v1406 = vcombine.high %v1390, %v1390
        %v1407 = vcombine.high %v1397, %v1397
        %v1408 = vcombine.high %v1404, %v1404
        %v1409 = vcombine.high %v684, %v684
        %v1411 = vunpack.c.l.s4 1966171168
        %v1412 = vunpack.c.0.s8 %v1411
        %v1413 = vlaneseq
        %v1414 = vshrl.u32 %v1413, 7
        %v1415 = vsub.s32 %v1412, %v1414
        %v1416 = vrot.slane %v684, %v1415
        %v1418 = vunpack.c.l.s4 1966171168
        %v1419 = vunpack.c.0.s8 %v1418
        %v1420 = vlaneseq
        %v1421 = vshrl.u32 %v1420, 7
        %v1422 = vsub.s32 %v1419, %v1421
        %v1423 = vrot.slane %v1409, %v1422
        %v1424 = vcombine.high %v1416, %v1416
        %v1425 = vcombine.high %v1423, %v1423
        %v1427 = vunpack.c.l.s4 1966171168
        %v1428 = vunpack.c.0.s8 %v1427
        %v1429 = vlaneseq
        %v1430 = vshrl.u32 %v1429, 7
        %v1431 = vsub.s32 %v1428, %v1430
        %v1432 = vrot.slane %v1416, %v1431
        %v1434 = vunpack.c.l.s4 1966171168
        %v1435 = vunpack.c.0.s8 %v1434
        %v1436 = vlaneseq
        %v1437 = vshrl.u32 %v1436, 7
        %v1438 = vsub.s32 %v1435, %v1437
        %v1439 = vrot.slane %v1423, %v1438
        %v1441 = vunpack.c.l.s4 1966171168
        %v1442 = vunpack.c.0.s8 %v1441
        %v1443 = vlaneseq
        %v1444 = vshrl.u32 %v1443, 7
        %v1445 = vsub.s32 %v1442, %v1444
        %v1446 = vrot.slane %v1424, %v1445
        %v1448 = vunpack.c.l.s4 1966171168
        %v1449 = vunpack.c.0.s8 %v1448
        %v1450 = vlaneseq
        %v1451 = vshrl.u32 %v1450, 7
        %v1452 = vsub.s32 %v1449, %v1451
        %v1453 = vrot.slane %v1425, %v1452
        %v1454 = vcombine.high %v1432, %v1432
        %v1455 = vcombine.high %v1439, %v1439
        %v1456 = vcombine.high %v1446, %v1446
        %v1457 = vcombine.high %v1453, %v1453
        %v1458 = vcombine.high %v685, %v685
        %v1460 = vunpack.c.l.s4 1966171168
        %v1461 = vunpack.c.0.s8 %v1460
        %v1462 = vlaneseq
        %v1463 = vshrl.u32 %v1462, 7
        %v1464 = vsub.s32 %v1461, %v1463
        %v1465 = vrot.slane %v685, %v1464
        %v1467 = vunpack.c.l.s4 1966171168
        %v1468 = vunpack.c.0.s8 %v1467
        %v1469 = vlaneseq
        %v1470 = vshrl.u32 %v1469, 7
        %v1471 = vsub.s32 %v1468, %v1470
        %v1472 = vrot.slane %v1458, %v1471
        %v1473 = vcombine.high %v1465, %v1465
        %v1474 = vcombine.high %v1472, %v1472
        %v1476 = vunpack.c.l.s4 1966171168
        %v1477 = vunpack.c.0.s8 %v1476
        %v1478 = vlaneseq
        %v1479 = vshrl.u32 %v1478, 7
        %v1480 = vsub.s32 %v1477, %v1479
        %v1481 = vrot.slane %v1465, %v1480
        %v1483 = vunpack.c.l.s4 1966171168
        %v1484 = vunpack.c.0.s8 %v1483
        %v1485 = vlaneseq
        %v1486 = vshrl.u32 %v1485, 7
        %v1487 = vsub.s32 %v1484, %v1486
        %v1488 = vrot.slane %v1472, %v1487
        %v1490 = vunpack.c.l.s4 1966171168
        %v1491 = vunpack.c.0.s8 %v1490
        %v1492 = vlaneseq
        %v1493 = vshrl.u32 %v1492, 7
        %v1494 = vsub.s32 %v1491, %v1493
        %v1495 = vrot.slane %v1473, %v1494
        %v1497 = vunpack.c.l.s4 1966171168
        %v1498 = vunpack.c.0.s8 %v1497
        %v1499 = vlaneseq
        %v1500 = vshrl.u32 %v1499, 7
        %v1501 = vsub.s32 %v1498, %v1500
        %v1502 = vrot.slane %v1474, %v1501
        %v1503 = vcombine.high %v1481, %v1481
        %v1504 = vcombine.high %v1488, %v1488
        %v1505 = vcombine.high %v1495, %v1495
        %v1506 = vcombine.high %v1502, %v1502
        %v1507 = vcombine.high %v686, %v686
        %v1509 = vunpack.c.l.s4 1966171168
        %v1510 = vunpack.c.0.s8 %v1509
        %v1511 = vlaneseq
        %v1512 = vshrl.u32 %v1511, 7
        %v1513 = vsub.s32 %v1510, %v1512
        %v1514 = vrot.slane %v686, %v1513
        %v1516 = vunpack.c.l.s4 1966171168
        %v1517 = vunpack.c.0.s8 %v1516
        %v1518 = vlaneseq
        %v1519 = vshrl.u32 %v1518, 7
        %v1520 = vsub.s32 %v1517, %v1519
        %v1521 = vrot.slane %v1507, %v1520
        %v1522 = vcombine.high %v1514, %v1514
        %v1523 = vcombine.high %v1521, %v1521
        %v1525 = vunpack.c.l.s4 1966171168
        %v1526 = vunpack.c.0.s8 %v1525
        %v1527 = vlaneseq
        %v1528 = vshrl.u32 %v1527, 7
        %v1529 = vsub.s32 %v1526, %v1528
        %v1530 = vrot.slane %v1514, %v1529
        %v1532 = vunpack.c.l.s4 1966171168
        %v1533 = vunpack.c.0.s8 %v1532
        %v1534 = vlaneseq
        %v1535 = vshrl.u32 %v1534, 7
        %v1536 = vsub.s32 %v1533, %v1535
        %v1537 = vrot.slane %v1521, %v1536
        %v1539 = vunpack.c.l.s4 1966171168
        %v1540 = vunpack.c.0.s8 %v1539
        %v1541 = vlaneseq
        %v1542 = vshrl.u32 %v1541, 7
        %v1543 = vsub.s32 %v1540, %v1542
        %v1544 = vrot.slane %v1522, %v1543
        %v1546 = vunpack.c.l.s4 1966171168
        %v1547 = vunpack.c.0.s8 %v1546
        %v1548 = vlaneseq
        %v1549 = vshrl.u32 %v1548, 7
        %v1550 = vsub.s32 %v1547, %v1549
        %v1551 = vrot.slane %v1523, %v1550
        %v1552 = vcombine.high %v1530, %v1530
        %v1553 = vcombine.high %v1537, %v1537
        %v1554 = vcombine.high %v1544, %v1544
        %v1555 = vcombine.high %v1551, %v1551
        %v1557 = vunpack.c.l.s4 1935823168
        %v1558 = vunpack.c.0.s8 %v1557
        %v1559 = vlaneseq
        %v1560 = vshrl.u32 %v1559, 7
        %v1561 = vsub.s32 %v1558, %v1560
        %v1562 = vrot.slane %v795, %v1561
        %v1564 = vunpack.c.l.s4 1935823168
        %v1565 = vunpack.c.0.s8 %v1564
        %v1566 = vlaneseq
        %v1567 = vshrl.u32 %v1566, 7
        %v1568 = vsub.s32 %v1565, %v1567
        %v1569 = vrot.slane %v1562, %v1568
        %v1571 = vunpack.c.l.s4 1935823168
        %v1572 = vunpack.c.0.s8 %v1571
        %v1573 = vlaneseq
        %v1574 = vshrl.u32 %v1573, 7
        %v1575 = vsub.s32 %v1572, %v1574
        %v1576 = vrot.slane %v809, %v1575
        %v1578 = vunpack.c.l.s4 1935823168
        %v1579 = vunpack.c.0.s8 %v1578
        %v1580 = vlaneseq
        %v1581 = vshrl.u32 %v1580, 7
        %v1582 = vsub.s32 %v1579, %v1581
        %v1583 = vrot.slane %v1576, %v1582
        %v1585 = vunpack.c.l.s4 1935823168
        %v1586 = vunpack.c.0.s8 %v1585
        %v1587 = vlaneseq
        %v1588 = vshrl.u32 %v1587, 7
        %v1589 = vsub.s32 %v1586, %v1588
        %v1590 = vrot.slane %v817, %v1589
        %v1592 = vunpack.c.l.s4 1935823168
        %v1593 = vunpack.c.0.s8 %v1592
        %v1594 = vlaneseq
        %v1595 = vshrl.u32 %v1594, 7
        %v1596 = vsub.s32 %v1593, %v1595
        %v1597 = vrot.slane %v1590, %v1596
        %v1599 = vunpack.c.l.s4 1935823168
        %v1600 = vunpack.c.0.s8 %v1599
        %v1601 = vlaneseq
        %v1602 = vshrl.u32 %v1601, 7
        %v1603 = vsub.s32 %v1600, %v1602
        %v1604 = vrot.slane %v819, %v1603
        %v1606 = vunpack.c.l.s4 1935823168
        %v1607 = vunpack.c.0.s8 %v1606
        %v1608 = vlaneseq
        %v1609 = vshrl.u32 %v1608, 7
        %v1610 = vsub.s32 %v1607, %v1609
        %v1611 = vrot.slane %v1604, %v1610
        %v1613 = vunpack.c.l.s4 1935823168
        %v1614 = vunpack.c.0.s8 %v1613
        %v1615 = vlaneseq
        %v1616 = vshrl.u32 %v1615, 7
        %v1617 = vsub.s32 %v1614, %v1616
        %v1618 = vrot.slane %v802, %v1617
        %v1620 = vunpack.c.l.s4 1935823168
        %v1621 = vunpack.c.0.s8 %v1620
        %v1622 = vlaneseq
        %v1623 = vshrl.u32 %v1622, 7
        %v1624 = vsub.s32 %v1621, %v1623
        %v1625 = vrot.slane %v1618, %v1624
        %v1627 = vunpack.c.l.s4 1935823168
        %v1628 = vunpack.c.0.s8 %v1627
        %v1629 = vlaneseq
        %v1630 = vshrl.u32 %v1629, 7
        %v1631 = vsub.s32 %v1628, %v1630
        %v1632 = vrot.slane %v816, %v1631
        %v1634 = vunpack.c.l.s4 1935823168
        %v1635 = vunpack.c.0.s8 %v1634
        %v1636 = vlaneseq
        %v1637 = vshrl.u32 %v1636, 7
        %v1638 = vsub.s32 %v1635, %v1637
        %v1639 = vrot.slane %v1632, %v1638
        %v1641 = vunpack.c.l.s4 1935823168
        %v1642 = vunpack.c.0.s8 %v1641
        %v1643 = vlaneseq
        %v1644 = vshrl.u32 %v1643, 7
        %v1645 = vsub.s32 %v1642, %v1644
        %v1646 = vrot.slane %v818, %v1645
        %v1648 = vunpack.c.l.s4 1935823168
        %v1649 = vunpack.c.0.s8 %v1648
        %v1650 = vlaneseq
        %v1651 = vshrl.u32 %v1650, 7
        %v1652 = vsub.s32 %v1649, %v1651
        %v1653 = vrot.slane %v1646, %v1652
        %v1655 = vunpack.c.l.s4 1935823168
        %v1656 = vunpack.c.0.s8 %v1655
        %v1657 = vlaneseq
        %v1658 = vshrl.u32 %v1657, 7
        %v1659 = vsub.s32 %v1656, %v1658
        %v1660 = vrot.slane %v820, %v1659
        %v1662 = vunpack.c.l.s4 1935823168
        %v1663 = vunpack.c.0.s8 %v1662
        %v1664 = vlaneseq
        %v1665 = vshrl.u32 %v1664, 7
        %v1666 = vsub.s32 %v1663, %v1665
        %v1667 = vrot.slane %v1660, %v1666
        %v1669 = vunpack.c.l.s4 1935823168
        %v1670 = vunpack.c.0.s8 %v1669
        %v1671 = vlaneseq
        %v1672 = vshrl.u32 %v1671, 7
        %v1673 = vsub.s32 %v1670, %v1672
        %v1674 = vrot.slane %v893, %v1673
        %v1676 = vunpack.c.l.s4 1935823168
        %v1677 = vunpack.c.0.s8 %v1676
        %v1678 = vlaneseq
        %v1679 = vshrl.u32 %v1678, 7
        %v1680 = vsub.s32 %v1677, %v1679
        %v1681 = vrot.slane %v1674, %v1680
        %v1683 = vunpack.c.l.s4 1935823168
        %v1684 = vunpack.c.0.s8 %v1683
        %v1685 = vlaneseq
        %v1686 = vshrl.u32 %v1685, 7
        %v1687 = vsub.s32 %v1684, %v1686
        %v1688 = vrot.slane %v907, %v1687
        %v1690 = vunpack.c.l.s4 1935823168
        %v1691 = vunpack.c.0.s8 %v1690
        %v1692 = vlaneseq
        %v1693 = vshrl.u32 %v1692, 7
        %v1694 = vsub.s32 %v1691, %v1693
        %v1695 = vrot.slane %v1688, %v1694
        %v1697 = vunpack.c.l.s4 1935823168
        %v1698 = vunpack.c.0.s8 %v1697
        %v1699 = vlaneseq
        %v1700 = vshrl.u32 %v1699, 7
        %v1701 = vsub.s32 %v1698, %v1700
        %v1702 = vrot.slane %v915, %v1701
        %v1704 = vunpack.c.l.s4 1935823168
        %v1705 = vunpack.c.0.s8 %v1704
        %v1706 = vlaneseq
        %v1707 = vshrl.u32 %v1706, 7
        %v1708 = vsub.s32 %v1705, %v1707
        %v1709 = vrot.slane %v1702, %v1708
        %v1711 = vunpack.c.l.s4 1935823168
        %v1712 = vunpack.c.0.s8 %v1711
        %v1713 = vlaneseq
        %v1714 = vshrl.u32 %v1713, 7
        %v1715 = vsub.s32 %v1712, %v1714
        %v1716 = vrot.slane %v917, %v1715
        %v1718 = vunpack.c.l.s4 1935823168
        %v1719 = vunpack.c.0.s8 %v1718
        %v1720 = vlaneseq
        %v1721 = vshrl.u32 %v1720, 7
        %v1722 = vsub.s32 %v1719, %v1721
        %v1723 = vrot.slane %v1716, %v1722
        %v1725 = vunpack.c.l.s4 1935823168
        %v1726 = vunpack.c.0.s8 %v1725
        %v1727 = vlaneseq
        %v1728 = vshrl.u32 %v1727, 7
        %v1729 = vsub.s32 %v1726, %v1728
        %v1730 = vrot.slane %v900, %v1729
        %v1732 = vunpack.c.l.s4 1935823168
        %v1733 = vunpack.c.0.s8 %v1732
        %v1734 = vlaneseq
        %v1735 = vshrl.u32 %v1734, 7
        %v1736 = vsub.s32 %v1733, %v1735
        %v1737 = vrot.slane %v1730, %v1736
        %v1739 = vunpack.c.l.s4 1935823168
        %v1740 = vunpack.c.0.s8 %v1739
        %v1741 = vlaneseq
        %v1742 = vshrl.u32 %v1741, 7
        %v1743 = vsub.s32 %v1740, %v1742
        %v1744 = vrot.slane %v914, %v1743
        %v1746 = vunpack.c.l.s4 1935823168
        %v1747 = vunpack.c.0.s8 %v1746
        %v1748 = vlaneseq
        %v1749 = vshrl.u32 %v1748, 7
        %v1750 = vsub.s32 %v1747, %v1749
        %v1751 = vrot.slane %v1744, %v1750
        %v1753 = vunpack.c.l.s4 1935823168
        %v1754 = vunpack.c.0.s8 %v1753
        %v1755 = vlaneseq
        %v1756 = vshrl.u32 %v1755, 7
        %v1757 = vsub.s32 %v1754, %v1756
        %v1758 = vrot.slane %v916, %v1757
        %v1760 = vunpack.c.l.s4 1935823168
        %v1761 = vunpack.c.0.s8 %v1760
        %v1762 = vlaneseq
        %v1763 = vshrl.u32 %v1762, 7
        %v1764 = vsub.s32 %v1761, %v1763
        %v1765 = vrot.slane %v1758, %v1764
        %v1767 = vunpack.c.l.s4 1935823168
        %v1768 = vunpack.c.0.s8 %v1767
        %v1769 = vlaneseq
        %v1770 = vshrl.u32 %v1769, 7
        %v1771 = vsub.s32 %v1768, %v1770
        %v1772 = vrot.slane %v918, %v1771
        %v1774 = vunpack.c.l.s4 1935823168
        %v1775 = vunpack.c.0.s8 %v1774
        %v1776 = vlaneseq
        %v1777 = vshrl.u32 %v1776, 7
        %v1778 = vsub.s32 %v1775, %v1777
        %v1779 = vrot.slane %v1772, %v1778
        %v1781 = vunpack.c.l.s4 1935823168
        %v1782 = vunpack.c.0.s8 %v1781
        %v1783 = vlaneseq
        %v1784 = vshrl.u32 %v1783, 7
        %v1785 = vsub.s32 %v1782, %v1784
        %v1786 = vrot.slane %v991, %v1785
        %v1788 = vunpack.c.l.s4 1935823168
        %v1789 = vunpack.c.0.s8 %v1788
        %v1790 = vlaneseq
        %v1791 = vshrl.u32 %v1790, 7
        %v1792 = vsub.s32 %v1789, %v1791
        %v1793 = vrot.slane %v1786, %v1792
        %v1795 = vunpack.c.l.s4 1935823168
        %v1796 = vunpack.c.0.s8 %v1795
        %v1797 = vlaneseq
        %v1798 = vshrl.u32 %v1797, 7
        %v1799 = vsub.s32 %v1796, %v1798
        %v1800 = vrot.slane %v1005, %v1799
        %v1802 = vunpack.c.l.s4 1935823168
        %v1803 = vunpack.c.0.s8 %v1802
        %v1804 = vlaneseq
        %v1805 = vshrl.u32 %v1804, 7
        %v1806 = vsub.s32 %v1803, %v1805
        %v1807 = vrot.slane %v1800, %v1806
        %v1809 = vunpack.c.l.s4 1935823168
        %v1810 = vunpack.c.0.s8 %v1809
        %v1811 = vlaneseq
        %v1812 = vshrl.u32 %v1811, 7
        %v1813 = vsub.s32 %v1810, %v1812
        %v1814 = vrot.slane %v1013, %v1813
        %v1816 = vunpack.c.l.s4 1935823168
        %v1817 = vunpack.c.0.s8 %v1816
        %v1818 = vlaneseq
        %v1819 = vshrl.u32 %v1818, 7
        %v1820 = vsub.s32 %v1817, %v1819
        %v1821 = vrot.slane %v1814, %v1820
        %v1823 = vunpack.c.l.s4 1935823168
        %v1824 = vunpack.c.0.s8 %v1823
        %v1825 = vlaneseq
        %v1826 = vshrl.u32 %v1825, 7
        %v1827 = vsub.s32 %v1824, %v1826
        %v1828 = vrot.slane %v1015, %v1827
        %v1830 = vunpack.c.l.s4 1935823168
        %v1831 = vunpack.c.0.s8 %v1830
        %v1832 = vlaneseq
        %v1833 = vshrl.u32 %v1832, 7
        %v1834 = vsub.s32 %v1831, %v1833
        %v1835 = vrot.slane %v1828, %v1834
        %v1837 = vunpack.c.l.s4 1935823168
        %v1838 = vunpack.c.0.s8 %v1837
        %v1839 = vlaneseq
        %v1840 = vshrl.u32 %v1839, 7
        %v1841 = vsub.s32 %v1838, %v1840
        %v1842 = vrot.slane %v998, %v1841
        %v1844 = vunpack.c.l.s4 1935823168
        %v1845 = vunpack.c.0.s8 %v1844
        %v1846 = vlaneseq
        %v1847 = vshrl.u32 %v1846, 7
        %v1848 = vsub.s32 %v1845, %v1847
        %v1849 = vrot.slane %v1842, %v1848
        %v1851 = vunpack.c.l.s4 1935823168
        %v1852 = vunpack.c.0.s8 %v1851
        %v1853 = vlaneseq
        %v1854 = vshrl.u32 %v1853, 7
        %v1855 = vsub.s32 %v1852, %v1854
        %v1856 = vrot.slane %v1012, %v1855
        %v1858 = vunpack.c.l.s4 1935823168
        %v1859 = vunpack.c.0.s8 %v1858
        %v1860 = vlaneseq
        %v1861 = vshrl.u32 %v1860, 7
        %v1862 = vsub.s32 %v1859, %v1861
        %v1863 = vrot.slane %v1856, %v1862
        %v1865 = vunpack.c.l.s4 1935823168
        %v1866 = vunpack.c.0.s8 %v1865
        %v1867 = vlaneseq
        %v1868 = vshrl.u32 %v1867, 7
        %v1869 = vsub.s32 %v1866, %v1868
        %v1870 = vrot.slane %v1014, %v1869
        %v1872 = vunpack.c.l.s4 1935823168
        %v1873 = vunpack.c.0.s8 %v1872
        %v1874 = vlaneseq
        %v1875 = vshrl.u32 %v1874, 7
        %v1876 = vsub.s32 %v1873, %v1875
        %v1877 = vrot.slane %v1870, %v1876
        %v1879 = vunpack.c.l.s4 1935823168
        %v1880 = vunpack.c.0.s8 %v1879
        %v1881 = vlaneseq
        %v1882 = vshrl.u32 %v1881, 7
        %v1883 = vsub.s32 %v1880, %v1882
        %v1884 = vrot.slane %v1016, %v1883
        %v1886 = vunpack.c.l.s4 1935823168
        %v1887 = vunpack.c.0.s8 %v1886
        %v1888 = vlaneseq
        %v1889 = vshrl.u32 %v1888, 7
        %v1890 = vsub.s32 %v1887, %v1889
        %v1891 = vrot.slane %v1884, %v1890
        %v1893 = vunpack.c.l.s4 1935823168
        %v1894 = vunpack.c.0.s8 %v1893
        %v1895 = vlaneseq
        %v1896 = vshrl.u32 %v1895, 7
        %v1897 = vsub.s32 %v1894, %v1896
        %v1898 = vrot.slane %v1089, %v1897
        %v1900 = vunpack.c.l.s4 1935823168
        %v1901 = vunpack.c.0.s8 %v1900
        %v1902 = vlaneseq
        %v1903 = vshrl.u32 %v1902, 7
        %v1904 = vsub.s32 %v1901, %v1903
        %v1905 = vrot.slane %v1898, %v1904
        %v1907 = vunpack.c.l.s4 1935823168
        %v1908 = vunpack.c.0.s8 %v1907
        %v1909 = vlaneseq
        %v1910 = vshrl.u32 %v1909, 7
        %v1911 = vsub.s32 %v1908, %v1910
        %v1912 = vrot.slane %v1103, %v1911
        %v1914 = vunpack.c.l.s4 1935823168
        %v1915 = vunpack.c.0.s8 %v1914
        %v1916 = vlaneseq
        %v1917 = vshrl.u32 %v1916, 7
        %v1918 = vsub.s32 %v1915, %v1917
        %v1919 = vrot.slane %v1912, %v1918
        %v1921 = vunpack.c.l.s4 1935823168
        %v1922 = vunpack.c.0.s8 %v1921
        %v1923 = vlaneseq
        %v1924 = vshrl.u32 %v1923, 7
        %v1925 = vsub.s32 %v1922, %v1924
        %v1926 = vrot.slane %v1111, %v1925
        %v1928 = vunpack.c.l.s4 1935823168
        %v1929 = vunpack.c.0.s8 %v1928
        %v1930 = vlaneseq
        %v1931 = vshrl.u32 %v1930, 7
        %v1932 = vsub.s32 %v1929, %v1931
        %v1933 = vrot.slane %v1926, %v1932
        %v1935 = vunpack.c.l.s4 1935823168
        %v1936 = vunpack.c.0.s8 %v1935
        %v1937 = vlaneseq
        %v1938 = vshrl.u32 %v1937, 7
        %v1939 = vsub.s32 %v1936, %v1938
        %v1940 = vrot.slane %v1113, %v1939
        %v1942 = vunpack.c.l.s4 1935823168
        %v1943 = vunpack.c.0.s8 %v1942
        %v1944 = vlaneseq
        %v1945 = vshrl.u32 %v1944, 7
        %v1946 = vsub.s32 %v1943, %v1945
        %v1947 = vrot.slane %v1940, %v1946
        %v1949 = vunpack.c.l.s4 1935823168
        %v1950 = vunpack.c.0.s8 %v1949
        %v1951 = vlaneseq
        %v1952 = vshrl.u32 %v1951, 7
        %v1953 = vsub.s32 %v1950, %v1952
        %v1954 = vrot.slane %v1096, %v1953
        %v1956 = vunpack.c.l.s4 1935823168
        %v1957 = vunpack.c.0.s8 %v1956
        %v1958 = vlaneseq
        %v1959 = vshrl.u32 %v1958, 7
        %v1960 = vsub.s32 %v1957, %v1959
        %v1961 = vrot.slane %v1954, %v1960
        %v1963 = vunpack.c.l.s4 1935823168
        %v1964 = vunpack.c.0.s8 %v1963
        %v1965 = vlaneseq
        %v1966 = vshrl.u32 %v1965, 7
        %v1967 = vsub.s32 %v1964, %v1966
        %v1968 = vrot.slane %v1110, %v1967
        %v1970 = vunpack.c.l.s4 1935823168
        %v1971 = vunpack.c.0.s8 %v1970
        %v1972 = vlaneseq
        %v1973 = vshrl.u32 %v1972, 7
        %v1974 = vsub.s32 %v1971, %v1973
        %v1975 = vrot.slane %v1968, %v1974
        %v1977 = vunpack.c.l.s4 1935823168
        %v1978 = vunpack.c.0.s8 %v1977
        %v1979 = vlaneseq
        %v1980 = vshrl.u32 %v1979, 7
        %v1981 = vsub.s32 %v1978, %v1980
        %v1982 = vrot.slane %v1112, %v1981
        %v1984 = vunpack.c.l.s4 1935823168
        %v1985 = vunpack.c.0.s8 %v1984
        %v1986 = vlaneseq
        %v1987 = vshrl.u32 %v1986, 7
        %v1988 = vsub.s32 %v1985, %v1987
        %v1989 = vrot.slane %v1982, %v1988
        %v1991 = vunpack.c.l.s4 1935823168
        %v1992 = vunpack.c.0.s8 %v1991
        %v1993 = vlaneseq
        %v1994 = vshrl.u32 %v1993, 7
        %v1995 = vsub.s32 %v1992, %v1994
        %v1996 = vrot.slane %v1114, %v1995
        %v1998 = vunpack.c.l.s4 1935823168
        %v1999 = vunpack.c.0.s8 %v1998
        %v2000 = vlaneseq
        %v2001 = vshrl.u32 %v2000, 7
        %v2002 = vsub.s32 %v1999, %v2001
        %v2003 = vrot.slane %v1996, %v2002
        %v2005 = vunpack.c.l.s4 1935823168
        %v2006 = vunpack.c.0.s8 %v2005
        %v2007 = vlaneseq
        %v2008 = vshrl.u32 %v2007, 7
        %v2009 = vsub.s32 %v2006, %v2008
        %v2010 = vrot.slane %v1187, %v2009
        %v2012 = vunpack.c.l.s4 1935823168
        %v2013 = vunpack.c.0.s8 %v2012
        %v2014 = vlaneseq
        %v2015 = vshrl.u32 %v2014, 7
        %v2016 = vsub.s32 %v2013, %v2015
        %v2017 = vrot.slane %v2010, %v2016
        %v2019 = vunpack.c.l.s4 1935823168
        %v2020 = vunpack.c.0.s8 %v2019
        %v2021 = vlaneseq
        %v2022 = vshrl.u32 %v2021, 7
        %v2023 = vsub.s32 %v2020, %v2022
        %v2024 = vrot.slane %v1201, %v2023
        %v2026 = vunpack.c.l.s4 1935823168
        %v2027 = vunpack.c.0.s8 %v2026
        %v2028 = vlaneseq
        %v2029 = vshrl.u32 %v2028, 7
        %v2030 = vsub.s32 %v2027, %v2029
        %v2031 = vrot.slane %v2024, %v2030
        %v2033 = vunpack.c.l.s4 1935823168
        %v2034 = vunpack.c.0.s8 %v2033
        %v2035 = vlaneseq
        %v2036 = vshrl.u32 %v2035, 7
        %v2037 = vsub.s32 %v2034, %v2036
        %v2038 = vrot.slane %v1209, %v2037
        %v2040 = vunpack.c.l.s4 1935823168
        %v2041 = vunpack.c.0.s8 %v2040
        %v2042 = vlaneseq
        %v2043 = vshrl.u32 %v2042, 7
        %v2044 = vsub.s32 %v2041, %v2043
        %v2045 = vrot.slane %v2038, %v2044
        %v2047 = vunpack.c.l.s4 1935823168
        %v2048 = vunpack.c.0.s8 %v2047
        %v2049 = vlaneseq
        %v2050 = vshrl.u32 %v2049, 7
        %v2051 = vsub.s32 %v2048, %v2050
        %v2052 = vrot.slane %v1211, %v2051
        %v2054 = vunpack.c.l.s4 1935823168
        %v2055 = vunpack.c.0.s8 %v2054
        %v2056 = vlaneseq
        %v2057 = vshrl.u32 %v2056, 7
        %v2058 = vsub.s32 %v2055, %v2057
        %v2059 = vrot.slane %v2052, %v2058
        %v2061 = vunpack.c.l.s4 1935823168
        %v2062 = vunpack.c.0.s8 %v2061
        %v2063 = vlaneseq
        %v2064 = vshrl.u32 %v2063, 7
        %v2065 = vsub.s32 %v2062, %v2064
        %v2066 = vrot.slane %v1194, %v2065
        %v2068 = vunpack.c.l.s4 1935823168
        %v2069 = vunpack.c.0.s8 %v2068
        %v2070 = vlaneseq
        %v2071 = vshrl.u32 %v2070, 7
        %v2072 = vsub.s32 %v2069, %v2071
        %v2073 = vrot.slane %v2066, %v2072
        %v2075 = vunpack.c.l.s4 1935823168
        %v2076 = vunpack.c.0.s8 %v2075
        %v2077 = vlaneseq
        %v2078 = vshrl.u32 %v2077, 7
        %v2079 = vsub.s32 %v2076, %v2078
        %v2080 = vrot.slane %v1208, %v2079
        %v2082 = vunpack.c.l.s4 1935823168
        %v2083 = vunpack.c.0.s8 %v2082
        %v2084 = vlaneseq
        %v2085 = vshrl.u32 %v2084, 7
        %v2086 = vsub.s32 %v2083, %v2085
        %v2087 = vrot.slane %v2080, %v2086
        %v2089 = vunpack.c.l.s4 1935823168
        %v2090 = vunpack.c.0.s8 %v2089
        %v2091 = vlaneseq
        %v2092 = vshrl.u32 %v2091, 7
        %v2093 = vsub.s32 %v2090, %v2092
        %v2094 = vrot.slane %v1210, %v2093
        %v2096 = vunpack.c.l.s4 1935823168
        %v2097 = vunpack.c.0.s8 %v2096
        %v2098 = vlaneseq
        %v2099 = vshrl.u32 %v2098, 7
        %v2100 = vsub.s32 %v2097, %v2099
        %v2101 = vrot.slane %v2094, %v2100
        %v2103 = vunpack.c.l.s4 1935823168
        %v2104 = vunpack.c.0.s8 %v2103
        %v2105 = vlaneseq
        %v2106 = vshrl.u32 %v2105, 7
        %v2107 = vsub.s32 %v2104, %v2106
        %v2108 = vrot.slane %v1212, %v2107
        %v2110 = vunpack.c.l.s4 1935823168
        %v2111 = vunpack.c.0.s8 %v2110
        %v2112 = vlaneseq
        %v2113 = vshrl.u32 %v2112, 7
        %v2114 = vsub.s32 %v2111, %v2113
        %v2115 = vrot.slane %v2108, %v2114
        %v2117 = vunpack.c.l.s4 1935823168
        %v2118 = vunpack.c.0.s8 %v2117
        %v2119 = vlaneseq
        %v2120 = vshrl.u32 %v2119, 7
        %v2121 = vsub.s32 %v2118, %v2120
        %v2122 = vrot.slane %v1285, %v2121
        %v2124 = vunpack.c.l.s4 1935823168
        %v2125 = vunpack.c.0.s8 %v2124
        %v2126 = vlaneseq
        %v2127 = vshrl.u32 %v2126, 7
        %v2128 = vsub.s32 %v2125, %v2127
        %v2129 = vrot.slane %v2122, %v2128
        %v2131 = vunpack.c.l.s4 1935823168
        %v2132 = vunpack.c.0.s8 %v2131
        %v2133 = vlaneseq
        %v2134 = vshrl.u32 %v2133, 7
        %v2135 = vsub.s32 %v2132, %v2134
        %v2136 = vrot.slane %v1299, %v2135
        %v2138 = vunpack.c.l.s4 1935823168
        %v2139 = vunpack.c.0.s8 %v2138
        %v2140 = vlaneseq
        %v2141 = vshrl.u32 %v2140, 7
        %v2142 = vsub.s32 %v2139, %v2141
        %v2143 = vrot.slane %v2136, %v2142
        %v2145 = vunpack.c.l.s4 1935823168
        %v2146 = vunpack.c.0.s8 %v2145
        %v2147 = vlaneseq
        %v2148 = vshrl.u32 %v2147, 7
        %v2149 = vsub.s32 %v2146, %v2148
        %v2150 = vrot.slane %v1307, %v2149
        %v2152 = vunpack.c.l.s4 1935823168
        %v2153 = vunpack.c.0.s8 %v2152
        %v2154 = vlaneseq
        %v2155 = vshrl.u32 %v2154, 7
        %v2156 = vsub.s32 %v2153, %v2155
        %v2157 = vrot.slane %v2150, %v2156
        %v2159 = vunpack.c.l.s4 1935823168
        %v2160 = vunpack.c.0.s8 %v2159
        %v2161 = vlaneseq
        %v2162 = vshrl.u32 %v2161, 7
        %v2163 = vsub.s32 %v2160, %v2162
        %v2164 = vrot.slane %v1309, %v2163
        %v2166 = vunpack.c.l.s4 1935823168
        %v2167 = vunpack.c.0.s8 %v2166
        %v2168 = vlaneseq
        %v2169 = vshrl.u32 %v2168, 7
        %v2170 = vsub.s32 %v2167, %v2169
        %v2171 = vrot.slane %v2164, %v2170
        %v2173 = vunpack.c.l.s4 1935823168
        %v2174 = vunpack.c.0.s8 %v2173
        %v2175 = vlaneseq
        %v2176 = vshrl.u32 %v2175, 7
        %v2177 = vsub.s32 %v2174, %v2176
        %v2178 = vrot.slane %v1292, %v2177
        %v2180 = vunpack.c.l.s4 1935823168
        %v2181 = vunpack.c.0.s8 %v2180
        %v2182 = vlaneseq
        %v2183 = vshrl.u32 %v2182, 7
        %v2184 = vsub.s32 %v2181, %v2183
        %v2185 = vrot.slane %v2178, %v2184
        %v2187 = vunpack.c.l.s4 1935823168
        %v2188 = vunpack.c.0.s8 %v2187
        %v2189 = vlaneseq
        %v2190 = vshrl.u32 %v2189, 7
        %v2191 = vsub.s32 %v2188, %v2190
        %v2192 = vrot.slane %v1306, %v2191
        %v2194 = vunpack.c.l.s4 1935823168
        %v2195 = vunpack.c.0.s8 %v2194
        %v2196 = vlaneseq
        %v2197 = vshrl.u32 %v2196, 7
        %v2198 = vsub.s32 %v2195, %v2197
        %v2199 = vrot.slane %v2192, %v2198
        %v2201 = vunpack.c.l.s4 1935823168
        %v2202 = vunpack.c.0.s8 %v2201
        %v2203 = vlaneseq
        %v2204 = vshrl.u32 %v2203, 7
        %v2205 = vsub.s32 %v2202, %v2204
        %v2206 = vrot.slane %v1308, %v2205
        %v2208 = vunpack.c.l.s4 1935823168
        %v2209 = vunpack.c.0.s8 %v2208
        %v2210 = vlaneseq
        %v2211 = vshrl.u32 %v2210, 7
        %v2212 = vsub.s32 %v2209, %v2211
        %v2213 = vrot.slane %v2206, %v2212
        %v2215 = vunpack.c.l.s4 1935823168
        %v2216 = vunpack.c.0.s8 %v2215
        %v2217 = vlaneseq
        %v2218 = vshrl.u32 %v2217, 7
        %v2219 = vsub.s32 %v2216, %v2218
        %v2220 = vrot.slane %v1310, %v2219
        %v2222 = vunpack.c.l.s4 1935823168
        %v2223 = vunpack.c.0.s8 %v2222
        %v2224 = vlaneseq
        %v2225 = vshrl.u32 %v2224, 7
        %v2226 = vsub.s32 %v2223, %v2225
        %v2227 = vrot.slane %v2220, %v2226
        %v2229 = vunpack.c.l.s4 1935823168
        %v2230 = vunpack.c.0.s8 %v2229
        %v2231 = vlaneseq
        %v2232 = vshrl.u32 %v2231, 7
        %v2233 = vsub.s32 %v2230, %v2232
        %v2234 = vrot.slane %v1383, %v2233
        %v2236 = vunpack.c.l.s4 1935823168
        %v2237 = vunpack.c.0.s8 %v2236
        %v2238 = vlaneseq
        %v2239 = vshrl.u32 %v2238, 7
        %v2240 = vsub.s32 %v2237, %v2239
        %v2241 = vrot.slane %v2234, %v2240
        %v2243 = vunpack.c.l.s4 1935823168
        %v2244 = vunpack.c.0.s8 %v2243
        %v2245 = vlaneseq
        %v2246 = vshrl.u32 %v2245, 7
        %v2247 = vsub.s32 %v2244, %v2246
        %v2248 = vrot.slane %v1397, %v2247
        %v2250 = vunpack.c.l.s4 1935823168
        %v2251 = vunpack.c.0.s8 %v2250
        %v2252 = vlaneseq
        %v2253 = vshrl.u32 %v2252, 7
        %v2254 = vsub.s32 %v2251, %v2253
        %v2255 = vrot.slane %v2248, %v2254
        %v2257 = vunpack.c.l.s4 1935823168
        %v2258 = vunpack.c.0.s8 %v2257
        %v2259 = vlaneseq
        %v2260 = vshrl.u32 %v2259, 7
        %v2261 = vsub.s32 %v2258, %v2260
        %v2262 = vrot.slane %v1405, %v2261
        %v2264 = vunpack.c.l.s4 1935823168
        %v2265 = vunpack.c.0.s8 %v2264
        %v2266 = vlaneseq
        %v2267 = vshrl.u32 %v2266, 7
        %v2268 = vsub.s32 %v2265, %v2267
        %v2269 = vrot.slane %v2262, %v2268
        %v2271 = vunpack.c.l.s4 1935823168
        %v2272 = vunpack.c.0.s8 %v2271
        %v2273 = vlaneseq
        %v2274 = vshrl.u32 %v2273, 7
        %v2275 = vsub.s32 %v2272, %v2274
        %v2276 = vrot.slane %v1407, %v2275
        %v2278 = vunpack.c.l.s4 1935823168
        %v2279 = vunpack.c.0.s8 %v2278
        %v2280 = vlaneseq
        %v2281 = vshrl.u32 %v2280, 7
        %v2282 = vsub.s32 %v2279, %v2281
        %v2283 = vrot.slane %v2276, %v2282
        %v2285 = vunpack.c.l.s4 1935823168
        %v2286 = vunpack.c.0.s8 %v2285
        %v2287 = vlaneseq
        %v2288 = vshrl.u32 %v2287, 7
        %v2289 = vsub.s32 %v2286, %v2288
        %v2290 = vrot.slane %v1390, %v2289
        %v2292 = vunpack.c.l.s4 1935823168
        %v2293 = vunpack.c.0.s8 %v2292
        %v2294 = vlaneseq
        %v2295 = vshrl.u32 %v2294, 7
        %v2296 = vsub.s32 %v2293, %v2295
        %v2297 = vrot.slane %v2290, %v2296
        %v2299 = vunpack.c.l.s4 1935823168
        %v2300 = vunpack.c.0.s8 %v2299
        %v2301 = vlaneseq
        %v2302 = vshrl.u32 %v2301, 7
        %v2303 = vsub.s32 %v2300, %v2302
        %v2304 = vrot.slane %v1404, %v2303
        %v2306 = vunpack.c.l.s4 1935823168
        %v2307 = vunpack.c.0.s8 %v2306
        %v2308 = vlaneseq
        %v2309 = vshrl.u32 %v2308, 7
        %v2310 = vsub.s32 %v2307, %v2309
        %v2311 = vrot.slane %v2304, %v2310
        %v2313 = vunpack.c.l.s4 1935823168
        %v2314 = vunpack.c.0.s8 %v2313
        %v2315 = vlaneseq
        %v2316 = vshrl.u32 %v2315, 7
        %v2317 = vsub.s32 %v2314, %v2316
        %v2318 = vrot.slane %v1406, %v2317
        %v2320 = vunpack.c.l.s4 1935823168
        %v2321 = vunpack.c.0.s8 %v2320
        %v2322 = vlaneseq
        %v2323 = vshrl.u32 %v2322, 7
        %v2324 = vsub.s32 %v2321, %v2323
        %v2325 = vrot.slane %v2318, %v2324
        %v2327 = vunpack.c.l.s4 1935823168
        %v2328 = vunpack.c.0.s8 %v2327
        %v2329 = vlaneseq
        %v2330 = vshrl.u32 %v2329, 7
        %v2331 = vsub.s32 %v2328, %v2330
        %v2332 = vrot.slane %v1408, %v2331
        %v2334 = vunpack.c.l.s4 1935823168
        %v2335 = vunpack.c.0.s8 %v2334
        %v2336 = vlaneseq
        %v2337 = vshrl.u32 %v2336, 7
        %v2338 = vsub.s32 %v2335, %v2337
        %v2339 = vrot.slane %v2332, %v2338
        %v2341 = vunpack.c.l.s4 1935823168
        %v2342 = vunpack.c.0.s8 %v2341
        %v2343 = vlaneseq
        %v2344 = vshrl.u32 %v2343, 7
        %v2345 = vsub.s32 %v2342, %v2344
        %v2346 = vrot.slane %v1481, %v2345
        %v2348 = vunpack.c.l.s4 1935823168
        %v2349 = vunpack.c.0.s8 %v2348
        %v2350 = vlaneseq
        %v2351 = vshrl.u32 %v2350, 7
        %v2352 = vsub.s32 %v2349, %v2351
        %v2353 = vrot.slane %v2346, %v2352
        %v2355 = vunpack.c.l.s4 1935823168
        %v2356 = vunpack.c.0.s8 %v2355
        %v2357 = vlaneseq
        %v2358 = vshrl.u32 %v2357, 7
        %v2359 = vsub.s32 %v2356, %v2358
        %v2360 = vrot.slane %v1495, %v2359
        %v2362 = vunpack.c.l.s4 1935823168
        %v2363 = vunpack.c.0.s8 %v2362
        %v2364 = vlaneseq
        %v2365 = vshrl.u32 %v2364, 7
        %v2366 = vsub.s32 %v2363, %v2365
        %v2367 = vrot.slane %v2360, %v2366
        %v2369 = vunpack.c.l.s4 1935823168
        %v2370 = vunpack.c.0.s8 %v2369
        %v2371 = vlaneseq
        %v2372 = vshrl.u32 %v2371, 7
        %v2373 = vsub.s32 %v2370, %v2372
        %v2374 = vrot.slane %v1503, %v2373
        %v2376 = vunpack.c.l.s4 1935823168
        %v2377 = vunpack.c.0.s8 %v2376
        %v2378 = vlaneseq
        %v2379 = vshrl.u32 %v2378, 7
        %v2380 = vsub.s32 %v2377, %v2379
        %v2381 = vrot.slane %v2374, %v2380
        %v2383 = vunpack.c.l.s4 1935823168
        %v2384 = vunpack.c.0.s8 %v2383
        %v2385 = vlaneseq
        %v2386 = vshrl.u32 %v2385, 7
        %v2387 = vsub.s32 %v2384, %v2386
        %v2388 = vrot.slane %v1505, %v2387
        %v2390 = vunpack.c.l.s4 1935823168
        %v2391 = vunpack.c.0.s8 %v2390
        %v2392 = vlaneseq
        %v2393 = vshrl.u32 %v2392, 7
        %v2394 = vsub.s32 %v2391, %v2393
        %v2395 = vrot.slane %v2388, %v2394
        %v2397 = vunpack.c.l.s4 1935823168
        %v2398 = vunpack.c.0.s8 %v2397
        %v2399 = vlaneseq
        %v2400 = vshrl.u32 %v2399, 7
        %v2401 = vsub.s32 %v2398, %v2400
        %v2402 = vrot.slane %v1488, %v2401
        %v2404 = vunpack.c.l.s4 1935823168
        %v2405 = vunpack.c.0.s8 %v2404
        %v2406 = vlaneseq
        %v2407 = vshrl.u32 %v2406, 7
        %v2408 = vsub.s32 %v2405, %v2407
        %v2409 = vrot.slane %v2402, %v2408
        %v2411 = vunpack.c.l.s4 1935823168
        %v2412 = vunpack.c.0.s8 %v2411
        %v2413 = vlaneseq
        %v2414 = vshrl.u32 %v2413, 7
        %v2415 = vsub.s32 %v2412, %v2414
        %v2416 = vrot.slane %v1502, %v2415
        %v2418 = vunpack.c.l.s4 1935823168
        %v2419 = vunpack.c.0.s8 %v2418
        %v2420 = vlaneseq
        %v2421 = vshrl.u32 %v2420, 7
        %v2422 = vsub.s32 %v2419, %v2421
        %v2423 = vrot.slane %v2416, %v2422
        %v2425 = vunpack.c.l.s4 1935823168
        %v2426 = vunpack.c.0.s8 %v2425
        %v2427 = vlaneseq
        %v2428 = vshrl.u32 %v2427, 7
        %v2429 = vsub.s32 %v2426, %v2428
        %v2430 = vrot.slane %v1504, %v2429
        %v2432 = vunpack.c.l.s4 1935823168
        %v2433 = vunpack.c.0.s8 %v2432
        %v2434 = vlaneseq
        %v2435 = vshrl.u32 %v2434, 7
        %v2436 = vsub.s32 %v2433, %v2435
        %v2437 = vrot.slane %v2430, %v2436
        %v2439 = vunpack.c.l.s4 1935823168
        %v2440 = vunpack.c.0.s8 %v2439
        %v2441 = vlaneseq
        %v2442 = vshrl.u32 %v2441, 7
        %v2443 = vsub.s32 %v2440, %v2442
        %v2444 = vrot.slane %v1506, %v2443
        %v2446 = vunpack.c.l.s4 1935823168
        %v2447 = vunpack.c.0.s8 %v2446
        %v2448 = vlaneseq
        %v2449 = vshrl.u32 %v2448, 7
        %v2450 = vsub.s32 %v2447, %v2449
        %v2451 = vrot.slane %v2444, %v2450
        %v2452 = vunpack.c.l.b16 %v1569
        %v2453 = vunpack.c.l.b16 %v1583
        %v2454 = vunpack.c.l.b16 %v1597
        %v2455 = vunpack.c.l.b16 %v1611
        %v2456 = vunpack.c.l.b16 %v1625
        %v2457 = vunpack.c.l.b16 %v1639
        %v2458 = vunpack.c.l.b16 %v1653
        %v2459 = vunpack.c.l.b16 %v1667
        %v2460 = vunpack.c.l.b16 %v1681
        %v2461 = vunpack.c.l.b16 %v1695
        %v2462 = vunpack.c.l.b16 %v1709
        %v2463 = vunpack.c.l.b16 %v1723
        %v2464 = vunpack.c.l.b16 %v1737
        %v2465 = vunpack.c.l.b16 %v1751
        %v2466 = vunpack.c.l.b16 %v1765
        %v2467 = vunpack.c.l.b16 %v1779
        %v2468 = vunpack.c.l.b16 %v1793
        %v2469 = vunpack.c.l.b16 %v1807
        %v2470 = vunpack.c.l.b16 %v1821
        %v2471 = vunpack.c.l.b16 %v1835
        %v2472 = vunpack.c.l.b16 %v1849
        %v2473 = vunpack.c.l.b16 %v1863
        %v2474 = vunpack.c.l.b16 %v1877
        %v2475 = vunpack.c.l.b16 %v1891
        %v2476 = vunpack.c.l.b16 %v1905
        %v2477 = vunpack.c.l.b16 %v1919
        %v2478 = vunpack.c.l.b16 %v1933
        %v2479 = vunpack.c.l.b16 %v1947
        %v2480 = vunpack.c.l.b16 %v1961
        %v2481 = vunpack.c.l.b16 %v1975
        %v2482 = vunpack.c.l.b16 %v1989
        %v2483 = vunpack.c.l.b16 %v2003
        %v2484 = vunpack.c.l.b16 %v2017
        %v2485 = vunpack.c.l.b16 %v2031
        %v2486 = vunpack.c.l.b16 %v2045
        %v2487 = vunpack.c.l.b16 %v2059
        %v2488 = vunpack.c.l.b16 %v2073
        %v2489 = vunpack.c.l.b16 %v2087
        %v2490 = vunpack.c.l.b16 %v2101
        %v2491 = vunpack.c.l.b16 %v2115
        %v2492 = vunpack.c.l.b16 %v2129
        %v2493 = vunpack.c.l.b16 %v2143
        %v2494 = vunpack.c.l.b16 %v2157
        %v2495 = vunpack.c.l.b16 %v2171
        %v2496 = vunpack.c.l.b16 %v2185
        %v2497 = vunpack.c.l.b16 %v2199
        %v2498 = vunpack.c.l.b16 %v2213
        %v2499 = vunpack.c.l.b16 %v2227
        %v2500 = vunpack.c.l.b16 %v2241
        %v2501 = vunpack.c.l.b16 %v2255
        %v2502 = vunpack.c.l.b16 %v2269
        %v2503 = vunpack.c.l.b16 %v2283
        %v2504 = vunpack.c.l.b16 %v2297
        %v2505 = vunpack.c.l.b16 %v2311
        %v2506 = vunpack.c.l.b16 %v2325
        %v2507 = vunpack.c.l.b16 %v2339
        %v2508 = vunpack.c.l.b16 %v2353
        %v2509 = vunpack.c.l.b16 %v2367
        %v2510 = vunpack.c.l.b16 %v2381
        %v2511 = vunpack.c.l.b16 %v2395
        %v2512 = vunpack.c.l.b16 %v2409
        %v2513 = vunpack.c.l.b16 %v2423
        %v2514 = vunpack.c.l.b16 %v2437
        %v2515 = vunpack.c.l.b16 %v2451
        %v2516 = vrot.slane %v2453, 7
        %vm2517 = vcmask 1041409
        %v2518 = vsel %vm2517, %v2516, %v2452
        %v2519 = vrot.slane %v2454, 6
        %vm2520 = vcmask 1042434
        %v2521 = vsel %vm2520, %v2519, %v2518
        %v2522 = vrot.slane %v2455, 5
        %vm2523 = vcmask 1043459
        %v2524 = vsel %vm2523, %v2522, %v2521
        %v2525 = vrot.slane %v2456, 4
        %vm2526 = vcmask 1044484
        %v2527 = vsel %vm2526, %v2525, %v2524
        %v2528 = vrot.slane %v2457, 3
        %vm2529 = vcmask 1045509
        %v2530 = vsel %vm2529, %v2528, %v2527
        %v2531 = vrot.slane %v2458, 2
        %vm2532 = vcmask 1046534
        %v2533 = vsel %vm2532, %v2531, %v2530
        %v2534 = vrot.slane %v2459, 1
        %vm2535 = vcmask 1047559
        %v2536 = vsel %vm2535, %v2534, %v2533
        %v2537 = vrot.slane %v2461, 7
        %v2538 = vsel %vm2517, %v2537, %v2460
        %v2539 = vrot.slane %v2462, 6
        %v2540 = vsel %vm2520, %v2539, %v2538
        %v2541 = vrot.slane %v2463, 5
        %v2542 = vsel %vm2523, %v2541, %v2540
        %v2543 = vrot.slane %v2464, 4
        %v2544 = vsel %vm2526, %v2543, %v2542
        %v2545 = vrot.slane %v2465, 3
        %v2546 = vsel %vm2529, %v2545, %v2544
        %v2547 = vrot.slane %v2466, 2
        %v2548 = vsel %vm2532, %v2547, %v2546
        %v2549 = vrot.slane %v2467, 1
        %v2550 = vsel %vm2535, %v2549, %v2548
        %v2551 = vrot.slane %v2469, 7
        %v2552 = vsel %vm2517, %v2551, %v2468
        %v2553 = vrot.slane %v2470, 6
        %v2554 = vsel %vm2520, %v2553, %v2552
        %v2555 = vrot.slane %v2471, 5
        %v2556 = vsel %vm2523, %v2555, %v2554
        %v2557 = vrot.slane %v2472, 4
        %v2558 = vsel %vm2526, %v2557, %v2556
        %v2559 = vrot.slane %v2473, 3
        %v2560 = vsel %vm2529, %v2559, %v2558
        %v2561 = vrot.slane %v2474, 2
        %v2562 = vsel %vm2532, %v2561, %v2560
        %v2563 = vrot.slane %v2475, 1
        %v2564 = vsel %vm2535, %v2563, %v2562
        %v2565 = vrot.slane %v2477, 7
        %v2566 = vsel %vm2517, %v2565, %v2476
        %v2567 = vrot.slane %v2478, 6
        %v2568 = vsel %vm2520, %v2567, %v2566
        %v2569 = vrot.slane %v2479, 5
        %v2570 = vsel %vm2523, %v2569, %v2568
        %v2571 = vrot.slane %v2480, 4
        %v2572 = vsel %vm2526, %v2571, %v2570
        %v2573 = vrot.slane %v2481, 3
        %v2574 = vsel %vm2529, %v2573, %v2572
        %v2575 = vrot.slane %v2482, 2
        %v2576 = vsel %vm2532, %v2575, %v2574
        %v2577 = vrot.slane %v2483, 1
        %v2578 = vsel %vm2535, %v2577, %v2576
        %v2579 = vrot.slane %v2485, 7
        %v2580 = vsel %vm2517, %v2579, %v2484
        %v2581 = vrot.slane %v2486, 6
        %v2582 = vsel %vm2520, %v2581, %v2580
        %v2583 = vrot.slane %v2487, 5
        %v2584 = vsel %vm2523, %v2583, %v2582
        %v2585 = vrot.slane %v2488, 4
        %v2586 = vsel %vm2526, %v2585, %v2584
        %v2587 = vrot.slane %v2489, 3
        %v2588 = vsel %vm2529, %v2587, %v2586
        %v2589 = vrot.slane %v2490, 2
        %v2590 = vsel %vm2532, %v2589, %v2588
        %v2591 = vrot.slane %v2491, 1
        %v2592 = vsel %vm2535, %v2591, %v2590
        %v2593 = vrot.slane %v2493, 7
        %v2594 = vsel %vm2517, %v2593, %v2492
        %v2595 = vrot.slane %v2494, 6
        %v2596 = vsel %vm2520, %v2595, %v2594
        %v2597 = vrot.slane %v2495, 5
        %v2598 = vsel %vm2523, %v2597, %v2596
        %v2599 = vrot.slane %v2496, 4
        %v2600 = vsel %vm2526, %v2599, %v2598
        %v2601 = vrot.slane %v2497, 3
        %v2602 = vsel %vm2529, %v2601, %v2600
        %v2603 = vrot.slane %v2498, 2
        %v2604 = vsel %vm2532, %v2603, %v2602
        %v2605 = vrot.slane %v2499, 1
        %v2606 = vsel %vm2535, %v2605, %v2604
        %v2607 = vrot.slane %v2501, 7
        %v2608 = vsel %vm2517, %v2607, %v2500
        %v2609 = vrot.slane %v2502, 6
        %v2610 = vsel %vm2520, %v2609, %v2608
        %v2611 = vrot.slane %v2503, 5
        %v2612 = vsel %vm2523, %v2611, %v2610
        %v2613 = vrot.slane %v2504, 4
        %v2614 = vsel %vm2526, %v2613, %v2612
        %v2615 = vrot.slane %v2505, 3
        %v2616 = vsel %vm2529, %v2615, %v2614
        %v2617 = vrot.slane %v2506, 2
        %v2618 = vsel %vm2532, %v2617, %v2616
        %v2619 = vrot.slane %v2507, 1
        %v2620 = vsel %vm2535, %v2619, %v2618
        %v2621 = vrot.slane %v2509, 7
        %v2622 = vsel %vm2517, %v2621, %v2508
        %v2623 = vrot.slane %v2510, 6
        %v2624 = vsel %vm2520, %v2623, %v2622
        %v2625 = vrot.slane %v2511, 5
        %v2626 = vsel %vm2523, %v2625, %v2624
        %v2627 = vrot.slane %v2512, 4
        %v2628 = vsel %vm2526, %v2627, %v2626
        %v2629 = vrot.slane %v2513, 3
        %v2630 = vsel %vm2529, %v2629, %v2628
        %v2631 = vrot.slane %v2514, 2
        %v2632 = vsel %vm2532, %v2631, %v2630
        %v2633 = vrot.slane %v2515, 1
        %v2634 = vsel %vm2535, %v2633, %v2632
        %v2635 = vpack.c.b16 %v2536, %v2536
        %v2636 = vpack.c.b16 %v2550, %v2550
        %v2637 = vpack.c.b16 %v2564, %v2564
        %v2638 = vpack.c.b16 %v2578, %v2578
        %v2639 = vpack.c.b16 %v2592, %v2592
        %v2640 = vpack.c.b16 %v2606, %v2606
        %v2641 = vpack.c.b16 %v2620, %v2620
        %v2642 = vpack.c.b16 %v2634, %v2634
        %2651 = vst.msk [vmem:[#allocation2] sm:$0xf] %vm688, %v2635
        %2652 = vst.msk [vmem:[#allocation2 + $0x8] sm:$0xf] %vm688, %v2636
        %2653 = vst.msk [vmem:[#allocation2 + $0x10] sm:$0xf] %vm688, %v2637
        %2654 = vst.msk [vmem:[#allocation2 + $0x18] sm:$0xf] %vm688, %v2638
        %2655 = vst.msk [vmem:[#allocation2 + $0x20] sm:$0xf] %vm688, %v2639
        %2656 = vst.msk [vmem:[#allocation2 + $0x28] sm:$0xf] %vm688, %v2640
        %2657 = vst.msk [vmem:[#allocation2 + $0x30] sm:$0xf] %vm688, %v2641
        %2658 = vst.msk [vmem:[#allocation2 + $0x38] sm:$0xf] %vm688, %v2642
        %v2660 = vunpack.c.l.s4 1935823168
        %v2661 = vunpack.c.0.s8 %v2660
        %v2662 = vlaneseq
        %v2663 = vshrl.u32 %v2662, 7
        %v2664 = vsub.s32 %v2661, %v2663
        %v2665 = vrot.slane %v844, %v2664
        %v2667 = vunpack.c.l.s4 1935823168
        %v2668 = vunpack.c.0.s8 %v2667
        %v2669 = vlaneseq
        %v2670 = vshrl.u32 %v2669, 7
        %v2671 = vsub.s32 %v2668, %v2670
        %v2672 = vrot.slane %v2665, %v2671
        %v2674 = vunpack.c.l.s4 1935823168
        %v2675 = vunpack.c.0.s8 %v2674
        %v2676 = vlaneseq
        %v2677 = vshrl.u32 %v2676, 7
        %v2678 = vsub.s32 %v2675, %v2677
        %v2679 = vrot.slane %v858, %v2678
        %v2681 = vunpack.c.l.s4 1935823168
        %v2682 = vunpack.c.0.s8 %v2681
        %v2683 = vlaneseq
        %v2684 = vshrl.u32 %v2683, 7
        %v2685 = vsub.s32 %v2682, %v2684
        %v2686 = vrot.slane %v2679, %v2685
        %v2688 = vunpack.c.l.s4 1935823168
        %v2689 = vunpack.c.0.s8 %v2688
        %v2690 = vlaneseq
        %v2691 = vshrl.u32 %v2690, 7
        %v2692 = vsub.s32 %v2689, %v2691
        %v2693 = vrot.slane %v866, %v2692
        %v2695 = vunpack.c.l.s4 1935823168
        %v2696 = vunpack.c.0.s8 %v2695
        %v2697 = vlaneseq
        %v2698 = vshrl.u32 %v2697, 7
        %v2699 = vsub.s32 %v2696, %v2698
        %v2700 = vrot.slane %v2693, %v2699
        %v2702 = vunpack.c.l.s4 1935823168
        %v2703 = vunpack.c.0.s8 %v2702
        %v2704 = vlaneseq
        %v2705 = vshrl.u32 %v2704, 7
        %v2706 = vsub.s32 %v2703, %v2705
        %v2707 = vrot.slane %v868, %v2706
        %v2709 = vunpack.c.l.s4 1935823168
        %v2710 = vunpack.c.0.s8 %v2709
        %v2711 = vlaneseq
        %v2712 = vshrl.u32 %v2711, 7
        %v2713 = vsub.s32 %v2710, %v2712
        %v2714 = vrot.slane %v2707, %v2713
        %v2716 = vunpack.c.l.s4 1935823168
        %v2717 = vunpack.c.0.s8 %v2716
        %v2718 = vlaneseq
        %v2719 = vshrl.u32 %v2718, 7
        %v2720 = vsub.s32 %v2717, %v2719
        %v2721 = vrot.slane %v851, %v2720
        %v2723 = vunpack.c.l.s4 1935823168
        %v2724 = vunpack.c.0.s8 %v2723
        %v2725 = vlaneseq
        %v2726 = vshrl.u32 %v2725, 7
        %v2727 = vsub.s32 %v2724, %v2726
        %v2728 = vrot.slane %v2721, %v2727
        %v2730 = vunpack.c.l.s4 1935823168
        %v2731 = vunpack.c.0.s8 %v2730
        %v2732 = vlaneseq
        %v2733 = vshrl.u32 %v2732, 7
        %v2734 = vsub.s32 %v2731, %v2733
        %v2735 = vrot.slane %v865, %v2734
        %v2737 = vunpack.c.l.s4 1935823168
        %v2738 = vunpack.c.0.s8 %v2737
        %v2739 = vlaneseq
        %v2740 = vshrl.u32 %v2739, 7
        %v2741 = vsub.s32 %v2738, %v2740
        %v2742 = vrot.slane %v2735, %v2741
        %v2744 = vunpack.c.l.s4 1935823168
        %v2745 = vunpack.c.0.s8 %v2744
        %v2746 = vlaneseq
        %v2747 = vshrl.u32 %v2746, 7
        %v2748 = vsub.s32 %v2745, %v2747
        %v2749 = vrot.slane %v867, %v2748
        %v2751 = vunpack.c.l.s4 1935823168
        %v2752 = vunpack.c.0.s8 %v2751
        %v2753 = vlaneseq
        %v2754 = vshrl.u32 %v2753, 7
        %v2755 = vsub.s32 %v2752, %v2754
        %v2756 = vrot.slane %v2749, %v2755
        %v2758 = vunpack.c.l.s4 1935823168
        %v2759 = vunpack.c.0.s8 %v2758
        %v2760 = vlaneseq
        %v2761 = vshrl.u32 %v2760, 7
        %v2762 = vsub.s32 %v2759, %v2761
        %v2763 = vrot.slane %v869, %v2762
        %v2765 = vunpack.c.l.s4 1935823168
        %v2766 = vunpack.c.0.s8 %v2765
        %v2767 = vlaneseq
        %v2768 = vshrl.u32 %v2767, 7
        %v2769 = vsub.s32 %v2766, %v2768
        %v2770 = vrot.slane %v2763, %v2769
        %v2772 = vunpack.c.l.s4 1935823168
        %v2773 = vunpack.c.0.s8 %v2772
        %v2774 = vlaneseq
        %v2775 = vshrl.u32 %v2774, 7
        %v2776 = vsub.s32 %v2773, %v2775
        %v2777 = vrot.slane %v942, %v2776
        %v2779 = vunpack.c.l.s4 1935823168
        %v2780 = vunpack.c.0.s8 %v2779
        %v2781 = vlaneseq
        %v2782 = vshrl.u32 %v2781, 7
        %v2783 = vsub.s32 %v2780, %v2782
        %v2784 = vrot.slane %v2777, %v2783
        %v2786 = vunpack.c.l.s4 1935823168
        %v2787 = vunpack.c.0.s8 %v2786
        %v2788 = vlaneseq
        %v2789 = vshrl.u32 %v2788, 7
        %v2790 = vsub.s32 %v2787, %v2789
        %v2791 = vrot.slane %v956, %v2790
        %v2793 = vunpack.c.l.s4 1935823168
        %v2794 = vunpack.c.0.s8 %v2793
        %v2795 = vlaneseq
        %v2796 = vshrl.u32 %v2795, 7
        %v2797 = vsub.s32 %v2794, %v2796
        %v2798 = vrot.slane %v2791, %v2797
        %v2800 = vunpack.c.l.s4 1935823168
        %v2801 = vunpack.c.0.s8 %v2800
        %v2802 = vlaneseq
        %v2803 = vshrl.u32 %v2802, 7
        %v2804 = vsub.s32 %v2801, %v2803
        %v2805 = vrot.slane %v964, %v2804
        %v2807 = vunpack.c.l.s4 1935823168
        %v2808 = vunpack.c.0.s8 %v2807
        %v2809 = vlaneseq
        %v2810 = vshrl.u32 %v2809, 7
        %v2811 = vsub.s32 %v2808, %v2810
        %v2812 = vrot.slane %v2805, %v2811
        %v2814 = vunpack.c.l.s4 1935823168
        %v2815 = vunpack.c.0.s8 %v2814
        %v2816 = vlaneseq
        %v2817 = vshrl.u32 %v2816, 7
        %v2818 = vsub.s32 %v2815, %v2817
        %v2819 = vrot.slane %v966, %v2818
        %v2821 = vunpack.c.l.s4 1935823168
        %v2822 = vunpack.c.0.s8 %v2821
        %v2823 = vlaneseq
        %v2824 = vshrl.u32 %v2823, 7
        %v2825 = vsub.s32 %v2822, %v2824
        %v2826 = vrot.slane %v2819, %v2825
        %v2828 = vunpack.c.l.s4 1935823168
        %v2829 = vunpack.c.0.s8 %v2828
        %v2830 = vlaneseq
        %v2831 = vshrl.u32 %v2830, 7
        %v2832 = vsub.s32 %v2829, %v2831
        %v2833 = vrot.slane %v949, %v2832
        %v2835 = vunpack.c.l.s4 1935823168
        %v2836 = vunpack.c.0.s8 %v2835
        %v2837 = vlaneseq
        %v2838 = vshrl.u32 %v2837, 7
        %v2839 = vsub.s32 %v2836, %v2838
        %v2840 = vrot.slane %v2833, %v2839
        %v2842 = vunpack.c.l.s4 1935823168
        %v2843 = vunpack.c.0.s8 %v2842
        %v2844 = vlaneseq
        %v2845 = vshrl.u32 %v2844, 7
        %v2846 = vsub.s32 %v2843, %v2845
        %v2847 = vrot.slane %v963, %v2846
        %v2849 = vunpack.c.l.s4 1935823168
        %v2850 = vunpack.c.0.s8 %v2849
        %v2851 = vlaneseq
        %v2852 = vshrl.u32 %v2851, 7
        %v2853 = vsub.s32 %v2850, %v2852
        %v2854 = vrot.slane %v2847, %v2853
        %v2856 = vunpack.c.l.s4 1935823168
        %v2857 = vunpack.c.0.s8 %v2856
        %v2858 = vlaneseq
        %v2859 = vshrl.u32 %v2858, 7
        %v2860 = vsub.s32 %v2857, %v2859
        %v2861 = vrot.slane %v965, %v2860
        %v2863 = vunpack.c.l.s4 1935823168
        %v2864 = vunpack.c.0.s8 %v2863
        %v2865 = vlaneseq
        %v2866 = vshrl.u32 %v2865, 7
        %v2867 = vsub.s32 %v2864, %v2866
        %v2868 = vrot.slane %v2861, %v2867
        %v2870 = vunpack.c.l.s4 1935823168
        %v2871 = vunpack.c.0.s8 %v2870
        %v2872 = vlaneseq
        %v2873 = vshrl.u32 %v2872, 7
        %v2874 = vsub.s32 %v2871, %v2873
        %v2875 = vrot.slane %v967, %v2874
        %v2877 = vunpack.c.l.s4 1935823168
        %v2878 = vunpack.c.0.s8 %v2877
        %v2879 = vlaneseq
        %v2880 = vshrl.u32 %v2879, 7
        %v2881 = vsub.s32 %v2878, %v2880
        %v2882 = vrot.slane %v2875, %v2881
        %v2884 = vunpack.c.l.s4 1935823168
        %v2885 = vunpack.c.0.s8 %v2884
        %v2886 = vlaneseq
        %v2887 = vshrl.u32 %v2886, 7
        %v2888 = vsub.s32 %v2885, %v2887
        %v2889 = vrot.slane %v1040, %v2888
        %v2891 = vunpack.c.l.s4 1935823168
        %v2892 = vunpack.c.0.s8 %v2891
        %v2893 = vlaneseq
        %v2894 = vshrl.u32 %v2893, 7
        %v2895 = vsub.s32 %v2892, %v2894
        %v2896 = vrot.slane %v2889, %v2895
        %v2898 = vunpack.c.l.s4 1935823168
        %v2899 = vunpack.c.0.s8 %v2898
        %v2900 = vlaneseq
        %v2901 = vshrl.u32 %v2900, 7
        %v2902 = vsub.s32 %v2899, %v2901
        %v2903 = vrot.slane %v1054, %v2902
        %v2905 = vunpack.c.l.s4 1935823168
        %v2906 = vunpack.c.0.s8 %v2905
        %v2907 = vlaneseq
        %v2908 = vshrl.u32 %v2907, 7
        %v2909 = vsub.s32 %v2906, %v2908
        %v2910 = vrot.slane %v2903, %v2909
        %v2912 = vunpack.c.l.s4 1935823168
        %v2913 = vunpack.c.0.s8 %v2912
        %v2914 = vlaneseq
        %v2915 = vshrl.u32 %v2914, 7
        %v2916 = vsub.s32 %v2913, %v2915
        %v2917 = vrot.slane %v1062, %v2916
        %v2919 = vunpack.c.l.s4 1935823168
        %v2920 = vunpack.c.0.s8 %v2919
        %v2921 = vlaneseq
        %v2922 = vshrl.u32 %v2921, 7
        %v2923 = vsub.s32 %v2920, %v2922
        %v2924 = vrot.slane %v2917, %v2923
        %v2926 = vunpack.c.l.s4 1935823168
        %v2927 = vunpack.c.0.s8 %v2926
        %v2928 = vlaneseq
        %v2929 = vshrl.u32 %v2928, 7
        %v2930 = vsub.s32 %v2927, %v2929
        %v2931 = vrot.slane %v1064, %v2930
        %v2933 = vunpack.c.l.s4 1935823168
        %v2934 = vunpack.c.0.s8 %v2933
        %v2935 = vlaneseq
        %v2936 = vshrl.u32 %v2935, 7
        %v2937 = vsub.s32 %v2934, %v2936
        %v2938 = vrot.slane %v2931, %v2937
        %v2940 = vunpack.c.l.s4 1935823168
        %v2941 = vunpack.c.0.s8 %v2940
        %v2942 = vlaneseq
        %v2943 = vshrl.u32 %v2942, 7
        %v2944 = vsub.s32 %v2941, %v2943
        %v2945 = vrot.slane %v1047, %v2944
        %v2947 = vunpack.c.l.s4 1935823168
        %v2948 = vunpack.c.0.s8 %v2947
        %v2949 = vlaneseq
        %v2950 = vshrl.u32 %v2949, 7
        %v2951 = vsub.s32 %v2948, %v2950
        %v2952 = vrot.slane %v2945, %v2951
        %v2954 = vunpack.c.l.s4 1935823168
        %v2955 = vunpack.c.0.s8 %v2954
        %v2956 = vlaneseq
        %v2957 = vshrl.u32 %v2956, 7
        %v2958 = vsub.s32 %v2955, %v2957
        %v2959 = vrot.slane %v1061, %v2958
        %v2961 = vunpack.c.l.s4 1935823168
        %v2962 = vunpack.c.0.s8 %v2961
        %v2963 = vlaneseq
        %v2964 = vshrl.u32 %v2963, 7
        %v2965 = vsub.s32 %v2962, %v2964
        %v2966 = vrot.slane %v2959, %v2965
        %v2968 = vunpack.c.l.s4 1935823168
        %v2969 = vunpack.c.0.s8 %v2968
        %v2970 = vlaneseq
        %v2971 = vshrl.u32 %v2970, 7
        %v2972 = vsub.s32 %v2969, %v2971
        %v2973 = vrot.slane %v1063, %v2972
        %v2975 = vunpack.c.l.s4 1935823168
        %v2976 = vunpack.c.0.s8 %v2975
        %v2977 = vlaneseq
        %v2978 = vshrl.u32 %v2977, 7
        %v2979 = vsub.s32 %v2976, %v2978
        %v2980 = vrot.slane %v2973, %v2979
        %v2982 = vunpack.c.l.s4 1935823168
        %v2983 = vunpack.c.0.s8 %v2982
        %v2984 = vlaneseq
        %v2985 = vshrl.u32 %v2984, 7
        %v2986 = vsub.s32 %v2983, %v2985
        %v2987 = vrot.slane %v1065, %v2986
        %v2989 = vunpack.c.l.s4 1935823168
        %v2990 = vunpack.c.0.s8 %v2989
        %v2991 = vlaneseq
        %v2992 = vshrl.u32 %v2991, 7
        %v2993 = vsub.s32 %v2990, %v2992
        %v2994 = vrot.slane %v2987, %v2993
        %v2996 = vunpack.c.l.s4 1935823168
        %v2997 = vunpack.c.0.s8 %v2996
        %v2998 = vlaneseq
        %v2999 = vshrl.u32 %v2998, 7
        %v3000 = vsub.s32 %v2997, %v2999
        %v3001 = vrot.slane %v1138, %v3000
        %v3003 = vunpack.c.l.s4 1935823168
        %v3004 = vunpack.c.0.s8 %v3003
        %v3005 = vlaneseq
        %v3006 = vshrl.u32 %v3005, 7
        %v3007 = vsub.s32 %v3004, %v3006
        %v3008 = vrot.slane %v3001, %v3007
        %v3010 = vunpack.c.l.s4 1935823168
        %v3011 = vunpack.c.0.s8 %v3010
        %v3012 = vlaneseq
        %v3013 = vshrl.u32 %v3012, 7
        %v3014 = vsub.s32 %v3011, %v3013
        %v3015 = vrot.slane %v1152, %v3014
        %v3017 = vunpack.c.l.s4 1935823168
        %v3018 = vunpack.c.0.s8 %v3017
        %v3019 = vlaneseq
        %v3020 = vshrl.u32 %v3019, 7
        %v3021 = vsub.s32 %v3018, %v3020
        %v3022 = vrot.slane %v3015, %v3021
        %v3024 = vunpack.c.l.s4 1935823168
        %v3025 = vunpack.c.0.s8 %v3024
        %v3026 = vlaneseq
        %v3027 = vshrl.u32 %v3026, 7
        %v3028 = vsub.s32 %v3025, %v3027
        %v3029 = vrot.slane %v1160, %v3028
        %v3031 = vunpack.c.l.s4 1935823168
        %v3032 = vunpack.c.0.s8 %v3031
        %v3033 = vlaneseq
        %v3034 = vshrl.u32 %v3033, 7
        %v3035 = vsub.s32 %v3032, %v3034
        %v3036 = vrot.slane %v3029, %v3035
        %v3038 = vunpack.c.l.s4 1935823168
        %v3039 = vunpack.c.0.s8 %v3038
        %v3040 = vlaneseq
        %v3041 = vshrl.u32 %v3040, 7
        %v3042 = vsub.s32 %v3039, %v3041
        %v3043 = vrot.slane %v1162, %v3042
        %v3045 = vunpack.c.l.s4 1935823168
        %v3046 = vunpack.c.0.s8 %v3045
        %v3047 = vlaneseq
        %v3048 = vshrl.u32 %v3047, 7
        %v3049 = vsub.s32 %v3046, %v3048
        %v3050 = vrot.slane %v3043, %v3049
        %v3052 = vunpack.c.l.s4 1935823168
        %v3053 = vunpack.c.0.s8 %v3052
        %v3054 = vlaneseq
        %v3055 = vshrl.u32 %v3054, 7
        %v3056 = vsub.s32 %v3053, %v3055
        %v3057 = vrot.slane %v1145, %v3056
        %v3059 = vunpack.c.l.s4 1935823168
        %v3060 = vunpack.c.0.s8 %v3059
        %v3061 = vlaneseq
        %v3062 = vshrl.u32 %v3061, 7
        %v3063 = vsub.s32 %v3060, %v3062
        %v3064 = vrot.slane %v3057, %v3063
        %v3066 = vunpack.c.l.s4 1935823168
        %v3067 = vunpack.c.0.s8 %v3066
        %v3068 = vlaneseq
        %v3069 = vshrl.u32 %v3068, 7
        %v3070 = vsub.s32 %v3067, %v3069
        %v3071 = vrot.slane %v1159, %v3070
        %v3073 = vunpack.c.l.s4 1935823168
        %v3074 = vunpack.c.0.s8 %v3073
        %v3075 = vlaneseq
        %v3076 = vshrl.u32 %v3075, 7
        %v3077 = vsub.s32 %v3074, %v3076
        %v3078 = vrot.slane %v3071, %v3077
        %v3080 = vunpack.c.l.s4 1935823168
        %v3081 = vunpack.c.0.s8 %v3080
        %v3082 = vlaneseq
        %v3083 = vshrl.u32 %v3082, 7
        %v3084 = vsub.s32 %v3081, %v3083
        %v3085 = vrot.slane %v1161, %v3084
        %v3087 = vunpack.c.l.s4 1935823168
        %v3088 = vunpack.c.0.s8 %v3087
        %v3089 = vlaneseq
        %v3090 = vshrl.u32 %v3089, 7
        %v3091 = vsub.s32 %v3088, %v3090
        %v3092 = vrot.slane %v3085, %v3091
        %v3094 = vunpack.c.l.s4 1935823168
        %v3095 = vunpack.c.0.s8 %v3094
        %v3096 = vlaneseq
        %v3097 = vshrl.u32 %v3096, 7
        %v3098 = vsub.s32 %v3095, %v3097
        %v3099 = vrot.slane %v1163, %v3098
        %v3101 = vunpack.c.l.s4 1935823168
        %v3102 = vunpack.c.0.s8 %v3101
        %v3103 = vlaneseq
        %v3104 = vshrl.u32 %v3103, 7
        %v3105 = vsub.s32 %v3102, %v3104
        %v3106 = vrot.slane %v3099, %v3105
        %v3108 = vunpack.c.l.s4 1935823168
        %v3109 = vunpack.c.0.s8 %v3108
        %v3110 = vlaneseq
        %v3111 = vshrl.u32 %v3110, 7
        %v3112 = vsub.s32 %v3109, %v3111
        %v3113 = vrot.slane %v1236, %v3112
        %v3115 = vunpack.c.l.s4 1935823168
        %v3116 = vunpack.c.0.s8 %v3115
        %v3117 = vlaneseq
        %v3118 = vshrl.u32 %v3117, 7
        %v3119 = vsub.s32 %v3116, %v3118
        %v3120 = vrot.slane %v3113, %v3119
        %v3122 = vunpack.c.l.s4 1935823168
        %v3123 = vunpack.c.0.s8 %v3122
        %v3124 = vlaneseq
        %v3125 = vshrl.u32 %v3124, 7
        %v3126 = vsub.s32 %v3123, %v3125
        %v3127 = vrot.slane %v1250, %v3126
        %v3129 = vunpack.c.l.s4 1935823168
        %v3130 = vunpack.c.0.s8 %v3129
        %v3131 = vlaneseq
        %v3132 = vshrl.u32 %v3131, 7
        %v3133 = vsub.s32 %v3130, %v3132
        %v3134 = vrot.slane %v3127, %v3133
        %v3136 = vunpack.c.l.s4 1935823168
        %v3137 = vunpack.c.0.s8 %v3136
        %v3138 = vlaneseq
        %v3139 = vshrl.u32 %v3138, 7
        %v3140 = vsub.s32 %v3137, %v3139
        %v3141 = vrot.slane %v1258, %v3140
        %v3143 = vunpack.c.l.s4 1935823168
        %v3144 = vunpack.c.0.s8 %v3143
        %v3145 = vlaneseq
        %v3146 = vshrl.u32 %v3145, 7
        %v3147 = vsub.s32 %v3144, %v3146
        %v3148 = vrot.slane %v3141, %v3147
        %v3150 = vunpack.c.l.s4 1935823168
        %v3151 = vunpack.c.0.s8 %v3150
        %v3152 = vlaneseq
        %v3153 = vshrl.u32 %v3152, 7
        %v3154 = vsub.s32 %v3151, %v3153
        %v3155 = vrot.slane %v1260, %v3154
        %v3157 = vunpack.c.l.s4 1935823168
        %v3158 = vunpack.c.0.s8 %v3157
        %v3159 = vlaneseq
        %v3160 = vshrl.u32 %v3159, 7
        %v3161 = vsub.s32 %v3158, %v3160
        %v3162 = vrot.slane %v3155, %v3161
        %v3164 = vunpack.c.l.s4 1935823168
        %v3165 = vunpack.c.0.s8 %v3164
        %v3166 = vlaneseq
        %v3167 = vshrl.u32 %v3166, 7
        %v3168 = vsub.s32 %v3165, %v3167
        %v3169 = vrot.slane %v1243, %v3168
        %v3171 = vunpack.c.l.s4 1935823168
        %v3172 = vunpack.c.0.s8 %v3171
        %v3173 = vlaneseq
        %v3174 = vshrl.u32 %v3173, 7
        %v3175 = vsub.s32 %v3172, %v3174
        %v3176 = vrot.slane %v3169, %v3175
        %v3178 = vunpack.c.l.s4 1935823168
        %v3179 = vunpack.c.0.s8 %v3178
        %v3180 = vlaneseq
        %v3181 = vshrl.u32 %v3180, 7
        %v3182 = vsub.s32 %v3179, %v3181
        %v3183 = vrot.slane %v1257, %v3182
        %v3185 = vunpack.c.l.s4 1935823168
        %v3186 = vunpack.c.0.s8 %v3185
        %v3187 = vlaneseq
        %v3188 = vshrl.u32 %v3187, 7
        %v3189 = vsub.s32 %v3186, %v3188
        %v3190 = vrot.slane %v3183, %v3189
        %v3192 = vunpack.c.l.s4 1935823168
        %v3193 = vunpack.c.0.s8 %v3192
        %v3194 = vlaneseq
        %v3195 = vshrl.u32 %v3194, 7
        %v3196 = vsub.s32 %v3193, %v3195
        %v3197 = vrot.slane %v1259, %v3196
        %v3199 = vunpack.c.l.s4 1935823168
        %v3200 = vunpack.c.0.s8 %v3199
        %v3201 = vlaneseq
        %v3202 = vshrl.u32 %v3201, 7
        %v3203 = vsub.s32 %v3200, %v3202
        %v3204 = vrot.slane %v3197, %v3203
        %v3206 = vunpack.c.l.s4 1935823168
        %v3207 = vunpack.c.0.s8 %v3206
        %v3208 = vlaneseq
        %v3209 = vshrl.u32 %v3208, 7
        %v3210 = vsub.s32 %v3207, %v3209
        %v3211 = vrot.slane %v1261, %v3210
        %v3213 = vunpack.c.l.s4 1935823168
        %v3214 = vunpack.c.0.s8 %v3213
        %v3215 = vlaneseq
        %v3216 = vshrl.u32 %v3215, 7
        %v3217 = vsub.s32 %v3214, %v3216
        %v3218 = vrot.slane %v3211, %v3217
        %v3220 = vunpack.c.l.s4 1935823168
        %v3221 = vunpack.c.0.s8 %v3220
        %v3222 = vlaneseq
        %v3223 = vshrl.u32 %v3222, 7
        %v3224 = vsub.s32 %v3221, %v3223
        %v3225 = vrot.slane %v1334, %v3224
        %v3227 = vunpack.c.l.s4 1935823168
        %v3228 = vunpack.c.0.s8 %v3227
        %v3229 = vlaneseq
        %v3230 = vshrl.u32 %v3229, 7
        %v3231 = vsub.s32 %v3228, %v3230
        %v3232 = vrot.slane %v3225, %v3231
        %v3234 = vunpack.c.l.s4 1935823168
        %v3235 = vunpack.c.0.s8 %v3234
        %v3236 = vlaneseq
        %v3237 = vshrl.u32 %v3236, 7
        %v3238 = vsub.s32 %v3235, %v3237
        %v3239 = vrot.slane %v1348, %v3238
        %v3241 = vunpack.c.l.s4 1935823168
        %v3242 = vunpack.c.0.s8 %v3241
        %v3243 = vlaneseq
        %v3244 = vshrl.u32 %v3243, 7
        %v3245 = vsub.s32 %v3242, %v3244
        %v3246 = vrot.slane %v3239, %v3245
        %v3248 = vunpack.c.l.s4 1935823168
        %v3249 = vunpack.c.0.s8 %v3248
        %v3250 = vlaneseq
        %v3251 = vshrl.u32 %v3250, 7
        %v3252 = vsub.s32 %v3249, %v3251
        %v3253 = vrot.slane %v1356, %v3252
        %v3255 = vunpack.c.l.s4 1935823168
        %v3256 = vunpack.c.0.s8 %v3255
        %v3257 = vlaneseq
        %v3258 = vshrl.u32 %v3257, 7
        %v3259 = vsub.s32 %v3256, %v3258
        %v3260 = vrot.slane %v3253, %v3259
        %v3262 = vunpack.c.l.s4 1935823168
        %v3263 = vunpack.c.0.s8 %v3262
        %v3264 = vlaneseq
        %v3265 = vshrl.u32 %v3264, 7
        %v3266 = vsub.s32 %v3263, %v3265
        %v3267 = vrot.slane %v1358, %v3266
        %v3269 = vunpack.c.l.s4 1935823168
        %v3270 = vunpack.c.0.s8 %v3269
        %v3271 = vlaneseq
        %v3272 = vshrl.u32 %v3271, 7
        %v3273 = vsub.s32 %v3270, %v3272
        %v3274 = vrot.slane %v3267, %v3273
        %v3276 = vunpack.c.l.s4 1935823168
        %v3277 = vunpack.c.0.s8 %v3276
        %v3278 = vlaneseq
        %v3279 = vshrl.u32 %v3278, 7
        %v3280 = vsub.s32 %v3277, %v3279
        %v3281 = vrot.slane %v1341, %v3280
        %v3283 = vunpack.c.l.s4 1935823168
        %v3284 = vunpack.c.0.s8 %v3283
        %v3285 = vlaneseq
        %v3286 = vshrl.u32 %v3285, 7
        %v3287 = vsub.s32 %v3284, %v3286
        %v3288 = vrot.slane %v3281, %v3287
        %v3290 = vunpack.c.l.s4 1935823168
        %v3291 = vunpack.c.0.s8 %v3290
        %v3292 = vlaneseq
        %v3293 = vshrl.u32 %v3292, 7
        %v3294 = vsub.s32 %v3291, %v3293
        %v3295 = vrot.slane %v1355, %v3294
        %v3297 = vunpack.c.l.s4 1935823168
        %v3298 = vunpack.c.0.s8 %v3297
        %v3299 = vlaneseq
        %v3300 = vshrl.u32 %v3299, 7
        %v3301 = vsub.s32 %v3298, %v3300
        %v3302 = vrot.slane %v3295, %v3301
        %v3304 = vunpack.c.l.s4 1935823168
        %v3305 = vunpack.c.0.s8 %v3304
        %v3306 = vlaneseq
        %v3307 = vshrl.u32 %v3306, 7
        %v3308 = vsub.s32 %v3305, %v3307
        %v3309 = vrot.slane %v1357, %v3308
        %v3311 = vunpack.c.l.s4 1935823168
        %v3312 = vunpack.c.0.s8 %v3311
        %v3313 = vlaneseq
        %v3314 = vshrl.u32 %v3313, 7
        %v3315 = vsub.s32 %v3312, %v3314
        %v3316 = vrot.slane %v3309, %v3315
        %v3318 = vunpack.c.l.s4 1935823168
        %v3319 = vunpack.c.0.s8 %v3318
        %v3320 = vlaneseq
        %v3321 = vshrl.u32 %v3320, 7
        %v3322 = vsub.s32 %v3319, %v3321
        %v3323 = vrot.slane %v1359, %v3322
        %v3325 = vunpack.c.l.s4 1935823168
        %v3326 = vunpack.c.0.s8 %v3325
        %v3327 = vlaneseq
        %v3328 = vshrl.u32 %v3327, 7
        %v3329 = vsub.s32 %v3326, %v3328
        %v3330 = vrot.slane %v3323, %v3329
        %v3332 = vunpack.c.l.s4 1935823168
        %v3333 = vunpack.c.0.s8 %v3332
        %v3334 = vlaneseq
        %v3335 = vshrl.u32 %v3334, 7
        %v3336 = vsub.s32 %v3333, %v3335
        %v3337 = vrot.slane %v1432, %v3336
        %v3339 = vunpack.c.l.s4 1935823168
        %v3340 = vunpack.c.0.s8 %v3339
        %v3341 = vlaneseq
        %v3342 = vshrl.u32 %v3341, 7
        %v3343 = vsub.s32 %v3340, %v3342
        %v3344 = vrot.slane %v3337, %v3343
        %v3346 = vunpack.c.l.s4 1935823168
        %v3347 = vunpack.c.0.s8 %v3346
        %v3348 = vlaneseq
        %v3349 = vshrl.u32 %v3348, 7
        %v3350 = vsub.s32 %v3347, %v3349
        %v3351 = vrot.slane %v1446, %v3350
        %v3353 = vunpack.c.l.s4 1935823168
        %v3354 = vunpack.c.0.s8 %v3353
        %v3355 = vlaneseq
        %v3356 = vshrl.u32 %v3355, 7
        %v3357 = vsub.s32 %v3354, %v3356
        %v3358 = vrot.slane %v3351, %v3357
        %v3360 = vunpack.c.l.s4 1935823168
        %v3361 = vunpack.c.0.s8 %v3360
        %v3362 = vlaneseq
        %v3363 = vshrl.u32 %v3362, 7
        %v3364 = vsub.s32 %v3361, %v3363
        %v3365 = vrot.slane %v1454, %v3364
        %v3367 = vunpack.c.l.s4 1935823168
        %v3368 = vunpack.c.0.s8 %v3367
        %v3369 = vlaneseq
        %v3370 = vshrl.u32 %v3369, 7
        %v3371 = vsub.s32 %v3368, %v3370
        %v3372 = vrot.slane %v3365, %v3371
        %v3374 = vunpack.c.l.s4 1935823168
        %v3375 = vunpack.c.0.s8 %v3374
        %v3376 = vlaneseq
        %v3377 = vshrl.u32 %v3376, 7
        %v3378 = vsub.s32 %v3375, %v3377
        %v3379 = vrot.slane %v1456, %v3378
        %v3381 = vunpack.c.l.s4 1935823168
        %v3382 = vunpack.c.0.s8 %v3381
        %v3383 = vlaneseq
        %v3384 = vshrl.u32 %v3383, 7
        %v3385 = vsub.s32 %v3382, %v3384
        %v3386 = vrot.slane %v3379, %v3385
        %v3388 = vunpack.c.l.s4 1935823168
        %v3389 = vunpack.c.0.s8 %v3388
        %v3390 = vlaneseq
        %v3391 = vshrl.u32 %v3390, 7
        %v3392 = vsub.s32 %v3389, %v3391
        %v3393 = vrot.slane %v1439, %v3392
        %v3395 = vunpack.c.l.s4 1935823168
        %v3396 = vunpack.c.0.s8 %v3395
        %v3397 = vlaneseq
        %v3398 = vshrl.u32 %v3397, 7
        %v3399 = vsub.s32 %v3396, %v3398
        %v3400 = vrot.slane %v3393, %v3399
        %v3402 = vunpack.c.l.s4 1935823168
        %v3403 = vunpack.c.0.s8 %v3402
        %v3404 = vlaneseq
        %v3405 = vshrl.u32 %v3404, 7
        %v3406 = vsub.s32 %v3403, %v3405
        %v3407 = vrot.slane %v1453, %v3406
        %v3409 = vunpack.c.l.s4 1935823168
        %v3410 = vunpack.c.0.s8 %v3409
        %v3411 = vlaneseq
        %v3412 = vshrl.u32 %v3411, 7
        %v3413 = vsub.s32 %v3410, %v3412
        %v3414 = vrot.slane %v3407, %v3413
        %v3416 = vunpack.c.l.s4 1935823168
        %v3417 = vunpack.c.0.s8 %v3416
        %v3418 = vlaneseq
        %v3419 = vshrl.u32 %v3418, 7
        %v3420 = vsub.s32 %v3417, %v3419
        %v3421 = vrot.slane %v1455, %v3420
        %v3423 = vunpack.c.l.s4 1935823168
        %v3424 = vunpack.c.0.s8 %v3423
        %v3425 = vlaneseq
        %v3426 = vshrl.u32 %v3425, 7
        %v3427 = vsub.s32 %v3424, %v3426
        %v3428 = vrot.slane %v3421, %v3427
        %v3430 = vunpack.c.l.s4 1935823168
        %v3431 = vunpack.c.0.s8 %v3430
        %v3432 = vlaneseq
        %v3433 = vshrl.u32 %v3432, 7
        %v3434 = vsub.s32 %v3431, %v3433
        %v3435 = vrot.slane %v1457, %v3434
        %v3437 = vunpack.c.l.s4 1935823168
        %v3438 = vunpack.c.0.s8 %v3437
        %v3439 = vlaneseq
        %v3440 = vshrl.u32 %v3439, 7
        %v3441 = vsub.s32 %v3438, %v3440
        %v3442 = vrot.slane %v3435, %v3441
        %v3444 = vunpack.c.l.s4 1935823168
        %v3445 = vunpack.c.0.s8 %v3444
        %v3446 = vlaneseq
        %v3447 = vshrl.u32 %v3446, 7
        %v3448 = vsub.s32 %v3445, %v3447
        %v3449 = vrot.slane %v1530, %v3448
        %v3451 = vunpack.c.l.s4 1935823168
        %v3452 = vunpack.c.0.s8 %v3451
        %v3453 = vlaneseq
        %v3454 = vshrl.u32 %v3453, 7
        %v3455 = vsub.s32 %v3452, %v3454
        %v3456 = vrot.slane %v3449, %v3455
        %v3458 = vunpack.c.l.s4 1935823168
        %v3459 = vunpack.c.0.s8 %v3458
        %v3460 = vlaneseq
        %v3461 = vshrl.u32 %v3460, 7
        %v3462 = vsub.s32 %v3459, %v3461
        %v3463 = vrot.slane %v1544, %v3462
        %v3465 = vunpack.c.l.s4 1935823168
        %v3466 = vunpack.c.0.s8 %v3465
        %v3467 = vlaneseq
        %v3468 = vshrl.u32 %v3467, 7
        %v3469 = vsub.s32 %v3466, %v3468
        %v3470 = vrot.slane %v3463, %v3469
        %v3472 = vunpack.c.l.s4 1935823168
        %v3473 = vunpack.c.0.s8 %v3472
        %v3474 = vlaneseq
        %v3475 = vshrl.u32 %v3474, 7
        %v3476 = vsub.s32 %v3473, %v3475
        %v3477 = vrot.slane %v1552, %v3476
        %v3479 = vunpack.c.l.s4 1935823168
        %v3480 = vunpack.c.0.s8 %v3479
        %v3481 = vlaneseq
        %v3482 = vshrl.u32 %v3481, 7
        %v3483 = vsub.s32 %v3480, %v3482
        %v3484 = vrot.slane %v3477, %v3483
        %v3486 = vunpack.c.l.s4 1935823168
        %v3487 = vunpack.c.0.s8 %v3486
        %v3488 = vlaneseq
        %v3489 = vshrl.u32 %v3488, 7
        %v3490 = vsub.s32 %v3487, %v3489
        %v3491 = vrot.slane %v1554, %v3490
        %v3493 = vunpack.c.l.s4 1935823168
        %v3494 = vunpack.c.0.s8 %v3493
        %v3495 = vlaneseq
        %v3496 = vshrl.u32 %v3495, 7
        %v3497 = vsub.s32 %v3494, %v3496
        %v3498 = vrot.slane %v3491, %v3497
        %v3500 = vunpack.c.l.s4 1935823168
        %v3501 = vunpack.c.0.s8 %v3500
        %v3502 = vlaneseq
        %v3503 = vshrl.u32 %v3502, 7
        %v3504 = vsub.s32 %v3501, %v3503
        %v3505 = vrot.slane %v1537, %v3504
        %v3507 = vunpack.c.l.s4 1935823168
        %v3508 = vunpack.c.0.s8 %v3507
        %v3509 = vlaneseq
        %v3510 = vshrl.u32 %v3509, 7
        %v3511 = vsub.s32 %v3508, %v3510
        %v3512 = vrot.slane %v3505, %v3511
        %v3514 = vunpack.c.l.s4 1935823168
        %v3515 = vunpack.c.0.s8 %v3514
        %v3516 = vlaneseq
        %v3517 = vshrl.u32 %v3516, 7
        %v3518 = vsub.s32 %v3515, %v3517
        %v3519 = vrot.slane %v1551, %v3518
        %v3521 = vunpack.c.l.s4 1935823168
        %v3522 = vunpack.c.0.s8 %v3521
        %v3523 = vlaneseq
        %v3524 = vshrl.u32 %v3523, 7
        %v3525 = vsub.s32 %v3522, %v3524
        %v3526 = vrot.slane %v3519, %v3525
        %v3528 = vunpack.c.l.s4 1935823168
        %v3529 = vunpack.c.0.s8 %v3528
        %v3530 = vlaneseq
        %v3531 = vshrl.u32 %v3530, 7
        %v3532 = vsub.s32 %v3529, %v3531
        %v3533 = vrot.slane %v1553, %v3532
        %v3535 = vunpack.c.l.s4 1935823168
        %v3536 = vunpack.c.0.s8 %v3535
        %v3537 = vlaneseq
        %v3538 = vshrl.u32 %v3537, 7
        %v3539 = vsub.s32 %v3536, %v3538
        %v3540 = vrot.slane %v3533, %v3539
        %v3542 = vunpack.c.l.s4 1935823168
        %v3543 = vunpack.c.0.s8 %v3542
        %v3544 = vlaneseq
        %v3545 = vshrl.u32 %v3544, 7
        %v3546 = vsub.s32 %v3543, %v3545
        %v3547 = vrot.slane %v1555, %v3546
        %v3549 = vunpack.c.l.s4 1935823168
        %v3550 = vunpack.c.0.s8 %v3549
        %v3551 = vlaneseq
        %v3552 = vshrl.u32 %v3551, 7
        %v3553 = vsub.s32 %v3550, %v3552
        %v3554 = vrot.slane %v3547, %v3553
        %v3555 = vunpack.c.l.b16 %v2672
        %v3556 = vunpack.c.l.b16 %v2686
        %v3557 = vunpack.c.l.b16 %v2700
        %v3558 = vunpack.c.l.b16 %v2714
        %v3559 = vunpack.c.l.b16 %v2728
        %v3560 = vunpack.c.l.b16 %v2742
        %v3561 = vunpack.c.l.b16 %v2756
        %v3562 = vunpack.c.l.b16 %v2770
        %v3563 = vunpack.c.l.b16 %v2784
        %v3564 = vunpack.c.l.b16 %v2798
        %v3565 = vunpack.c.l.b16 %v2812
        %v3566 = vunpack.c.l.b16 %v2826
        %v3567 = vunpack.c.l.b16 %v2840
        %v3568 = vunpack.c.l.b16 %v2854
        %v3569 = vunpack.c.l.b16 %v2868
        %v3570 = vunpack.c.l.b16 %v2882
        %v3571 = vunpack.c.l.b16 %v2896
        %v3572 = vunpack.c.l.b16 %v2910
        %v3573 = vunpack.c.l.b16 %v2924
        %v3574 = vunpack.c.l.b16 %v2938
        %v3575 = vunpack.c.l.b16 %v2952
        %v3576 = vunpack.c.l.b16 %v2966
        %v3577 = vunpack.c.l.b16 %v2980
        %v3578 = vunpack.c.l.b16 %v2994
        %v3579 = vunpack.c.l.b16 %v3008
        %v3580 = vunpack.c.l.b16 %v3022
        %v3581 = vunpack.c.l.b16 %v3036
        %v3582 = vunpack.c.l.b16 %v3050
        %v3583 = vunpack.c.l.b16 %v3064
        %v3584 = vunpack.c.l.b16 %v3078
        %v3585 = vunpack.c.l.b16 %v3092
        %v3586 = vunpack.c.l.b16 %v3106
        %v3587 = vunpack.c.l.b16 %v3120
        %v3588 = vunpack.c.l.b16 %v3134
        %v3589 = vunpack.c.l.b16 %v3148
        %v3590 = vunpack.c.l.b16 %v3162
        %v3591 = vunpack.c.l.b16 %v3176
        %v3592 = vunpack.c.l.b16 %v3190
        %v3593 = vunpack.c.l.b16 %v3204
        %v3594 = vunpack.c.l.b16 %v3218
        %v3595 = vunpack.c.l.b16 %v3232
        %v3596 = vunpack.c.l.b16 %v3246
        %v3597 = vunpack.c.l.b16 %v3260
        %v3598 = vunpack.c.l.b16 %v3274
        %v3599 = vunpack.c.l.b16 %v3288
        %v3600 = vunpack.c.l.b16 %v3302
        %v3601 = vunpack.c.l.b16 %v3316
        %v3602 = vunpack.c.l.b16 %v3330
        %v3603 = vunpack.c.l.b16 %v3344
        %v3604 = vunpack.c.l.b16 %v3358
        %v3605 = vunpack.c.l.b16 %v3372
        %v3606 = vunpack.c.l.b16 %v3386
        %v3607 = vunpack.c.l.b16 %v3400
        %v3608 = vunpack.c.l.b16 %v3414
        %v3609 = vunpack.c.l.b16 %v3428
        %v3610 = vunpack.c.l.b16 %v3442
        %v3611 = vunpack.c.l.b16 %v3456
        %v3612 = vunpack.c.l.b16 %v3470
        %v3613 = vunpack.c.l.b16 %v3484
        %v3614 = vunpack.c.l.b16 %v3498
        %v3615 = vunpack.c.l.b16 %v3512
        %v3616 = vunpack.c.l.b16 %v3526
        %v3617 = vunpack.c.l.b16 %v3540
        %v3618 = vunpack.c.l.b16 %v3554
        %v3619 = vrot.slane %v3556, 7
        %v3620 = vsel %vm2517, %v3619, %v3555
        %v3621 = vrot.slane %v3557, 6
        %v3622 = vsel %vm2520, %v3621, %v3620
        %v3623 = vrot.slane %v3558, 5
        %v3624 = vsel %vm2523, %v3623, %v3622
        %v3625 = vrot.slane %v3559, 4
        %v3626 = vsel %vm2526, %v3625, %v3624
        %v3627 = vrot.slane %v3560, 3
        %v3628 = vsel %vm2529, %v3627, %v3626
        %v3629 = vrot.slane %v3561, 2
        %v3630 = vsel %vm2532, %v3629, %v3628
        %v3631 = vrot.slane %v3562, 1
        %v3632 = vsel %vm2535, %v3631, %v3630
        %v3633 = vrot.slane %v3564, 7
        %v3634 = vsel %vm2517, %v3633, %v3563
        %v3635 = vrot.slane %v3565, 6
        %v3636 = vsel %vm2520, %v3635, %v3634
        %v3637 = vrot.slane %v3566, 5
        %v3638 = vsel %vm2523, %v3637, %v3636
        %v3639 = vrot.slane %v3567, 4
        %v3640 = vsel %vm2526, %v3639, %v3638
        %v3641 = vrot.slane %v3568, 3
        %v3642 = vsel %vm2529, %v3641, %v3640
        %v3643 = vrot.slane %v3569, 2
        %v3644 = vsel %vm2532, %v3643, %v3642
        %v3645 = vrot.slane %v3570, 1
        %v3646 = vsel %vm2535, %v3645, %v3644
        %v3647 = vrot.slane %v3572, 7
        %v3648 = vsel %vm2517, %v3647, %v3571
        %v3649 = vrot.slane %v3573, 6
        %v3650 = vsel %vm2520, %v3649, %v3648
        %v3651 = vrot.slane %v3574, 5
        %v3652 = vsel %vm2523, %v3651, %v3650
        %v3653 = vrot.slane %v3575, 4
        %v3654 = vsel %vm2526, %v3653, %v3652
        %v3655 = vrot.slane %v3576, 3
        %v3656 = vsel %vm2529, %v3655, %v3654
        %v3657 = vrot.slane %v3577, 2
        %v3658 = vsel %vm2532, %v3657, %v3656
        %v3659 = vrot.slane %v3578, 1
        %v3660 = vsel %vm2535, %v3659, %v3658
        %v3661 = vrot.slane %v3580, 7
        %v3662 = vsel %vm2517, %v3661, %v3579
        %v3663 = vrot.slane %v3581, 6
        %v3664 = vsel %vm2520, %v3663, %v3662
        %v3665 = vrot.slane %v3582, 5
        %v3666 = vsel %vm2523, %v3665, %v3664
        %v3667 = vrot.slane %v3583, 4
        %v3668 = vsel %vm2526, %v3667, %v3666
        %v3669 = vrot.slane %v3584, 3
        %v3670 = vsel %vm2529, %v3669, %v3668
        %v3671 = vrot.slane %v3585, 2
        %v3672 = vsel %vm2532, %v3671, %v3670
        %v3673 = vrot.slane %v3586, 1
        %v3674 = vsel %vm2535, %v3673, %v3672
        %v3675 = vrot.slane %v3588, 7
        %v3676 = vsel %vm2517, %v3675, %v3587
        %v3677 = vrot.slane %v3589, 6
        %v3678 = vsel %vm2520, %v3677, %v3676
        %v3679 = vrot.slane %v3590, 5
        %v3680 = vsel %vm2523, %v3679, %v3678
        %v3681 = vrot.slane %v3591, 4
        %v3682 = vsel %vm2526, %v3681, %v3680
        %v3683 = vrot.slane %v3592, 3
        %v3684 = vsel %vm2529, %v3683, %v3682
        %v3685 = vrot.slane %v3593, 2
        %v3686 = vsel %vm2532, %v3685, %v3684
        %v3687 = vrot.slane %v3594, 1
        %v3688 = vsel %vm2535, %v3687, %v3686
        %v3689 = vrot.slane %v3596, 7
        %v3690 = vsel %vm2517, %v3689, %v3595
        %v3691 = vrot.slane %v3597, 6
        %v3692 = vsel %vm2520, %v3691, %v3690
        %v3693 = vrot.slane %v3598, 5
        %v3694 = vsel %vm2523, %v3693, %v3692
        %v3695 = vrot.slane %v3599, 4
        %v3696 = vsel %vm2526, %v3695, %v3694
        %v3697 = vrot.slane %v3600, 3
        %v3698 = vsel %vm2529, %v3697, %v3696
        %v3699 = vrot.slane %v3601, 2
        %v3700 = vsel %vm2532, %v3699, %v3698
        %v3701 = vrot.slane %v3602, 1
        %v3702 = vsel %vm2535, %v3701, %v3700
        %v3703 = vrot.slane %v3604, 7
        %v3704 = vsel %vm2517, %v3703, %v3603
        %v3705 = vrot.slane %v3605, 6
        %v3706 = vsel %vm2520, %v3705, %v3704
        %v3707 = vrot.slane %v3606, 5
        %v3708 = vsel %vm2523, %v3707, %v3706
        %v3709 = vrot.slane %v3607, 4
        %v3710 = vsel %vm2526, %v3709, %v3708
        %v3711 = vrot.slane %v3608, 3
        %v3712 = vsel %vm2529, %v3711, %v3710
        %v3713 = vrot.slane %v3609, 2
        %v3714 = vsel %vm2532, %v3713, %v3712
        %v3715 = vrot.slane %v3610, 1
        %v3716 = vsel %vm2535, %v3715, %v3714
        %v3717 = vrot.slane %v3612, 7
        %v3718 = vsel %vm2517, %v3717, %v3611
        %v3719 = vrot.slane %v3613, 6
        %v3720 = vsel %vm2520, %v3719, %v3718
        %v3721 = vrot.slane %v3614, 5
        %v3722 = vsel %vm2523, %v3721, %v3720
        %v3723 = vrot.slane %v3615, 4
        %v3724 = vsel %vm2526, %v3723, %v3722
        %v3725 = vrot.slane %v3616, 3
        %v3726 = vsel %vm2529, %v3725, %v3724
        %v3727 = vrot.slane %v3617, 2
        %v3728 = vsel %vm2532, %v3727, %v3726
        %v3729 = vrot.slane %v3618, 1
        %v3730 = vsel %vm2535, %v3729, %v3728
        %v3731 = vpack.c.b16 %v3632, %v3632
        %v3732 = vpack.c.b16 %v3646, %v3646
        %v3733 = vpack.c.b16 %v3660, %v3660
        %v3734 = vpack.c.b16 %v3674, %v3674
        %v3735 = vpack.c.b16 %v3688, %v3688
        %v3736 = vpack.c.b16 %v3702, %v3702
        %v3737 = vpack.c.b16 %v3716, %v3716
        %v3738 = vpack.c.b16 %v3730, %v3730
        %s3747 = scalar_lea.vmem [#allocation2], 152
        %3748 = vst.msk [vmem:[%s3747] sm:$0xf] %vm688, %v3731
        %3749 = vst.msk [vmem:[%s3747 + $0x8] sm:$0xf] %vm688, %v3732
        %3750 = vst.msk [vmem:[%s3747 + $0x10] sm:$0xf] %vm688, %v3733
        %3751 = vst.msk [vmem:[%s3747 + $0x18] sm:$0xf] %vm688, %v3734
        %3752 = vst.msk [vmem:[%s3747 + $0x20] sm:$0xf] %vm688, %v3735
        %3753 = vst.msk [vmem:[%s3747 + $0x28] sm:$0xf] %vm688, %v3736
        %3754 = vst.msk [vmem:[%s3747 + $0x30] sm:$0xf] %vm688, %v3737
        %3755 = vst.msk [vmem:[%s3747 + $0x38] sm:$0xf] %vm688, %v3738
        %v3756 = vsel %vm2520, %v2516, %v2452
        %v3757 = vsel %vm2523, %v2519, %v3756
        %v3758 = vsel %vm2526, %v2522, %v3757
        %v3759 = vsel %vm2529, %v2525, %v3758
        %v3760 = vsel %vm2532, %v2528, %v3759
        %v3761 = vsel %vm2535, %v2531, %v3760
        %v3762 = vsel %vm2520, %v2537, %v2460
        %v3763 = vsel %vm2523, %v2539, %v3762
        %v3764 = vsel %vm2526, %v2541, %v3763
        %v3765 = vsel %vm2529, %v2543, %v3764
        %v3766 = vsel %vm2532, %v2545, %v3765
        %v3767 = vsel %vm2535, %v2547, %v3766
        %v3768 = vsel %vm2520, %v2551, %v2468
        %v3769 = vsel %vm2523, %v2553, %v3768
        %v3770 = vsel %vm2526, %v2555, %v3769
        %v3771 = vsel %vm2529, %v2557, %v3770
        %v3772 = vsel %vm2532, %v2559, %v3771
        %v3773 = vsel %vm2535, %v2561, %v3772
        %v3774 = vsel %vm2520, %v2565, %v2476
        %v3775 = vsel %vm2523, %v2567, %v3774
        %v3776 = vsel %vm2526, %v2569, %v3775
        %v3777 = vsel %vm2529, %v2571, %v3776
        %v3778 = vsel %vm2532, %v2573, %v3777
        %v3779 = vsel %vm2535, %v2575, %v3778
        %v3780 = vsel %vm2520, %v2579, %v2484
        %v3781 = vsel %vm2523, %v2581, %v3780
        %v3782 = vsel %vm2526, %v2583, %v3781
        %v3783 = vsel %vm2529, %v2585, %v3782
        %v3784 = vsel %vm2532, %v2587, %v3783
        %v3785 = vsel %vm2535, %v2589, %v3784
        %v3786 = vsel %vm2520, %v2593, %v2492
        %v3787 = vsel %vm2523, %v2595, %v3786
        %v3788 = vsel %vm2526, %v2597, %v3787
        %v3789 = vsel %vm2529, %v2599, %v3788
        %v3790 = vsel %vm2532, %v2601, %v3789
        %v3791 = vsel %vm2535, %v2603, %v3790
        %v3792 = vsel %vm2520, %v2607, %v2500
        %v3793 = vsel %vm2523, %v2609, %v3792
        %v3794 = vsel %vm2526, %v2611, %v3793
        %v3795 = vsel %vm2529, %v2613, %v3794
        %v3796 = vsel %vm2532, %v2615, %v3795
        %v3797 = vsel %vm2535, %v2617, %v3796
        %v3798 = vsel %vm2520, %v2621, %v2508
        %v3799 = vsel %vm2523, %v2623, %v3798
        %v3800 = vsel %vm2526, %v2625, %v3799
        %v3801 = vsel %vm2529, %v2627, %v3800
        %v3802 = vsel %vm2532, %v2629, %v3801
        %v3803 = vsel %vm2535, %v2631, %v3802
        %v3804 = vpack.c.b16 %v3761, %v3761
        %v3805 = vpack.c.b16 %v2534, %v2534
        %v3806 = vpack.c.b16 %v3767, %v3767
        %v3807 = vpack.c.b16 %v2549, %v2549
        %v3808 = vpack.c.b16 %v3773, %v3773
        %v3809 = vpack.c.b16 %v2563, %v2563
        %v3810 = vpack.c.b16 %v3779, %v3779
        %v3811 = vpack.c.b16 %v2577, %v2577
        %v3812 = vpack.c.b16 %v3785, %v3785
        %v3813 = vpack.c.b16 %v2591, %v2591
        %v3814 = vpack.c.b16 %v3791, %v3791
        %v3815 = vpack.c.b16 %v2605, %v2605
        %v3816 = vpack.c.b16 %v3797, %v3797
        %v3817 = vpack.c.b16 %v2619, %v2619
        %v3818 = vpack.c.b16 %v3803, %v3803
        %v3819 = vpack.c.b16 %v2633, %v2633
        %vm3836 = vcmask 257024
        %vm3837 = vsmask.f32 7938
        %vm3838 = vmand %vm3836, %vm3837
        %v3839 = vld [vmem:[%s700] sm:$0xf]
        %v3840 = vsel %vm3838, %v3804, %v3839
        %3841 = vst [vmem:[%s700] sm:$0xf] %v3840
        %v3842 = vld [vmem:[%s700 + $0x4] sm:$0x1]
        %v3843 = vsel %vm692, %v3805, %v3842
        %3844 = vst [vmem:[%s700 + $0x4] sm:$0x1] %v3843
        %v3845 = vld [vmem:[%s700 + $0x8] sm:$0xf]
        %v3846 = vsel %vm3838, %v3806, %v3845
        %3847 = vst [vmem:[%s700 + $0x8] sm:$0xf] %v3846
        %v3848 = vld [vmem:[%s700 + $0xc] sm:$0x1]
        %v3849 = vsel %vm692, %v3807, %v3848
        %3850 = vst [vmem:[%s700 + $0xc] sm:$0x1] %v3849
        %v3851 = vld [vmem:[%s700 + $0x10] sm:$0xf]
        %v3852 = vsel %vm3838, %v3808, %v3851
        %3853 = vst [vmem:[%s700 + $0x10] sm:$0xf] %v3852
        %v3854 = vld [vmem:[%s700 + $0x14] sm:$0x1]
        %v3855 = vsel %vm692, %v3809, %v3854
        %3856 = vst [vmem:[%s700 + $0x14] sm:$0x1] %v3855
        %v3857 = vld [vmem:[%s700 + $0x18] sm:$0xf]
        %v3858 = vsel %vm3838, %v3810, %v3857
        %3859 = vst [vmem:[%s700 + $0x18] sm:$0xf] %v3858
        %v3860 = vld [vmem:[%s700 + $0x1c] sm:$0x1]
        %v3861 = vsel %vm692, %v3811, %v3860
        %3862 = vst [vmem:[%s700 + $0x1c] sm:$0x1] %v3861
        %v3863 = vld [vmem:[%s700 + $0x20] sm:$0xf]
        %v3864 = vsel %vm3838, %v3812, %v3863
        %3865 = vst [vmem:[%s700 + $0x20] sm:$0xf] %v3864
        %v3866 = vld [vmem:[%s700 + $0x24] sm:$0x1]
        %v3867 = vsel %vm692, %v3813, %v3866
        %3868 = vst [vmem:[%s700 + $0x24] sm:$0x1] %v3867
        %v3869 = vld [vmem:[%s700 + $0x28] sm:$0xf]
        %v3870 = vsel %vm3838, %v3814, %v3869
        %3871 = vst [vmem:[%s700 + $0x28] sm:$0xf] %v3870
        %v3872 = vld [vmem:[%s700 + $0x2c] sm:$0x1]
        %v3873 = vsel %vm692, %v3815, %v3872
        %3874 = vst [vmem:[%s700 + $0x2c] sm:$0x1] %v3873
        %v3875 = vld [vmem:[%s700 + $0x30] sm:$0xf]
        %v3876 = vsel %vm3838, %v3816, %v3875
        %3877 = vst [vmem:[%s700 + $0x30] sm:$0xf] %v3876
        %v3878 = vld [vmem:[%s700 + $0x34] sm:$0x1]
        %v3879 = vsel %vm692, %v3817, %v3878
        %3880 = vst [vmem:[%s700 + $0x34] sm:$0x1] %v3879
        %v3881 = vld [vmem:[%s700 + $0x38] sm:$0xf]
        %v3882 = vsel %vm3838, %v3818, %v3881
        %3883 = vst [vmem:[%s700 + $0x38] sm:$0xf] %v3882
        %v3884 = vld [vmem:[%s700 + $0x3c] sm:$0x1]
        %v3885 = vsel %vm692, %v3819, %v3884
        %3886 = vst [vmem:[%s700 + $0x3c] sm:$0x1] %v3885
        %v3887 = vsel %vm2520, %v3619, %v3555
        %v3888 = vsel %vm2523, %v3621, %v3887
        %v3889 = vsel %vm2526, %v3623, %v3888
        %v3890 = vsel %vm2529, %v3625, %v3889
        %v3891 = vsel %vm2532, %v3627, %v3890
        %v3892 = vsel %vm2535, %v3629, %v3891
        %v3893 = vsel %vm2520, %v3633, %v3563
        %v3894 = vsel %vm2523, %v3635, %v3893
        %v3895 = vsel %vm2526, %v3637, %v3894
        %v3896 = vsel %vm2529, %v3639, %v3895
        %v3897 = vsel %vm2532, %v3641, %v3896
        %v3898 = vsel %vm2535, %v3643, %v3897
        %v3899 = vsel %vm2520, %v3647, %v3571
        %v3900 = vsel %vm2523, %v3649, %v3899
        %v3901 = vsel %vm2526, %v3651, %v3900
        %v3902 = vsel %vm2529, %v3653, %v3901
        %v3903 = vsel %vm2532, %v3655, %v3902
        %v3904 = vsel %vm2535, %v3657, %v3903
        %v3905 = vsel %vm2520, %v3661, %v3579
        %v3906 = vsel %vm2523, %v3663, %v3905
        %v3907 = vsel %vm2526, %v3665, %v3906
        %v3908 = vsel %vm2529, %v3667, %v3907
        %v3909 = vsel %vm2532, %v3669, %v3908
        %v3910 = vsel %vm2535, %v3671, %v3909
        %v3911 = vsel %vm2520, %v3675, %v3587
        %v3912 = vsel %vm2523, %v3677, %v3911
        %v3913 = vsel %vm2526, %v3679, %v3912
        %v3914 = vsel %vm2529, %v3681, %v3913
        %v3915 = vsel %vm2532, %v3683, %v3914
        %v3916 = vsel %vm2535, %v3685, %v3915
        %v3917 = vsel %vm2520, %v3689, %v3595
        %v3918 = vsel %vm2523, %v3691, %v3917
        %v3919 = vsel %vm2526, %v3693, %v3918
        %v3920 = vsel %vm2529, %v3695, %v3919
        %v3921 = vsel %vm2532, %v3697, %v3920
        %v3922 = vsel %vm2535, %v3699, %v3921
        %v3923 = vsel %vm2520, %v3703, %v3603
        %v3924 = vsel %vm2523, %v3705, %v3923
        %v3925 = vsel %vm2526, %v3707, %v3924
        %v3926 = vsel %vm2529, %v3709, %v3925
        %v3927 = vsel %vm2532, %v3711, %v3926
        %v3928 = vsel %vm2535, %v3713, %v3927
        %v3929 = vsel %vm2520, %v3717, %v3611
        %v3930 = vsel %vm2523, %v3719, %v3929
        %v3931 = vsel %vm2526, %v3721, %v3930
        %v3932 = vsel %vm2529, %v3723, %v3931
        %v3933 = vsel %vm2532, %v3725, %v3932
        %v3934 = vsel %vm2535, %v3727, %v3933
        %v3935 = vpack.c.b16 %v3892, %v3892
        %v3936 = vpack.c.b16 %v3631, %v3631
        %v3937 = vpack.c.b16 %v3898, %v3898
        %v3938 = vpack.c.b16 %v3645, %v3645
        %v3939 = vpack.c.b16 %v3904, %v3904
        %v3940 = vpack.c.b16 %v3659, %v3659
        %v3941 = vpack.c.b16 %v3910, %v3910
        %v3942 = vpack.c.b16 %v3673, %v3673
        %v3943 = vpack.c.b16 %v3916, %v3916
        %v3944 = vpack.c.b16 %v3687, %v3687
        %v3945 = vpack.c.b16 %v3922, %v3922
        %v3946 = vpack.c.b16 %v3701, %v3701
        %v3947 = vpack.c.b16 %v3928, %v3928
        %v3948 = vpack.c.b16 %v3715, %v3715
        %v3949 = vpack.c.b16 %v3934, %v3934
        %v3950 = vpack.c.b16 %v3729, %v3729
        %s3967 = scalar_lea.vmem [#allocation2], 224
        %v3968 = vld [vmem:[%s3967] sm:$0xf]
        %v3969 = vsel %vm3838, %v3935, %v3968
        %3970 = vst [vmem:[%s3967] sm:$0xf] %v3969
        %v3971 = vld [vmem:[%s3967 + $0x4] sm:$0x1]
        %v3972 = vsel %vm692, %v3936, %v3971
        %3973 = vst [vmem:[%s3967 + $0x4] sm:$0x1] %v3972
        %v3974 = vld [vmem:[%s3967 + $0x8] sm:$0xf]
        %v3975 = vsel %vm3838, %v3937, %v3974
        %3976 = vst [vmem:[%s3967 + $0x8] sm:$0xf] %v3975
        %v3977 = vld [vmem:[%s3967 + $0xc] sm:$0x1]
        %v3978 = vsel %vm692, %v3938, %v3977
        %3979 = vst [vmem:[%s3967 + $0xc] sm:$0x1] %v3978
        %v3980 = vld [vmem:[%s3967 + $0x10] sm:$0xf]
        %v3981 = vsel %vm3838, %v3939, %v3980
        %3982 = vst [vmem:[%s3967 + $0x10] sm:$0xf] %v3981
        %v3983 = vld [vmem:[%s3967 + $0x14] sm:$0x1]
        %v3984 = vsel %vm692, %v3940, %v3983
        %3985 = vst [vmem:[%s3967 + $0x14] sm:$0x1] %v3984
        %v3986 = vld [vmem:[%s3967 + $0x18] sm:$0xf]
        %v3987 = vsel %vm3838, %v3941, %v3986
        %3988 = vst [vmem:[%s3967 + $0x18] sm:$0xf] %v3987
        %v3989 = vld [vmem:[%s3967 + $0x1c] sm:$0x1]
        %v3990 = vsel %vm692, %v3942, %v3989
        %3991 = vst [vmem:[%s3967 + $0x1c] sm:$0x1] %v3990
        %v3992 = vld [vmem:[%s3967 + $0x20] sm:$0xf]
        %v3993 = vsel %vm3838, %v3943, %v3992
        %3994 = vst [vmem:[%s3967 + $0x20] sm:$0xf] %v3993
        %v3995 = vld [vmem:[%s3967 + $0x24] sm:$0x1]
        %v3996 = vsel %vm692, %v3944, %v3995
        %3997 = vst [vmem:[%s3967 + $0x24] sm:$0x1] %v3996
        %v3998 = vld [vmem:[%s3967 + $0x28] sm:$0xf]
        %v3999 = vsel %vm3838, %v3945, %v3998
        %4000 = vst [vmem:[%s3967 + $0x28] sm:$0xf] %v3999
        %v4001 = vld [vmem:[%s3967 + $0x2c] sm:$0x1]
        %v4002 = vsel %vm692, %v3946, %v4001
        %4003 = vst [vmem:[%s3967 + $0x2c] sm:$0x1] %v4002
        %v4004 = vld [vmem:[%s3967 + $0x30] sm:$0xf]
        %v4005 = vsel %vm3838, %v3947, %v4004
        %4006 = vst [vmem:[%s3967 + $0x30] sm:$0xf] %v4005
        %v4007 = vld [vmem:[%s3967 + $0x34] sm:$0x1]
        %v4008 = vsel %vm692, %v3948, %v4007
        %4009 = vst [vmem:[%s3967 + $0x34] sm:$0x1] %v4008
        %v4010 = vld [vmem:[%s3967 + $0x38] sm:$0xf]
        %v4011 = vsel %vm3838, %v3949, %v4010
        %4012 = vst [vmem:[%s3967 + $0x38] sm:$0xf] %v4011
        %v4013 = vld [vmem:[%s3967 + $0x3c] sm:$0x1]
        %v4014 = vsel %vm692, %v3950, %v4013
        %4015 = vst [vmem:[%s3967 + $0x3c] sm:$0x1] %v4014
        %v4016 = vld [vmem:[%s728] sm:$0xf]
        %v4017 = vld [vmem:[%s728 + $0x8] sm:$0xf]
        %v4018 = vld [vmem:[%s728 + $0x10] sm:$0xf]
        %v4019 = vld [vmem:[%s728 + $0x18] sm:$0xf]
        %v4020 = vld [vmem:[%s728 + $0x20] sm:$0xf]
        %v4021 = vld [vmem:[%s728 + $0x28] sm:$0xf]
        %v4022 = vld [vmem:[%s728 + $0x30] sm:$0xf]
        %v4023 = vld [vmem:[%s728 + $0x38] sm:$0xf]
        %v4024 = vld [vmem:[%s687] sm:$0xf]
        %v4025 = vld [vmem:[%s687 + $0x8] sm:$0xf]
        %v4026 = vld [vmem:[%s687 + $0x10] sm:$0xf]
        %v4027 = vld [vmem:[%s687 + $0x18] sm:$0xf]
        %v4028 = vld [vmem:[%s687 + $0x20] sm:$0xf]
        %v4029 = vld [vmem:[%s687 + $0x28] sm:$0xf]
        %v4030 = vld [vmem:[%s687 + $0x30] sm:$0xf]
        %v4031 = vld [vmem:[%s687 + $0x38] sm:$0xf]
        %v4032 = vld [vmem:[%s728 + $0x4] sm:$0x1]
        %v4033 = vld [vmem:[%s728 + $0xc] sm:$0x1]
        %v4034 = vld [vmem:[%s728 + $0x14] sm:$0x1]
        %v4035 = vld [vmem:[%s728 + $0x1c] sm:$0x1]
        %v4036 = vld [vmem:[%s728 + $0x24] sm:$0x1]
        %v4037 = vld [vmem:[%s728 + $0x2c] sm:$0x1]
        %v4038 = vld [vmem:[%s728 + $0x34] sm:$0x1]
        %v4039 = vld [vmem:[%s728 + $0x3c] sm:$0x1]
        %vm4040 = vsmask.f32 3328
        %vm4041 = vsmask.f32 7440
        %vm4042 = vmor %vm4040, %vm4041
        %v4044 = vshrl.u32 %v4016, 16
        %v4046 = vrot.slane %v4044, 4
        %v4047 = vshll.u32 %v4016, 16
        %v4049 = vrot.slane %v4047, 5
        %v4050 = vor.u32 %v4046, %v4049
        %v4051 = vrot.slane %v4050, 4
        %v4053 = vshll.u32 %v4032, 16
        %v4055 = vrot.slane %v4053, 5
        %v4056 = vsel %vm4042, %v4051, %v4055
        %v4058 = vshrl.u32 %v4017, 16
        %v4060 = vrot.slane %v4058, 4
        %v4061 = vshll.u32 %v4017, 16
        %v4063 = vrot.slane %v4061, 5
        %v4064 = vor.u32 %v4060, %v4063
        %v4065 = vrot.slane %v4064, 4
        %v4067 = vshll.u32 %v4033, 16
        %v4069 = vrot.slane %v4067, 5
        %v4070 = vsel %vm4042, %v4065, %v4069
        %v4072 = vshrl.u32 %v4018, 16
        %v4074 = vrot.slane %v4072, 4
        %v4075 = vshll.u32 %v4018, 16
        %v4077 = vrot.slane %v4075, 5
        %v4078 = vor.u32 %v4074, %v4077
        %v4079 = vrot.slane %v4078, 4
        %v4081 = vshll.u32 %v4034, 16
        %v4083 = vrot.slane %v4081, 5
        %v4084 = vsel %vm4042, %v4079, %v4083
        %v4086 = vshrl.u32 %v4019, 16
        %v4088 = vrot.slane %v4086, 4
        %v4089 = vshll.u32 %v4019, 16
        %v4091 = vrot.slane %v4089, 5
        %v4092 = vor.u32 %v4088, %v4091
        %v4093 = vrot.slane %v4092, 4
        %v4095 = vshll.u32 %v4035, 16
        %v4097 = vrot.slane %v4095, 5
        %v4098 = vsel %vm4042, %v4093, %v4097
        %v4100 = vshrl.u32 %v4020, 16
        %v4102 = vrot.slane %v4100, 4
        %v4103 = vshll.u32 %v4020, 16
        %v4105 = vrot.slane %v4103, 5
        %v4106 = vor.u32 %v4102, %v4105
        %v4107 = vrot.slane %v4106, 4
        %v4109 = vshll.u32 %v4036, 16
        %v4111 = vrot.slane %v4109, 5
        %v4112 = vsel %vm4042, %v4107, %v4111
        %v4114 = vshrl.u32 %v4021, 16
        %v4116 = vrot.slane %v4114, 4
        %v4117 = vshll.u32 %v4021, 16
        %v4119 = vrot.slane %v4117, 5
        %v4120 = vor.u32 %v4116, %v4119
        %v4121 = vrot.slane %v4120, 4
        %v4123 = vshll.u32 %v4037, 16
        %v4125 = vrot.slane %v4123, 5
        %v4126 = vsel %vm4042, %v4121, %v4125
        %v4128 = vshrl.u32 %v4022, 16
        %v4130 = vrot.slane %v4128, 4
        %v4131 = vshll.u32 %v4022, 16
        %v4133 = vrot.slane %v4131, 5
        %v4134 = vor.u32 %v4130, %v4133
        %v4135 = vrot.slane %v4134, 4
        %v4137 = vshll.u32 %v4038, 16
        %v4139 = vrot.slane %v4137, 5
        %v4140 = vsel %vm4042, %v4135, %v4139
        %v4142 = vshrl.u32 %v4023, 16
        %v4144 = vrot.slane %v4142, 4
        %v4145 = vshll.u32 %v4023, 16
        %v4147 = vrot.slane %v4145, 5
        %v4148 = vor.u32 %v4144, %v4147
        %v4149 = vrot.slane %v4148, 4
        %v4151 = vshll.u32 %v4039, 16
        %v4153 = vrot.slane %v4151, 5
        %v4154 = vsel %vm4042, %v4149, %v4153
        %v4155 = vld [vmem:[%s700] sm:$0xf]
        %v4156 = vld [vmem:[%s700 + $0x8] sm:$0xf]
        %v4157 = vld [vmem:[%s700 + $0x10] sm:$0xf]
        %v4158 = vld [vmem:[%s700 + $0x18] sm:$0xf]
        %v4159 = vld [vmem:[%s700 + $0x20] sm:$0xf]
        %v4160 = vld [vmem:[%s700 + $0x28] sm:$0xf]
        %v4161 = vld [vmem:[%s700 + $0x30] sm:$0xf]
        %v4162 = vld [vmem:[%s700 + $0x38] sm:$0xf]
        %v4163 = vld [vmem:[#allocation2] sm:$0xf]
        %v4164 = vld [vmem:[#allocation2 + $0x8] sm:$0xf]
        %v4165 = vld [vmem:[#allocation2 + $0x10] sm:$0xf]
        %v4166 = vld [vmem:[#allocation2 + $0x18] sm:$0xf]
        %v4167 = vld [vmem:[#allocation2 + $0x20] sm:$0xf]
        %v4168 = vld [vmem:[#allocation2 + $0x28] sm:$0xf]
        %v4169 = vld [vmem:[#allocation2 + $0x30] sm:$0xf]
        %v4170 = vld [vmem:[#allocation2 + $0x38] sm:$0xf]
        %v4171 = vld [vmem:[%s700 + $0x4] sm:$0x1]
        %v4172 = vld [vmem:[%s700 + $0xc] sm:$0x1]
        %v4173 = vld [vmem:[%s700 + $0x14] sm:$0x1]
        %v4174 = vld [vmem:[%s700 + $0x1c] sm:$0x1]
        %v4175 = vld [vmem:[%s700 + $0x24] sm:$0x1]
        %v4176 = vld [vmem:[%s700 + $0x2c] sm:$0x1]
        %v4177 = vld [vmem:[%s700 + $0x34] sm:$0x1]
        %v4178 = vld [vmem:[%s700 + $0x3c] sm:$0x1]
        %v4180 = vshrl.u32 %v4155, 16
        %v4182 = vrot.slane %v4180, 4
        %v4183 = vshll.u32 %v4155, 16
        %v4185 = vrot.slane %v4183, 5
        %v4186 = vor.u32 %v4182, %v4185
        %v4187 = vrot.slane %v4186, 4
        %v4189 = vshll.u32 %v4171, 16
        %v4191 = vrot.slane %v4189, 5
        %v4192 = vsel %vm4042, %v4187, %v4191
        %v4194 = vshrl.u32 %v4156, 16
        %v4196 = vrot.slane %v4194, 4
        %v4197 = vshll.u32 %v4156, 16
        %v4199 = vrot.slane %v4197, 5
        %v4200 = vor.u32 %v4196, %v4199
        %v4201 = vrot.slane %v4200, 4
        %v4203 = vshll.u32 %v4172, 16
        %v4205 = vrot.slane %v4203, 5
        %v4206 = vsel %vm4042, %v4201, %v4205
        %v4208 = vshrl.u32 %v4157, 16
        %v4210 = vrot.slane %v4208, 4
        %v4211 = vshll.u32 %v4157, 16
        %v4213 = vrot.slane %v4211, 5
        %v4214 = vor.u32 %v4210, %v4213
        %v4215 = vrot.slane %v4214, 4
        %v4217 = vshll.u32 %v4173, 16
        %v4219 = vrot.slane %v4217, 5
        %v4220 = vsel %vm4042, %v4215, %v4219
        %v4222 = vshrl.u32 %v4158, 16
        %v4224 = vrot.slane %v4222, 4
        %v4225 = vshll.u32 %v4158, 16
        %v4227 = vrot.slane %v4225, 5
        %v4228 = vor.u32 %v4224, %v4227
        %v4229 = vrot.slane %v4228, 4
        %v4231 = vshll.u32 %v4174, 16
        %v4233 = vrot.slane %v4231, 5
        %v4234 = vsel %vm4042, %v4229, %v4233
        %v4236 = vshrl.u32 %v4159, 16
        %v4238 = vrot.slane %v4236, 4
        %v4239 = vshll.u32 %v4159, 16
        %v4241 = vrot.slane %v4239, 5
        %v4242 = vor.u32 %v4238, %v4241
        %v4243 = vrot.slane %v4242, 4
        %v4245 = vshll.u32 %v4175, 16
        %v4247 = vrot.slane %v4245, 5
        %v4248 = vsel %vm4042, %v4243, %v4247
        %v4250 = vshrl.u32 %v4160, 16
        %v4252 = vrot.slane %v4250, 4
        %v4253 = vshll.u32 %v4160, 16
        %v4255 = vrot.slane %v4253, 5
        %v4256 = vor.u32 %v4252, %v4255
        %v4257 = vrot.slane %v4256, 4
        %v4259 = vshll.u32 %v4176, 16
        %v4261 = vrot.slane %v4259, 5
        %v4262 = vsel %vm4042, %v4257, %v4261
        %v4264 = vshrl.u32 %v4161, 16
        %v4266 = vrot.slane %v4264, 4
        %v4267 = vshll.u32 %v4161, 16
        %v4269 = vrot.slane %v4267, 5
        %v4270 = vor.u32 %v4266, %v4269
        %v4271 = vrot.slane %v4270, 4
        %v4273 = vshll.u32 %v4177, 16
        %v4275 = vrot.slane %v4273, 5
        %v4276 = vsel %vm4042, %v4271, %v4275
        %v4278 = vshrl.u32 %v4162, 16
        %v4280 = vrot.slane %v4278, 4
        %v4281 = vshll.u32 %v4162, 16
        %v4283 = vrot.slane %v4281, 5
        %v4284 = vor.u32 %v4280, %v4283
        %v4285 = vrot.slane %v4284, 4
        %v4287 = vshll.u32 %v4178, 16
        %v4289 = vrot.slane %v4287, 5
        %v4290 = vsel %vm4042, %v4285, %v4289
        %v4291 = vld [vmem:[%s3967] sm:$0xf]
        %v4292 = vld [vmem:[%s3967 + $0x8] sm:$0xf]
        %v4293 = vld [vmem:[%s3967 + $0x10] sm:$0xf]
        %v4294 = vld [vmem:[%s3967 + $0x18] sm:$0xf]
        %v4295 = vld [vmem:[%s3967 + $0x20] sm:$0xf]
        %v4296 = vld [vmem:[%s3967 + $0x28] sm:$0xf]
        %v4297 = vld [vmem:[%s3967 + $0x30] sm:$0xf]
        %v4298 = vld [vmem:[%s3967 + $0x38] sm:$0xf]
        %v4299 = vld [vmem:[%s3747] sm:$0xf]
        %v4300 = vld [vmem:[%s3747 + $0x8] sm:$0xf]
        %v4301 = vld [vmem:[%s3747 + $0x10] sm:$0xf]
        %v4302 = vld [vmem:[%s3747 + $0x18] sm:$0xf]
        %v4303 = vld [vmem:[%s3747 + $0x20] sm:$0xf]
        %v4304 = vld [vmem:[%s3747 + $0x28] sm:$0xf]
        %v4305 = vld [vmem:[%s3747 + $0x30] sm:$0xf]
        %v4306 = vld [vmem:[%s3747 + $0x38] sm:$0xf]
        %v4307 = vld [vmem:[%s3967 + $0x4] sm:$0x1]
        %v4308 = vld [vmem:[%s3967 + $0xc] sm:$0x1]
        %v4309 = vld [vmem:[%s3967 + $0x14] sm:$0x1]
        %v4310 = vld [vmem:[%s3967 + $0x1c] sm:$0x1]
        %v4311 = vld [vmem:[%s3967 + $0x24] sm:$0x1]
        %v4312 = vld [vmem:[%s3967 + $0x2c] sm:$0x1]
        %v4313 = vld [vmem:[%s3967 + $0x34] sm:$0x1]
        %v4314 = vld [vmem:[%s3967 + $0x3c] sm:$0x1]
        %v4316 = vshrl.u32 %v4291, 16
        %v4318 = vrot.slane %v4316, 4
        %v4319 = vshll.u32 %v4291, 16
        %v4321 = vrot.slane %v4319, 5
        %v4322 = vor.u32 %v4318, %v4321
        %v4323 = vrot.slane %v4322, 4
        %v4325 = vshll.u32 %v4307, 16
        %v4327 = vrot.slane %v4325, 5
        %v4328 = vsel %vm4042, %v4323, %v4327
        %v4330 = vshrl.u32 %v4292, 16
        %v4332 = vrot.slane %v4330, 4
        %v4333 = vshll.u32 %v4292, 16
        %v4335 = vrot.slane %v4333, 5
        %v4336 = vor.u32 %v4332, %v4335
        %v4337 = vrot.slane %v4336, 4
        %v4339 = vshll.u32 %v4308, 16
        %v4341 = vrot.slane %v4339, 5
        %v4342 = vsel %vm4042, %v4337, %v4341
        %v4344 = vshrl.u32 %v4293, 16
        %v4346 = vrot.slane %v4344, 4
        %v4347 = vshll.u32 %v4293, 16
        %v4349 = vrot.slane %v4347, 5
        %v4350 = vor.u32 %v4346, %v4349
        %v4351 = vrot.slane %v4350, 4
        %v4353 = vshll.u32 %v4309, 16
        %v4355 = vrot.slane %v4353, 5
        %v4356 = vsel %vm4042, %v4351, %v4355
        %v4358 = vshrl.u32 %v4294, 16
        %v4360 = vrot.slane %v4358, 4
        %v4361 = vshll.u32 %v4294, 16
        %v4363 = vrot.slane %v4361, 5
        %v4364 = vor.u32 %v4360, %v4363
        %v4365 = vrot.slane %v4364, 4
        %v4367 = vshll.u32 %v4310, 16
        %v4369 = vrot.slane %v4367, 5
        %v4370 = vsel %vm4042, %v4365, %v4369
        %v4372 = vshrl.u32 %v4295, 16
        %v4374 = vrot.slane %v4372, 4
        %v4375 = vshll.u32 %v4295, 16
        %v4377 = vrot.slane %v4375, 5
        %v4378 = vor.u32 %v4374, %v4377
        %v4379 = vrot.slane %v4378, 4
        %v4381 = vshll.u32 %v4311, 16
        %v4383 = vrot.slane %v4381, 5
        %v4384 = vsel %vm4042, %v4379, %v4383
        %v4386 = vshrl.u32 %v4296, 16
        %v4388 = vrot.slane %v4386, 4
        %v4389 = vshll.u32 %v4296, 16
        %v4391 = vrot.slane %v4389, 5
        %v4392 = vor.u32 %v4388, %v4391
        %v4393 = vrot.slane %v4392, 4
        %v4395 = vshll.u32 %v4312, 16
        %v4397 = vrot.slane %v4395, 5
        %v4398 = vsel %vm4042, %v4393, %v4397
        %v4400 = vshrl.u32 %v4297, 16
        %v4402 = vrot.slane %v4400, 4
        %v4403 = vshll.u32 %v4297, 16
        %v4405 = vrot.slane %v4403, 5
        %v4406 = vor.u32 %v4402, %v4405
        %v4407 = vrot.slane %v4406, 4
        %v4409 = vshll.u32 %v4313, 16
        %v4411 = vrot.slane %v4409, 5
        %v4412 = vsel %vm4042, %v4407, %v4411
        %v4414 = vshrl.u32 %v4298, 16
        %v4416 = vrot.slane %v4414, 4
        %v4417 = vshll.u32 %v4298, 16
        %v4419 = vrot.slane %v4417, 5
        %v4420 = vor.u32 %v4416, %v4419
        %v4421 = vrot.slane %v4420, 4
        %v4423 = vshll.u32 %v4314, 16
        %v4425 = vrot.slane %v4423, 5
        %v4426 = vsel %vm4042, %v4421, %v4425
        %v4435 = vunpack.c.l.b16 %v4016
        %v4436 = vunpack.c.l.b16 %v4017
        %v4437 = vunpack.c.l.b16 %v4018
        %v4438 = vunpack.c.l.b16 %v4019
        %v4439 = vunpack.c.l.b16 %v4020
        %v4440 = vunpack.c.l.b16 %v4021
        %v4441 = vunpack.c.l.b16 %v4022
        %v4442 = vunpack.c.l.b16 %v4023
        %v4443 = vpack.c.b16 %v4436, %v4435
        %v4444 = vpack.c.b16 %v4438, %v4437
        %v4445 = vpack.c.b16 %v4440, %v4439
        %v4446 = vpack.c.b16 %v4442, %v4441
        %v4455 = vunpack.c.l.b16 %v4024
        %v4456 = vunpack.c.l.b16 %v4025
        %v4457 = vunpack.c.l.b16 %v4026
        %v4458 = vunpack.c.l.b16 %v4027
        %v4459 = vunpack.c.l.b16 %v4028
        %v4460 = vunpack.c.l.b16 %v4029
        %v4461 = vunpack.c.l.b16 %v4030
        %v4462 = vunpack.c.l.b16 %v4031
        %v4463 = vpack.c.b16 %v4456, %v4455
        %v4464 = vpack.c.b16 %v4458, %v4457
        %v4465 = vpack.c.b16 %v4460, %v4459
        %v4466 = vpack.c.b16 %v4462, %v4461
        %4467 = vrot.lane.b32.xlu0 %v4463, 32
        %v4468 = vpop.permute.xlu0 %4467
        %4469 = vrot.lane.b32.xlu0 %v4464, 32
        %v4470 = vpop.permute.xlu0 %4469
        %4471 = vrot.lane.b32.xlu0 %v4465, 32
        %v4472 = vpop.permute.xlu0 %4471
        %4473 = vrot.lane.b32.xlu0 %v4466, 32
        %v4474 = vpop.permute.xlu0 %4473
        %v4475 = vunpack.c.l.b16 %v4056
        %v4476 = vunpack.c.l.b16 %v4070
        %v4477 = vunpack.c.l.b16 %v4084
        %v4478 = vunpack.c.l.b16 %v4098
        %v4479 = vunpack.c.l.b16 %v4112
        %v4480 = vunpack.c.l.b16 %v4126
        %v4481 = vunpack.c.l.b16 %v4140
        %v4482 = vunpack.c.l.b16 %v4154
        %v4483 = vpack.c.b16 %v4476, %v4475
        %v4484 = vpack.c.b16 %v4478, %v4477
        %v4485 = vpack.c.b16 %v4480, %v4479
        %v4486 = vpack.c.b16 %v4482, %v4481
        %4487 = vrot.lane.b32.xlu0 %v4483, 64
        %v4488 = vpop.permute.xlu0 %4487
        %4489 = vrot.lane.b32.xlu0 %v4484, 64
        %v4490 = vpop.permute.xlu0 %4489
        %4491 = vrot.lane.b32.xlu0 %v4485, 64
        %v4492 = vpop.permute.xlu0 %4491
        %4493 = vrot.lane.b32.xlu0 %v4486, 64
        %v4494 = vpop.permute.xlu0 %4493
        %v4503 = vunpack.c.l.b16 %v4155
        %v4504 = vunpack.c.l.b16 %v4156
        %v4505 = vunpack.c.l.b16 %v4157
        %v4506 = vunpack.c.l.b16 %v4158
        %v4507 = vunpack.c.l.b16 %v4159
        %v4508 = vunpack.c.l.b16 %v4160
        %v4509 = vunpack.c.l.b16 %v4161
        %v4510 = vunpack.c.l.b16 %v4162
        %v4511 = vpack.c.b16 %v4504, %v4503
        %v4512 = vpack.c.b16 %v4506, %v4505
        %v4513 = vpack.c.b16 %v4508, %v4507
        %v4514 = vpack.c.b16 %v4510, %v4509
        %4515 = vrot.lane.b32.xlu0 %v4511, 96
        %v4516 = vpop.permute.xlu0 %4515
        %4517 = vrot.lane.b32.xlu0 %v4512, 96
        %v4518 = vpop.permute.xlu0 %4517
        %4519 = vrot.lane.b32.xlu0 %v4513, 96
        %v4520 = vpop.permute.xlu0 %4519
        %4521 = vrot.lane.b32.xlu0 %v4514, 96
        %v4522 = vpop.permute.xlu0 %4521
        %v4531 = vunpack.c.l.b16 %v4163
        %v4532 = vunpack.c.l.b16 %v4164
        %v4533 = vunpack.c.l.b16 %v4165
        %v4534 = vunpack.c.l.b16 %v4166
        %v4535 = vunpack.c.l.b16 %v4167
        %v4536 = vunpack.c.l.b16 %v4168
        %v4537 = vunpack.c.l.b16 %v4169
        %v4538 = vunpack.c.l.b16 %v4170
        %v4539 = vpack.c.b16 %v4532, %v4531
        %v4540 = vpack.c.b16 %v4534, %v4533
        %v4541 = vpack.c.b16 %v4536, %v4535
        %v4542 = vpack.c.b16 %v4538, %v4537
        %v4543 = vunpack.c.l.b16 %v4192
        %v4544 = vunpack.c.l.b16 %v4206
        %v4545 = vunpack.c.l.b16 %v4220
        %v4546 = vunpack.c.l.b16 %v4234
        %v4547 = vunpack.c.l.b16 %v4248
        %v4548 = vunpack.c.l.b16 %v4262
        %v4549 = vunpack.c.l.b16 %v4276
        %v4550 = vunpack.c.l.b16 %v4290
        %v4551 = vpack.c.b16 %v4544, %v4543
        %v4552 = vpack.c.b16 %v4546, %v4545
        %v4553 = vpack.c.b16 %v4548, %v4547
        %v4554 = vpack.c.b16 %v4550, %v4549
        %4555 = vrot.lane.b32.xlu0 %v4551, 32
        %v4556 = vpop.permute.xlu0 %4555
        %4557 = vrot.lane.b32.xlu0 %v4552, 32
        %v4558 = vpop.permute.xlu0 %4557
        %4559 = vrot.lane.b32.xlu0 %v4553, 32
        %v4560 = vpop.permute.xlu0 %4559
        %4561 = vrot.lane.b32.xlu0 %v4554, 32
        %v4562 = vpop.permute.xlu0 %4561
        %v4571 = vunpack.c.l.b16 %v4291
        %v4572 = vunpack.c.l.b16 %v4292
        %v4573 = vunpack.c.l.b16 %v4293
        %v4574 = vunpack.c.l.b16 %v4294
        %v4575 = vunpack.c.l.b16 %v4295
        %v4576 = vunpack.c.l.b16 %v4296
        %v4577 = vunpack.c.l.b16 %v4297
        %v4578 = vunpack.c.l.b16 %v4298
        %v4579 = vpack.c.b16 %v4572, %v4571
        %v4580 = vpack.c.b16 %v4574, %v4573
        %v4581 = vpack.c.b16 %v4576, %v4575
        %v4582 = vpack.c.b16 %v4578, %v4577
        %4583 = vrot.lane.b32.xlu0 %v4579, 64
        %v4584 = vpop.permute.xlu0 %4583
        %4585 = vrot.lane.b32.xlu0 %v4580, 64
        %v4586 = vpop.permute.xlu0 %4585
        %4587 = vrot.lane.b32.xlu0 %v4581, 64
        %v4588 = vpop.permute.xlu0 %4587
        %4589 = vrot.lane.b32.xlu0 %v4582, 64
        %v4590 = vpop.permute.xlu0 %4589
        %v4599 = vunpack.c.l.b16 %v4299
        %v4600 = vunpack.c.l.b16 %v4300
        %v4601 = vunpack.c.l.b16 %v4301
        %v4602 = vunpack.c.l.b16 %v4302
        %v4603 = vunpack.c.l.b16 %v4303
        %v4604 = vunpack.c.l.b16 %v4304
        %v4605 = vunpack.c.l.b16 %v4305
        %v4606 = vunpack.c.l.b16 %v4306
        %v4607 = vpack.c.b16 %v4600, %v4599
        %v4608 = vpack.c.b16 %v4602, %v4601
        %v4609 = vpack.c.b16 %v4604, %v4603
        %v4610 = vpack.c.b16 %v4606, %v4605
        %4611 = vrot.lane.b32.xlu0 %v4607, 96
        %v4612 = vpop.permute.xlu0 %4611
        %4613 = vrot.lane.b32.xlu0 %v4608, 96
        %v4614 = vpop.permute.xlu0 %4613
        %4615 = vrot.lane.b32.xlu0 %v4609, 96
        %v4616 = vpop.permute.xlu0 %4615
        %4617 = vrot.lane.b32.xlu0 %v4610, 96
        %v4618 = vpop.permute.xlu0 %4617
        %v4619 = vunpack.c.l.b16 %v4328
        %v4620 = vunpack.c.l.b16 %v4342
        %v4621 = vunpack.c.l.b16 %v4356
        %v4622 = vunpack.c.l.b16 %v4370
        %v4623 = vunpack.c.l.b16 %v4384
        %v4624 = vunpack.c.l.b16 %v4398
        %v4625 = vunpack.c.l.b16 %v4412
        %v4626 = vunpack.c.l.b16 %v4426
        %v4627 = vpack.c.b16 %v4620, %v4619
        %v4628 = vpack.c.b16 %v4622, %v4621
        %v4629 = vpack.c.b16 %v4624, %v4623
        %v4630 = vpack.c.b16 %v4626, %v4625
        %vm4631 = vcmask 261120
        %v4634 = vsel %vm4631, %v4443, %v4468
        %v4637 = vsel %vm4631, %v4444, %v4470
        %v4640 = vsel %vm4631, %v4445, %v4472
        %v4643 = vsel %vm4631, %v4446, %v4474
        %v4645 = vsel %vm429, %v4634, %v4488
        %v4647 = vsel %vm429, %v4637, %v4490
        %v4649 = vsel %vm429, %v4640, %v4492
        %v4651 = vsel %vm429, %v4643, %v4494
        %vm4652 = vcmask 785408
        %v4654 = vsel %vm4652, %v4645, %v4516
        %v4657 = vsel %vm4652, %v4647, %v4518
        %v4660 = vsel %vm4652, %v4649, %v4520
        %v4663 = vsel %vm4652, %v4651, %v4522
        %v4667 = vsel %vm4631, %v4539, %v4556
        %v4670 = vsel %vm4631, %v4540, %v4558
        %v4673 = vsel %vm4631, %v4541, %v4560
        %v4676 = vsel %vm4631, %v4542, %v4562
        %v4678 = vsel %vm429, %v4667, %v4584
        %v4680 = vsel %vm429, %v4670, %v4586
        %v4682 = vsel %vm429, %v4673, %v4588
        %v4684 = vsel %vm429, %v4676, %v4590
        %v4686 = vsel %vm4652, %v4678, %v4612
        %v4689 = vsel %vm4652, %v4680, %v4614
        %v4692 = vsel %vm4652, %v4682, %v4616
        %v4695 = vsel %vm4652, %v4684, %v4618
        %v4697 = vld [vmem:[%s3] sm:$0xf]
        %v4698 = vld [vmem:[%s3 + $0x4] sm:$0xf]
        %v4699 = vld [vmem:[%s3 + $0x8] sm:$0xf]
        %v4700 = vld [vmem:[%s3 + $0xc] sm:$0xf]
        %v4701 = vld [vmem:[%s3 + $0x10] sm:$0xf]
        %v4702 = vld [vmem:[%s3 + $0x14] sm:$0xf]
        %v4703 = vld [vmem:[%s3 + $0x18] sm:$0xf]
        %v4704 = vld [vmem:[%s3 + $0x1c] sm:$0xf]
        %v4705 = vld [vmem:[%s3 + $0x20] sm:$0xf]
        %v4706 = vld [vmem:[%s3 + $0x24] sm:$0xf]
        %v4707 = vld [vmem:[%s3 + $0x28] sm:$0xf]
        %v4708 = vld [vmem:[%s3 + $0x2c] sm:$0xf]
        %v4709 = vld [vmem:[%s3 + $0x30] sm:$0xf]
        %v4710 = vld [vmem:[%s3 + $0x34] sm:$0xf]
        %v4711 = vld [vmem:[%s3 + $0x38] sm:$0xf]
        %v4712 = vld [vmem:[%s3 + $0x3c] sm:$0xf]
        %v4713 = vld [vmem:[%s3 + $0x40] sm:$0xf]
        %v4714 = vld [vmem:[%s3 + $0x44] sm:$0xf]
        %v4715 = vld [vmem:[%s3 + $0x48] sm:$0xf]
        %v4716 = vld [vmem:[%s3 + $0x4c] sm:$0xf]
        %v4717 = vld [vmem:[%s3 + $0x50] sm:$0xf]
        %v4718 = vld [vmem:[%s3 + $0x54] sm:$0xf]
        %v4719 = vld [vmem:[%s3 + $0x58] sm:$0xf]
        %v4720 = vld [vmem:[%s3 + $0x5c] sm:$0xf]
        %v4721 = vld [vmem:[%s3 + $0x60] sm:$0xf]
        %v4722 = vld [vmem:[%s3 + $0x64] sm:$0xf]
        %v4723 = vld [vmem:[%s3 + $0x68] sm:$0xf]
        %v4724 = vld [vmem:[%s3 + $0x6c] sm:$0xf]
        %v4725 = vld [vmem:[%s3 + $0x70] sm:$0xf]
        %v4726 = vld [vmem:[%s3 + $0x74] sm:$0xf]
        %v4727 = vld [vmem:[%s3 + $0x78] sm:$0xf]
        %v4728 = vld [vmem:[%s3 + $0x7c] sm:$0xf]
        %v4729 = vld [vmem:[%s3 + $0x80] sm:$0xf]
        %v4730 = vld [vmem:[%s3 + $0x84] sm:$0xf]
        %v4731 = vld [vmem:[%s3 + $0x88] sm:$0xf]
        %v4732 = vld [vmem:[%s3 + $0x8c] sm:$0xf]
        %v4733 = vld [vmem:[%s4] sm:$0x1]
        %v4735 = vlaneseq
        %v4736 = vshrl.u32 %v4735, 7
        %v4737 = vsub.s32 0, %v4736
        %v4738 = vrot.slane %v4733, %v4737
        %v4776 = vunpack.c.l.b16 %v4697
        %v4777 = vunpack.c.l.b16 %v4698
        %v4778 = vunpack.c.l.b16 %v4699
        %v4779 = vunpack.c.l.b16 %v4700
        %v4780 = vunpack.c.l.b16 %v4701
        %v4781 = vunpack.c.l.b16 %v4702
        %v4782 = vunpack.c.l.b16 %v4703
        %v4783 = vunpack.c.l.b16 %v4704
        %v4784 = vunpack.c.l.b16 %v4705
        %v4785 = vunpack.c.l.b16 %v4706
        %v4786 = vunpack.c.l.b16 %v4707
        %v4787 = vunpack.c.l.b16 %v4708
        %v4788 = vunpack.c.l.b16 %v4709
        %v4789 = vunpack.c.l.b16 %v4710
        %v4790 = vunpack.c.l.b16 %v4711
        %v4791 = vunpack.c.l.b16 %v4712
        %v4792 = vunpack.c.l.b16 %v4713
        %v4793 = vunpack.c.l.b16 %v4714
        %v4794 = vunpack.c.l.b16 %v4715
        %v4795 = vunpack.c.l.b16 %v4716
        %v4796 = vunpack.c.l.b16 %v4717
        %v4797 = vunpack.c.l.b16 %v4718
        %v4798 = vunpack.c.l.b16 %v4719
        %v4799 = vunpack.c.l.b16 %v4720
        %v4800 = vunpack.c.l.b16 %v4721
        %v4801 = vunpack.c.l.b16 %v4722
        %v4802 = vunpack.c.l.b16 %v4723
        %v4803 = vunpack.c.l.b16 %v4724
        %v4804 = vunpack.c.l.b16 %v4725
        %v4805 = vunpack.c.l.b16 %v4726
        %v4806 = vunpack.c.l.b16 %v4727
        %v4807 = vunpack.c.l.b16 %v4728
        %v4808 = vunpack.c.l.b16 %v4729
        %v4809 = vunpack.c.l.b16 %v4730
        %v4810 = vunpack.c.l.b16 %v4731
        %v4811 = vunpack.c.l.b16 %v4732
        %v4812 = vpack.c.b16 %v4777, %v4776
        %v4813 = vpack.c.b16 %v4779, %v4778
        %v4814 = vpack.c.b16 %v4781, %v4780
        %v4815 = vpack.c.b16 %v4783, %v4782
        %v4816 = vpack.c.b16 %v4785, %v4784
        %v4817 = vpack.c.b16 %v4787, %v4786
        %v4818 = vpack.c.b16 %v4789, %v4788
        %v4819 = vpack.c.b16 %v4791, %v4790
        %v4820 = vpack.c.b16 %v4793, %v4792
        %v4821 = vpack.c.b16 %v4795, %v4794
        %v4822 = vpack.c.b16 %v4797, %v4796
        %v4823 = vpack.c.b16 %v4799, %v4798
        %v4824 = vpack.c.b16 %v4801, %v4800
        %v4825 = vpack.c.b16 %v4803, %v4802
        %v4826 = vpack.c.b16 %v4805, %v4804
        %v4827 = vpack.c.b16 %v4807, %v4806
        %v4828 = vpack.c.b16 %v4809, %v4808
        %v4829 = vpack.c.b16 %v4811, %v4810
        %v4849 = vsel %vm4631, %v4627, 0
        %v4852 = vsel %vm4631, %v4628, 0
        %v4855 = vsel %vm4631, %v4629, 0
        %v4858 = vsel %vm4631, %v4630, 0
        %4860 = vmatprep.subr.bf16.mxu0 0
        %4861 = vmatpush1.bf16.msra.mxu0 %v4812
        %4862 = vmatprep.subr.bf16.mxu0 0
        %4863 = vmatpush1.bf16.msra.mxu0 %v4813
        %4864 = vmatprep.subr.bf16.mxu0 0
        %4865 = vmatpush1.bf16.msra.mxu0 %v4814
        %4866 = vmatprep.subr.bf16.mxu0 0
        %4867 = vmatpush1.bf16.msra.mxu0 %v4815
        %4868 = vmatprep.subr.bf16.mxu0 0
        %4869 = vmatpush1.bf16.msra.mxu0 %v4816
        %4870 = vmatprep.subr.bf16.mxu0 0
        %4871 = vmatpush1.bf16.msra.mxu0 %v4817
        %4872 = vmatprep.subr.bf16.mxu0 0
        %4873 = vmatpush1.bf16.msra.mxu0 %v4818
        %4874 = vmatprep.subr.bf16.mxu0 0
        %4875 = vmatpush1.bf16.msra.mxu0 %v4819
        %4876 = vmatprep.subr.bf16.mxu0 0
        %4877 = vmatpush1.bf16.msra.mxu0 %v4820
        %4878 = vmatprep.subr.bf16.mxu0 0
        %4879 = vmatpush1.bf16.msra.mxu0 %v4821
        %4880 = vmatprep.subr.bf16.mxu0 0
        %4881 = vmatpush1.bf16.msra.mxu0 %v4822
        %4882 = vmatprep.subr.bf16.mxu0 0
        %4883 = vmatpush1.bf16.msra.mxu0 %v4823
        %4884 = vmatprep.subr.bf16.mxu0 0
        %4885 = vmatpush1.bf16.msra.mxu0 %v4824
        %4886 = vmatprep.subr.bf16.mxu0 0
        %4887 = vmatpush1.bf16.msra.mxu0 %v4825
        %4888 = vmatprep.subr.bf16.mxu0 0
        %4889 = vmatpush1.bf16.msra.mxu0 %v4826
        %4890 = vmatprep.subr.bf16.mxu0 0
        %4891 = vmatpush1.bf16.msra.mxu0 %v4827
        %4892 = vmatprep.mubr.bf16.mxu0 %v4686
        %4893 = vmatmul.mubr.bf16.gmra.mrb[0].mxu0 %v4654
        %v4894 = vpop.f32.mrb[0].mxu0
        %v4895 = vadd.f32 %v4738, %v4894
        %v4896 = vpop.f32.mrb[0].mxu0
        %v4897 = vpop.f32.mrb[0].mxu0
        %v4898 = vadd.f32 %v4738, %v4897
        %v4899 = vpop.f32.mrb[0].mxu0
        %4900 = vmatprep.mubr.bf16.mxu0 %v4689
        %4901 = vmatmul.mubr.bf16.gmra.mrb[0].mxu0 %v4657
        %v4902 = vpop.f32.mrb[0].mxu0
        %v4903 = vadd.f32 %v4738, %v4902
        %v4904 = vpop.f32.mrb[0].mxu0
        %v4905 = vpop.f32.mrb[0].mxu0
        %v4906 = vadd.f32 %v4738, %v4905
        %v4907 = vpop.f32.mrb[0].mxu0
        %4908 = vmatprep.mubr.bf16.mxu0 %v4692
        %4909 = vmatmul.mubr.bf16.gmra.mrb[0].mxu0 %v4660
        %v4910 = vpop.f32.mrb[0].mxu0
        %v4911 = vadd.f32 %v4738, %v4910
        %v4912 = vpop.f32.mrb[0].mxu0
        %v4913 = vpop.f32.mrb[0].mxu0
        %v4914 = vadd.f32 %v4738, %v4913
        %v4915 = vpop.f32.mrb[0].mxu0
        %4916 = vmatprep.mubr.bf16.mxu0 %v4695
        %4917 = vmatmul.mubr.bf16.gmra.mrb[0].mxu0 %v4663
        %v4918 = vpop.f32.mrb[0].mxu0
        %v4919 = vadd.f32 %v4738, %v4918
        %v4920 = vpop.f32.mrb[0].mxu0
        %v4921 = vpop.f32.mrb[0].mxu0
        %v4922 = vadd.f32 %v4738, %v4921
        %v4923 = vpop.f32.mrb[0].mxu0
        %4924 = vdwg.mxu0
        %4925 = vmatprep.subr.bf16.mxu0 0
        %4926 = vmatpush1.bf16.msra.mxu0 %v4828
        %4927 = vmatprep.subr.bf16.mxu0 0
        %4928 = vmatpush1.bf16.msra.mxu0 %v4829
        %4929 = vmatprep.subr.bf16.mxu0 0
        %4930 = vmatpush1.bf16.msra.mxu0 0
        %4931 = vmatprep.subr.bf16.mxu0 0
        %4932 = vmatpush1.bf16.msra.mxu0 0
        %4933 = vmatprep.subr.bf16.mxu0 0
        %4934 = vmatpush1.bf16.msra.mxu0 0
        %4935 = vmatprep.subr.bf16.mxu0 0
        %4936 = vmatpush1.bf16.msra.mxu0 0
        %4937 = vmatprep.subr.bf16.mxu0 0
        %4938 = vmatpush1.bf16.msra.mxu0 0
        %4939 = vmatprep.subr.bf16.mxu0 0
        %4940 = vmatpush1.bf16.msra.mxu0 0
        %4941 = vmatprep.subr.bf16.mxu0 0
        %4942 = vmatpush1.bf16.msra.mxu0 0
        %4943 = vmatprep.subr.bf16.mxu0 0
        %4944 = vmatpush1.bf16.msra.mxu0 0
        %4945 = vmatprep.subr.bf16.mxu0 0
        %4946 = vmatpush1.bf16.msra.mxu0 0
        %4947 = vmatprep.subr.bf16.mxu0 0
        %4948 = vmatpush1.bf16.msra.mxu0 0
        %4949 = vmatprep.subr.bf16.mxu0 0
        %4950 = vmatpush1.bf16.msra.mxu0 0
        %4951 = vmatprep.subr.bf16.mxu0 0
        %4952 = vmatpush1.bf16.msra.mxu0 0
        %4953 = vmatprep.subr.bf16.mxu0 0
        %4954 = vmatpush1.bf16.msra.mxu0 0
        %4955 = vmatprep.subr.bf16.mxu0 0
        %4956 = vmatpush1.bf16.msra.mxu0 0
        %4957 = vmatprep.mubr.bf16.mxu0 0
        %4958 = vmatmul.mubr.bf16.gmra.mrb[0].mxu0 %v4849
        %v4959 = vpop.f32.mrb[0].mxu0
        %v4960 = vadd.f32 %v4895, %v4959
        %v4961 = vpop.f32.mrb[0].mxu0
        %v4962 = vpop.f32.mrb[0].mxu0
        %v4963 = vadd.f32 %v4898, %v4962
        %v4964 = vpop.f32.mrb[0].mxu0
        %4965 = vmatprep.mubr.bf16.mxu0 0
        %4966 = vmatmul.mubr.bf16.gmra.mrb[0].mxu0 %v4852
        %v4967 = vpop.f32.mrb[0].mxu0
        %v4968 = vadd.f32 %v4903, %v4967
        %v4969 = vpop.f32.mrb[0].mxu0
        %v4970 = vpop.f32.mrb[0].mxu0
        %v4971 = vadd.f32 %v4906, %v4970
        %v4972 = vpop.f32.mrb[0].mxu0
        %4973 = vmatprep.mubr.bf16.mxu0 0
        %4974 = vmatmul.mubr.bf16.gmra.mrb[0].mxu0 %v4855
        %v4975 = vpop.f32.mrb[0].mxu0
        %v4976 = vadd.f32 %v4911, %v4975
        %v4977 = vpop.f32.mrb[0].mxu0
        %v4978 = vpop.f32.mrb[0].mxu0
        %v4979 = vadd.f32 %v4914, %v4978
        %v4980 = vpop.f32.mrb[0].mxu0
        %4981 = vmatprep.mubr.bf16.mxu0 0
        %4982 = vmatmul.mubr.bf16.gmra.mrb[0].mxu0 %v4858
        %v4983 = vpop.f32.mrb[0].mxu0
        %v4984 = vadd.f32 %v4919, %v4983
        %v4985 = vpop.f32.mrb[0].mxu0
        %v4986 = vpop.f32.mrb[0].mxu0
        %v4987 = vadd.f32 %v4922, %v4986
        %v4988 = vpop.f32.mrb[0].mxu0
        %4989 = vdwg.mxu0
        %v4990 = vmax.f32 %v4960, 0.0
        %v4991 = vmax.f32 %v4963, 0.0
        %v4992 = vmax.f32 %v4968, 0.0
        %v4993 = vmax.f32 %v4971, 0.0
        %v4994 = vmax.f32 %v4976, 0.0
        %v4995 = vmax.f32 %v4979, 0.0
        %v4996 = vmax.f32 %v4984, 0.0
        %v4997 = vmax.f32 %v4987, 0.0
        %v4998 = vpack.c.bf16 %v4991, %v4990
        %v4999 = vpack.c.bf16 %v4993, %v4992
        %v5000 = vpack.c.bf16 %v4995, %v4994
        %v5001 = vpack.c.bf16 %v4997, %v4996
        %v5003 = vunpack.c.l.s4 1966171168
        %v5004 = vunpack.c.0.s8 %v5003
        %v5005 = vlaneseq
        %v5006 = vshrl.u32 %v5005, 7
        %v5007 = vsub.s32 %v5004, %v5006
        %v5008 = vrot.slane %v278, %v5007
        %v5009 = vcombine.high %v5008, %v5008
        %v5011 = vunpack.c.l.s4 1966171168
        %v5012 = vunpack.c.0.s8 %v5011
        %v5013 = vlaneseq
        %v5014 = vshrl.u32 %v5013, 7
        %v5015 = vsub.s32 %v5012, %v5014
        %v5016 = vrot.slane %v5008, %v5015
        %v5018 = vunpack.c.l.s4 1966171168
        %v5019 = vunpack.c.0.s8 %v5018
        %v5020 = vlaneseq
        %v5021 = vshrl.u32 %v5020, 7
        %v5022 = vsub.s32 %v5019, %v5021
        %v5023 = vrot.slane %v5009, %v5022
        %v5024 = vcombine.high %v5016, %v5016
        %v5025 = vcombine.high %v5023, %v5023
        %v5027 = vunpack.c.l.s4 1966171168
        %v5028 = vunpack.c.0.s8 %v5027
        %v5029 = vlaneseq
        %v5030 = vshrl.u32 %v5029, 7
        %v5031 = vsub.s32 %v5028, %v5030
        %v5032 = vrot.slane %v279, %v5031
        %v5033 = vcombine.high %v5032, %v5032
        %v5035 = vunpack.c.l.s4 1966171168
        %v5036 = vunpack.c.0.s8 %v5035
        %v5037 = vlaneseq
        %v5038 = vshrl.u32 %v5037, 7
        %v5039 = vsub.s32 %v5036, %v5038
        %v5040 = vrot.slane %v5032, %v5039
        %v5042 = vunpack.c.l.s4 1966171168
        %v5043 = vunpack.c.0.s8 %v5042
        %v5044 = vlaneseq
        %v5045 = vshrl.u32 %v5044, 7
        %v5046 = vsub.s32 %v5043, %v5045
        %v5047 = vrot.slane %v5033, %v5046
        %v5048 = vcombine.high %v5040, %v5040
        %v5049 = vcombine.high %v5047, %v5047
        %v5051 = vunpack.c.l.s4 1966171168
        %v5052 = vunpack.c.0.s8 %v5051
        %v5053 = vlaneseq
        %v5054 = vshrl.u32 %v5053, 7
        %v5055 = vsub.s32 %v5052, %v5054
        %v5056 = vrot.slane %v282, %v5055
        %v5057 = vcombine.high %v5056, %v5056
        %v5059 = vunpack.c.l.s4 1966171168
        %v5060 = vunpack.c.0.s8 %v5059
        %v5061 = vlaneseq
        %v5062 = vshrl.u32 %v5061, 7
        %v5063 = vsub.s32 %v5060, %v5062
        %v5064 = vrot.slane %v5056, %v5063
        %v5066 = vunpack.c.l.s4 1966171168
        %v5067 = vunpack.c.0.s8 %v5066
        %v5068 = vlaneseq
        %v5069 = vshrl.u32 %v5068, 7
        %v5070 = vsub.s32 %v5067, %v5069
        %v5071 = vrot.slane %v5057, %v5070
        %v5072 = vcombine.high %v5064, %v5064
        %v5073 = vcombine.high %v5071, %v5071
        %v5075 = vunpack.c.l.s4 1966171168
        %v5076 = vunpack.c.0.s8 %v5075
        %v5077 = vlaneseq
        %v5078 = vshrl.u32 %v5077, 7
        %v5079 = vsub.s32 %v5076, %v5078
        %v5080 = vrot.slane %v283, %v5079
        %v5081 = vcombine.high %v5080, %v5080
        %v5083 = vunpack.c.l.s4 1966171168
        %v5084 = vunpack.c.0.s8 %v5083
        %v5085 = vlaneseq
        %v5086 = vshrl.u32 %v5085, 7
        %v5087 = vsub.s32 %v5084, %v5086
        %v5088 = vrot.slane %v5080, %v5087
        %v5090 = vunpack.c.l.s4 1966171168
        %v5091 = vunpack.c.0.s8 %v5090
        %v5092 = vlaneseq
        %v5093 = vshrl.u32 %v5092, 7
        %v5094 = vsub.s32 %v5091, %v5093
        %v5095 = vrot.slane %v5081, %v5094
        %v5096 = vcombine.high %v5088, %v5088
        %v5097 = vcombine.high %v5095, %v5095
        %v5099 = vunpack.c.l.s4 1966171168
        %v5100 = vunpack.c.0.s8 %v5099
        %v5101 = vlaneseq
        %v5102 = vshrl.u32 %v5101, 7
        %v5103 = vsub.s32 %v5100, %v5102
        %v5104 = vrot.slane %v286, %v5103
        %v5105 = vcombine.high %v5104, %v5104
        %v5107 = vunpack.c.l.s4 1966171168
        %v5108 = vunpack.c.0.s8 %v5107
        %v5109 = vlaneseq
        %v5110 = vshrl.u32 %v5109, 7
        %v5111 = vsub.s32 %v5108, %v5110
        %v5112 = vrot.slane %v5104, %v5111
        %v5114 = vunpack.c.l.s4 1966171168
        %v5115 = vunpack.c.0.s8 %v5114
        %v5116 = vlaneseq
        %v5117 = vshrl.u32 %v5116, 7
        %v5118 = vsub.s32 %v5115, %v5117
        %v5119 = vrot.slane %v5105, %v5118
        %v5120 = vcombine.high %v5112, %v5112
        %v5121 = vcombine.high %v5119, %v5119
        %v5123 = vunpack.c.l.s4 1966171168
        %v5124 = vunpack.c.0.s8 %v5123
        %v5125 = vlaneseq
        %v5126 = vshrl.u32 %v5125, 7
        %v5127 = vsub.s32 %v5124, %v5126
        %v5128 = vrot.slane %v287, %v5127
        %v5129 = vcombine.high %v5128, %v5128
        %v5131 = vunpack.c.l.s4 1966171168
        %v5132 = vunpack.c.0.s8 %v5131
        %v5133 = vlaneseq
        %v5134 = vshrl.u32 %v5133, 7
        %v5135 = vsub.s32 %v5132, %v5134
        %v5136 = vrot.slane %v5128, %v5135
        %v5138 = vunpack.c.l.s4 1966171168
        %v5139 = vunpack.c.0.s8 %v5138
        %v5140 = vlaneseq
        %v5141 = vshrl.u32 %v5140, 7
        %v5142 = vsub.s32 %v5139, %v5141
        %v5143 = vrot.slane %v5129, %v5142
        %v5144 = vcombine.high %v5136, %v5136
        %v5145 = vcombine.high %v5143, %v5143
        %v5147 = vunpack.c.l.s4 1966171168
        %v5148 = vunpack.c.0.s8 %v5147
        %v5149 = vlaneseq
        %v5150 = vshrl.u32 %v5149, 7
        %v5151 = vsub.s32 %v5148, %v5150
        %v5152 = vrot.slane %v290, %v5151
        %v5153 = vcombine.high %v5152, %v5152
        %v5155 = vunpack.c.l.s4 1966171168
        %v5156 = vunpack.c.0.s8 %v5155
        %v5157 = vlaneseq
        %v5158 = vshrl.u32 %v5157, 7
        %v5159 = vsub.s32 %v5156, %v5158
        %v5160 = vrot.slane %v5152, %v5159
        %v5162 = vunpack.c.l.s4 1966171168
        %v5163 = vunpack.c.0.s8 %v5162
        %v5164 = vlaneseq
        %v5165 = vshrl.u32 %v5164, 7
        %v5166 = vsub.s32 %v5163, %v5165
        %v5167 = vrot.slane %v5153, %v5166
        %v5168 = vcombine.high %v5160, %v5160
        %v5169 = vcombine.high %v5167, %v5167
        %v5171 = vunpack.c.l.s4 1966171168
        %v5172 = vunpack.c.0.s8 %v5171
        %v5173 = vlaneseq
        %v5174 = vshrl.u32 %v5173, 7
        %v5175 = vsub.s32 %v5172, %v5174
        %v5176 = vrot.slane %v291, %v5175
        %v5177 = vcombine.high %v5176, %v5176
        %v5179 = vunpack.c.l.s4 1966171168
        %v5180 = vunpack.c.0.s8 %v5179
        %v5181 = vlaneseq
        %v5182 = vshrl.u32 %v5181, 7
        %v5183 = vsub.s32 %v5180, %v5182
        %v5184 = vrot.slane %v5176, %v5183
        %v5186 = vunpack.c.l.s4 1966171168
        %v5187 = vunpack.c.0.s8 %v5186
        %v5188 = vlaneseq
        %v5189 = vshrl.u32 %v5188, 7
        %v5190 = vsub.s32 %v5187, %v5189
        %v5191 = vrot.slane %v5177, %v5190
        %v5192 = vcombine.high %v5184, %v5184
        %v5193 = vcombine.high %v5191, %v5191
        %v5195 = vunpack.c.l.s4 1966171168
        %v5196 = vunpack.c.0.s8 %v5195
        %v5197 = vlaneseq
        %v5198 = vshrl.u32 %v5197, 7
        %v5199 = vsub.s32 %v5196, %v5198
        %v5200 = vrot.slane %v294, %v5199
        %v5201 = vcombine.high %v5200, %v5200
        %v5203 = vunpack.c.l.s4 1966171168
        %v5204 = vunpack.c.0.s8 %v5203
        %v5205 = vlaneseq
        %v5206 = vshrl.u32 %v5205, 7
        %v5207 = vsub.s32 %v5204, %v5206
        %v5208 = vrot.slane %v5200, %v5207
        %v5210 = vunpack.c.l.s4 1966171168
        %v5211 = vunpack.c.0.s8 %v5210
        %v5212 = vlaneseq
        %v5213 = vshrl.u32 %v5212, 7
        %v5214 = vsub.s32 %v5211, %v5213
        %v5215 = vrot.slane %v5201, %v5214
        %v5216 = vcombine.high %v5208, %v5208
        %v5217 = vcombine.high %v5215, %v5215
        %v5219 = vunpack.c.l.s4 1966171168
        %v5220 = vunpack.c.0.s8 %v5219
        %v5221 = vlaneseq
        %v5222 = vshrl.u32 %v5221, 7
        %v5223 = vsub.s32 %v5220, %v5222
        %v5224 = vrot.slane %v295, %v5223
        %v5225 = vcombine.high %v5224, %v5224
        %v5227 = vunpack.c.l.s4 1966171168
        %v5228 = vunpack.c.0.s8 %v5227
        %v5229 = vlaneseq
        %v5230 = vshrl.u32 %v5229, 7
        %v5231 = vsub.s32 %v5228, %v5230
        %v5232 = vrot.slane %v5224, %v5231
        %v5234 = vunpack.c.l.s4 1966171168
        %v5235 = vunpack.c.0.s8 %v5234
        %v5236 = vlaneseq
        %v5237 = vshrl.u32 %v5236, 7
        %v5238 = vsub.s32 %v5235, %v5237
        %v5239 = vrot.slane %v5225, %v5238
        %v5240 = vcombine.high %v5232, %v5232
        %v5241 = vcombine.high %v5239, %v5239
        %v5243 = vunpack.c.l.s4 1966171168
        %v5244 = vunpack.c.0.s8 %v5243
        %v5245 = vlaneseq
        %v5246 = vshrl.u32 %v5245, 7
        %v5247 = vsub.s32 %v5244, %v5246
        %v5248 = vrot.slane %v298, %v5247
        %v5249 = vcombine.high %v5248, %v5248
        %v5251 = vunpack.c.l.s4 1966171168
        %v5252 = vunpack.c.0.s8 %v5251
        %v5253 = vlaneseq
        %v5254 = vshrl.u32 %v5253, 7
        %v5255 = vsub.s32 %v5252, %v5254
        %v5256 = vrot.slane %v5248, %v5255
        %v5258 = vunpack.c.l.s4 1966171168
        %v5259 = vunpack.c.0.s8 %v5258
        %v5260 = vlaneseq
        %v5261 = vshrl.u32 %v5260, 7
        %v5262 = vsub.s32 %v5259, %v5261
        %v5263 = vrot.slane %v5249, %v5262
        %v5264 = vcombine.high %v5256, %v5256
        %v5265 = vcombine.high %v5263, %v5263
        %v5267 = vunpack.c.l.s4 1966171168
        %v5268 = vunpack.c.0.s8 %v5267
        %v5269 = vlaneseq
        %v5270 = vshrl.u32 %v5269, 7
        %v5271 = vsub.s32 %v5268, %v5270
        %v5272 = vrot.slane %v299, %v5271
        %v5273 = vcombine.high %v5272, %v5272
        %v5275 = vunpack.c.l.s4 1966171168
        %v5276 = vunpack.c.0.s8 %v5275
        %v5277 = vlaneseq
        %v5278 = vshrl.u32 %v5277, 7
        %v5279 = vsub.s32 %v5276, %v5278
        %v5280 = vrot.slane %v5272, %v5279
        %v5282 = vunpack.c.l.s4 1966171168
        %v5283 = vunpack.c.0.s8 %v5282
        %v5284 = vlaneseq
        %v5285 = vshrl.u32 %v5284, 7
        %v5286 = vsub.s32 %v5283, %v5285
        %v5287 = vrot.slane %v5273, %v5286
        %v5288 = vcombine.high %v5280, %v5280
        %v5289 = vcombine.high %v5287, %v5287
        %v5291 = vunpack.c.l.s4 1966171168
        %v5292 = vunpack.c.0.s8 %v5291
        %v5293 = vlaneseq
        %v5294 = vshrl.u32 %v5293, 7
        %v5295 = vsub.s32 %v5292, %v5294
        %v5296 = vrot.slane %v302, %v5295
        %v5297 = vcombine.high %v5296, %v5296
        %v5299 = vunpack.c.l.s4 1966171168
        %v5300 = vunpack.c.0.s8 %v5299
        %v5301 = vlaneseq
        %v5302 = vshrl.u32 %v5301, 7
        %v5303 = vsub.s32 %v5300, %v5302
        %v5304 = vrot.slane %v5296, %v5303
        %v5306 = vunpack.c.l.s4 1966171168
        %v5307 = vunpack.c.0.s8 %v5306
        %v5308 = vlaneseq
        %v5309 = vshrl.u32 %v5308, 7
        %v5310 = vsub.s32 %v5307, %v5309
        %v5311 = vrot.slane %v5297, %v5310
        %v5312 = vcombine.high %v5304, %v5304
        %v5313 = vcombine.high %v5311, %v5311
        %v5315 = vunpack.c.l.s4 1966171168
        %v5316 = vunpack.c.0.s8 %v5315
        %v5317 = vlaneseq
        %v5318 = vshrl.u32 %v5317, 7
        %v5319 = vsub.s32 %v5316, %v5318
        %v5320 = vrot.slane %v303, %v5319
        %v5321 = vcombine.high %v5320, %v5320
        %v5323 = vunpack.c.l.s4 1966171168
        %v5324 = vunpack.c.0.s8 %v5323
        %v5325 = vlaneseq
        %v5326 = vshrl.u32 %v5325, 7
        %v5327 = vsub.s32 %v5324, %v5326
        %v5328 = vrot.slane %v5320, %v5327
        %v5330 = vunpack.c.l.s4 1966171168
        %v5331 = vunpack.c.0.s8 %v5330
        %v5332 = vlaneseq
        %v5333 = vshrl.u32 %v5332, 7
        %v5334 = vsub.s32 %v5331, %v5333
        %v5335 = vrot.slane %v5321, %v5334
        %v5336 = vcombine.high %v5328, %v5328
        %v5337 = vcombine.high %v5335, %v5335
        %v5339 = vunpack.c.l.s4 1966171168
        %v5340 = vunpack.c.0.s8 %v5339
        %v5341 = vlaneseq
        %v5342 = vshrl.u32 %v5341, 7
        %v5343 = vsub.s32 %v5340, %v5342
        %v5344 = vrot.slane %v306, %v5343
        %v5345 = vcombine.high %v5344, %v5344
        %v5347 = vunpack.c.l.s4 1966171168
        %v5348 = vunpack.c.0.s8 %v5347
        %v5349 = vlaneseq
        %v5350 = vshrl.u32 %v5349, 7
        %v5351 = vsub.s32 %v5348, %v5350
        %v5352 = vrot.slane %v5344, %v5351
        %v5354 = vunpack.c.l.s4 1966171168
        %v5355 = vunpack.c.0.s8 %v5354
        %v5356 = vlaneseq
        %v5357 = vshrl.u32 %v5356, 7
        %v5358 = vsub.s32 %v5355, %v5357
        %v5359 = vrot.slane %v5345, %v5358
        %v5360 = vcombine.high %v5352, %v5352
        %v5361 = vcombine.high %v5359, %v5359
        %v5363 = vunpack.c.l.s4 1966171168
        %v5364 = vunpack.c.0.s8 %v5363
        %v5365 = vlaneseq
        %v5366 = vshrl.u32 %v5365, 7
        %v5367 = vsub.s32 %v5364, %v5366
        %v5368 = vrot.slane %v307, %v5367
        %v5369 = vcombine.high %v5368, %v5368
        %v5371 = vunpack.c.l.s4 1966171168
        %v5372 = vunpack.c.0.s8 %v5371
        %v5373 = vlaneseq
        %v5374 = vshrl.u32 %v5373, 7
        %v5375 = vsub.s32 %v5372, %v5374
        %v5376 = vrot.slane %v5368, %v5375
        %v5378 = vunpack.c.l.s4 1966171168
        %v5379 = vunpack.c.0.s8 %v5378
        %v5380 = vlaneseq
        %v5381 = vshrl.u32 %v5380, 7
        %v5382 = vsub.s32 %v5379, %v5381
        %v5383 = vrot.slane %v5369, %v5382
        %v5384 = vcombine.high %v5376, %v5376
        %v5385 = vcombine.high %v5383, %v5383
        %v5387 = vunpack.c.l.s4 1966171168
        %v5388 = vunpack.c.0.s8 %v5387
        %v5389 = vlaneseq
        %v5390 = vshrl.u32 %v5389, 7
        %v5391 = vsub.s32 %v5388, %v5390
        %v5392 = vrot.slane %v5016, %v5391
        %v5394 = vunpack.c.l.s4 1966171168
        %v5395 = vunpack.c.0.s8 %v5394
        %v5396 = vlaneseq
        %v5397 = vshrl.u32 %v5396, 7
        %v5398 = vsub.s32 %v5395, %v5397
        %v5399 = vrot.slane %v5392, %v5398
        %v5401 = vunpack.c.l.s4 1966171168
        %v5402 = vunpack.c.0.s8 %v5401
        %v5403 = vlaneseq
        %v5404 = vshrl.u32 %v5403, 7
        %v5405 = vsub.s32 %v5402, %v5404
        %v5406 = vrot.slane %v5023, %v5405
        %v5408 = vunpack.c.l.s4 1966171168
        %v5409 = vunpack.c.0.s8 %v5408
        %v5410 = vlaneseq
        %v5411 = vshrl.u32 %v5410, 7
        %v5412 = vsub.s32 %v5409, %v5411
        %v5413 = vrot.slane %v5406, %v5412
        %v5415 = vunpack.c.l.s4 1966171168
        %v5416 = vunpack.c.0.s8 %v5415
        %v5417 = vlaneseq
        %v5418 = vshrl.u32 %v5417, 7
        %v5419 = vsub.s32 %v5416, %v5418
        %v5420 = vrot.slane %v5024, %v5419
        %v5422 = vunpack.c.l.s4 1966171168
        %v5423 = vunpack.c.0.s8 %v5422
        %v5424 = vlaneseq
        %v5425 = vshrl.u32 %v5424, 7
        %v5426 = vsub.s32 %v5423, %v5425
        %v5427 = vrot.slane %v5420, %v5426
        %v5429 = vunpack.c.l.s4 1966171168
        %v5430 = vunpack.c.0.s8 %v5429
        %v5431 = vlaneseq
        %v5432 = vshrl.u32 %v5431, 7
        %v5433 = vsub.s32 %v5430, %v5432
        %v5434 = vrot.slane %v5025, %v5433
        %v5436 = vunpack.c.l.s4 1966171168
        %v5437 = vunpack.c.0.s8 %v5436
        %v5438 = vlaneseq
        %v5439 = vshrl.u32 %v5438, 7
        %v5440 = vsub.s32 %v5437, %v5439
        %v5441 = vrot.slane %v5434, %v5440
        %v5443 = vunpack.c.l.s4 1966171168
        %v5444 = vunpack.c.0.s8 %v5443
        %v5445 = vlaneseq
        %v5446 = vshrl.u32 %v5445, 7
        %v5447 = vsub.s32 %v5444, %v5446
        %v5448 = vrot.slane %v5040, %v5447
        %v5450 = vunpack.c.l.s4 1966171168
        %v5451 = vunpack.c.0.s8 %v5450
        %v5452 = vlaneseq
        %v5453 = vshrl.u32 %v5452, 7
        %v5454 = vsub.s32 %v5451, %v5453
        %v5455 = vrot.slane %v5448, %v5454
        %v5457 = vunpack.c.l.s4 1966171168
        %v5458 = vunpack.c.0.s8 %v5457
        %v5459 = vlaneseq
        %v5460 = vshrl.u32 %v5459, 7
        %v5461 = vsub.s32 %v5458, %v5460
        %v5462 = vrot.slane %v5047, %v5461
        %v5464 = vunpack.c.l.s4 1966171168
        %v5465 = vunpack.c.0.s8 %v5464
        %v5466 = vlaneseq
        %v5467 = vshrl.u32 %v5466, 7
        %v5468 = vsub.s32 %v5465, %v5467
        %v5469 = vrot.slane %v5462, %v5468
        %v5471 = vunpack.c.l.s4 1966171168
        %v5472 = vunpack.c.0.s8 %v5471
        %v5473 = vlaneseq
        %v5474 = vshrl.u32 %v5473, 7
        %v5475 = vsub.s32 %v5472, %v5474
        %v5476 = vrot.slane %v5048, %v5475
        %v5478 = vunpack.c.l.s4 1966171168
        %v5479 = vunpack.c.0.s8 %v5478
        %v5480 = vlaneseq
        %v5481 = vshrl.u32 %v5480, 7
        %v5482 = vsub.s32 %v5479, %v5481
        %v5483 = vrot.slane %v5476, %v5482
        %v5485 = vunpack.c.l.s4 1966171168
        %v5486 = vunpack.c.0.s8 %v5485
        %v5487 = vlaneseq
        %v5488 = vshrl.u32 %v5487, 7
        %v5489 = vsub.s32 %v5486, %v5488
        %v5490 = vrot.slane %v5049, %v5489
        %v5492 = vunpack.c.l.s4 1966171168
        %v5493 = vunpack.c.0.s8 %v5492
        %v5494 = vlaneseq
        %v5495 = vshrl.u32 %v5494, 7
        %v5496 = vsub.s32 %v5493, %v5495
        %v5497 = vrot.slane %v5490, %v5496
        %v5499 = vunpack.c.l.s4 1966171168
        %v5500 = vunpack.c.0.s8 %v5499
        %v5501 = vlaneseq
        %v5502 = vshrl.u32 %v5501, 7
        %v5503 = vsub.s32 %v5500, %v5502
        %v5504 = vrot.slane %v5064, %v5503
        %v5506 = vunpack.c.l.s4 1966171168
        %v5507 = vunpack.c.0.s8 %v5506
        %v5508 = vlaneseq
        %v5509 = vshrl.u32 %v5508, 7
        %v5510 = vsub.s32 %v5507, %v5509
        %v5511 = vrot.slane %v5504, %v5510
        %v5513 = vunpack.c.l.s4 1966171168
        %v5514 = vunpack.c.0.s8 %v5513
        %v5515 = vlaneseq
        %v5516 = vshrl.u32 %v5515, 7
        %v5517 = vsub.s32 %v5514, %v5516
        %v5518 = vrot.slane %v5071, %v5517
        %v5520 = vunpack.c.l.s4 1966171168
        %v5521 = vunpack.c.0.s8 %v5520
        %v5522 = vlaneseq
        %v5523 = vshrl.u32 %v5522, 7
        %v5524 = vsub.s32 %v5521, %v5523
        %v5525 = vrot.slane %v5518, %v5524
        %v5527 = vunpack.c.l.s4 1966171168
        %v5528 = vunpack.c.0.s8 %v5527
        %v5529 = vlaneseq
        %v5530 = vshrl.u32 %v5529, 7
        %v5531 = vsub.s32 %v5528, %v5530
        %v5532 = vrot.slane %v5072, %v5531
        %v5534 = vunpack.c.l.s4 1966171168
        %v5535 = vunpack.c.0.s8 %v5534
        %v5536 = vlaneseq
        %v5537 = vshrl.u32 %v5536, 7
        %v5538 = vsub.s32 %v5535, %v5537
        %v5539 = vrot.slane %v5532, %v5538
        %v5541 = vunpack.c.l.s4 1966171168
        %v5542 = vunpack.c.0.s8 %v5541
        %v5543 = vlaneseq
        %v5544 = vshrl.u32 %v5543, 7
        %v5545 = vsub.s32 %v5542, %v5544
        %v5546 = vrot.slane %v5073, %v5545
        %v5548 = vunpack.c.l.s4 1966171168
        %v5549 = vunpack.c.0.s8 %v5548
        %v5550 = vlaneseq
        %v5551 = vshrl.u32 %v5550, 7
        %v5552 = vsub.s32 %v5549, %v5551
        %v5553 = vrot.slane %v5546, %v5552
        %v5555 = vunpack.c.l.s4 1966171168
        %v5556 = vunpack.c.0.s8 %v5555
        %v5557 = vlaneseq
        %v5558 = vshrl.u32 %v5557, 7
        %v5559 = vsub.s32 %v5556, %v5558
        %v5560 = vrot.slane %v5088, %v5559
        %v5562 = vunpack.c.l.s4 1966171168
        %v5563 = vunpack.c.0.s8 %v5562
        %v5564 = vlaneseq
        %v5565 = vshrl.u32 %v5564, 7
        %v5566 = vsub.s32 %v5563, %v5565
        %v5567 = vrot.slane %v5560, %v5566
        %v5569 = vunpack.c.l.s4 1966171168
        %v5570 = vunpack.c.0.s8 %v5569
        %v5571 = vlaneseq
        %v5572 = vshrl.u32 %v5571, 7
        %v5573 = vsub.s32 %v5570, %v5572
        %v5574 = vrot.slane %v5095, %v5573
        %v5576 = vunpack.c.l.s4 1966171168
        %v5577 = vunpack.c.0.s8 %v5576
        %v5578 = vlaneseq
        %v5579 = vshrl.u32 %v5578, 7
        %v5580 = vsub.s32 %v5577, %v5579
        %v5581 = vrot.slane %v5574, %v5580
        %v5583 = vunpack.c.l.s4 1966171168
        %v5584 = vunpack.c.0.s8 %v5583
        %v5585 = vlaneseq
        %v5586 = vshrl.u32 %v5585, 7
        %v5587 = vsub.s32 %v5584, %v5586
        %v5588 = vrot.slane %v5096, %v5587
        %v5590 = vunpack.c.l.s4 1966171168
        %v5591 = vunpack.c.0.s8 %v5590
        %v5592 = vlaneseq
        %v5593 = vshrl.u32 %v5592, 7
        %v5594 = vsub.s32 %v5591, %v5593
        %v5595 = vrot.slane %v5588, %v5594
        %v5597 = vunpack.c.l.s4 1966171168
        %v5598 = vunpack.c.0.s8 %v5597
        %v5599 = vlaneseq
        %v5600 = vshrl.u32 %v5599, 7
        %v5601 = vsub.s32 %v5598, %v5600
        %v5602 = vrot.slane %v5097, %v5601
        %v5604 = vunpack.c.l.s4 1966171168
        %v5605 = vunpack.c.0.s8 %v5604
        %v5606 = vlaneseq
        %v5607 = vshrl.u32 %v5606, 7
        %v5608 = vsub.s32 %v5605, %v5607
        %v5609 = vrot.slane %v5602, %v5608
        %v5611 = vunpack.c.l.s4 1966171168
        %v5612 = vunpack.c.0.s8 %v5611
        %v5613 = vlaneseq
        %v5614 = vshrl.u32 %v5613, 7
        %v5615 = vsub.s32 %v5612, %v5614
        %v5616 = vrot.slane %v5112, %v5615
        %v5618 = vunpack.c.l.s4 1966171168
        %v5619 = vunpack.c.0.s8 %v5618
        %v5620 = vlaneseq
        %v5621 = vshrl.u32 %v5620, 7
        %v5622 = vsub.s32 %v5619, %v5621
        %v5623 = vrot.slane %v5616, %v5622
        %v5625 = vunpack.c.l.s4 1966171168
        %v5626 = vunpack.c.0.s8 %v5625
        %v5627 = vlaneseq
        %v5628 = vshrl.u32 %v5627, 7
        %v5629 = vsub.s32 %v5626, %v5628
        %v5630 = vrot.slane %v5119, %v5629
        %v5632 = vunpack.c.l.s4 1966171168
        %v5633 = vunpack.c.0.s8 %v5632
        %v5634 = vlaneseq
        %v5635 = vshrl.u32 %v5634, 7
        %v5636 = vsub.s32 %v5633, %v5635
        %v5637 = vrot.slane %v5630, %v5636
        %v5639 = vunpack.c.l.s4 1966171168
        %v5640 = vunpack.c.0.s8 %v5639
        %v5641 = vlaneseq
        %v5642 = vshrl.u32 %v5641, 7
        %v5643 = vsub.s32 %v5640, %v5642
        %v5644 = vrot.slane %v5120, %v5643
        %v5646 = vunpack.c.l.s4 1966171168
        %v5647 = vunpack.c.0.s8 %v5646
        %v5648 = vlaneseq
        %v5649 = vshrl.u32 %v5648, 7
        %v5650 = vsub.s32 %v5647, %v5649
        %v5651 = vrot.slane %v5644, %v5650
        %v5653 = vunpack.c.l.s4 1966171168
        %v5654 = vunpack.c.0.s8 %v5653
        %v5655 = vlaneseq
        %v5656 = vshrl.u32 %v5655, 7
        %v5657 = vsub.s32 %v5654, %v5656
        %v5658 = vrot.slane %v5121, %v5657
        %v5660 = vunpack.c.l.s4 1966171168
        %v5661 = vunpack.c.0.s8 %v5660
        %v5662 = vlaneseq
        %v5663 = vshrl.u32 %v5662, 7
        %v5664 = vsub.s32 %v5661, %v5663
        %v5665 = vrot.slane %v5658, %v5664
        %v5667 = vunpack.c.l.s4 1966171168
        %v5668 = vunpack.c.0.s8 %v5667
        %v5669 = vlaneseq
        %v5670 = vshrl.u32 %v5669, 7
        %v5671 = vsub.s32 %v5668, %v5670
        %v5672 = vrot.slane %v5136, %v5671
        %v5674 = vunpack.c.l.s4 1966171168
        %v5675 = vunpack.c.0.s8 %v5674
        %v5676 = vlaneseq
        %v5677 = vshrl.u32 %v5676, 7
        %v5678 = vsub.s32 %v5675, %v5677
        %v5679 = vrot.slane %v5672, %v5678
        %v5681 = vunpack.c.l.s4 1966171168
        %v5682 = vunpack.c.0.s8 %v5681
        %v5683 = vlaneseq
        %v5684 = vshrl.u32 %v5683, 7
        %v5685 = vsub.s32 %v5682, %v5684
        %v5686 = vrot.slane %v5143, %v5685
        %v5688 = vunpack.c.l.s4 1966171168
        %v5689 = vunpack.c.0.s8 %v5688
        %v5690 = vlaneseq
        %v5691 = vshrl.u32 %v5690, 7
        %v5692 = vsub.s32 %v5689, %v5691
        %v5693 = vrot.slane %v5686, %v5692
        %v5695 = vunpack.c.l.s4 1966171168
        %v5696 = vunpack.c.0.s8 %v5695
        %v5697 = vlaneseq
        %v5698 = vshrl.u32 %v5697, 7
        %v5699 = vsub.s32 %v5696, %v5698
        %v5700 = vrot.slane %v5144, %v5699
        %v5702 = vunpack.c.l.s4 1966171168
        %v5703 = vunpack.c.0.s8 %v5702
        %v5704 = vlaneseq
        %v5705 = vshrl.u32 %v5704, 7
        %v5706 = vsub.s32 %v5703, %v5705
        %v5707 = vrot.slane %v5700, %v5706
        %v5709 = vunpack.c.l.s4 1966171168
        %v5710 = vunpack.c.0.s8 %v5709
        %v5711 = vlaneseq
        %v5712 = vshrl.u32 %v5711, 7
        %v5713 = vsub.s32 %v5710, %v5712
        %v5714 = vrot.slane %v5145, %v5713
        %v5716 = vunpack.c.l.s4 1966171168
        %v5717 = vunpack.c.0.s8 %v5716
        %v5718 = vlaneseq
        %v5719 = vshrl.u32 %v5718, 7
        %v5720 = vsub.s32 %v5717, %v5719
        %v5721 = vrot.slane %v5714, %v5720
        %v5723 = vunpack.c.l.s4 1966171168
        %v5724 = vunpack.c.0.s8 %v5723
        %v5725 = vlaneseq
        %v5726 = vshrl.u32 %v5725, 7
        %v5727 = vsub.s32 %v5724, %v5726
        %v5728 = vrot.slane %v5160, %v5727
        %v5730 = vunpack.c.l.s4 1966171168
        %v5731 = vunpack.c.0.s8 %v5730
        %v5732 = vlaneseq
        %v5733 = vshrl.u32 %v5732, 7
        %v5734 = vsub.s32 %v5731, %v5733
        %v5735 = vrot.slane %v5728, %v5734
        %v5737 = vunpack.c.l.s4 1966171168
        %v5738 = vunpack.c.0.s8 %v5737
        %v5739 = vlaneseq
        %v5740 = vshrl.u32 %v5739, 7
        %v5741 = vsub.s32 %v5738, %v5740
        %v5742 = vrot.slane %v5167, %v5741
        %v5744 = vunpack.c.l.s4 1966171168
        %v5745 = vunpack.c.0.s8 %v5744
        %v5746 = vlaneseq
        %v5747 = vshrl.u32 %v5746, 7
        %v5748 = vsub.s32 %v5745, %v5747
        %v5749 = vrot.slane %v5742, %v5748
        %v5751 = vunpack.c.l.s4 1966171168
        %v5752 = vunpack.c.0.s8 %v5751
        %v5753 = vlaneseq
        %v5754 = vshrl.u32 %v5753, 7
        %v5755 = vsub.s32 %v5752, %v5754
        %v5756 = vrot.slane %v5168, %v5755
        %v5758 = vunpack.c.l.s4 1966171168
        %v5759 = vunpack.c.0.s8 %v5758
        %v5760 = vlaneseq
        %v5761 = vshrl.u32 %v5760, 7
        %v5762 = vsub.s32 %v5759, %v5761
        %v5763 = vrot.slane %v5756, %v5762
        %v5765 = vunpack.c.l.s4 1966171168
        %v5766 = vunpack.c.0.s8 %v5765
        %v5767 = vlaneseq
        %v5768 = vshrl.u32 %v5767, 7
        %v5769 = vsub.s32 %v5766, %v5768
        %v5770 = vrot.slane %v5169, %v5769
        %v5772 = vunpack.c.l.s4 1966171168
        %v5773 = vunpack.c.0.s8 %v5772
        %v5774 = vlaneseq
        %v5775 = vshrl.u32 %v5774, 7
        %v5776 = vsub.s32 %v5773, %v5775
        %v5777 = vrot.slane %v5770, %v5776
        %v5779 = vunpack.c.l.s4 1966171168
        %v5780 = vunpack.c.0.s8 %v5779
        %v5781 = vlaneseq
        %v5782 = vshrl.u32 %v5781, 7
        %v5783 = vsub.s32 %v5780, %v5782
        %v5784 = vrot.slane %v5184, %v5783
        %v5786 = vunpack.c.l.s4 1966171168
        %v5787 = vunpack.c.0.s8 %v5786
        %v5788 = vlaneseq
        %v5789 = vshrl.u32 %v5788, 7
        %v5790 = vsub.s32 %v5787, %v5789
        %v5791 = vrot.slane %v5784, %v5790
        %v5793 = vunpack.c.l.s4 1966171168
        %v5794 = vunpack.c.0.s8 %v5793
        %v5795 = vlaneseq
        %v5796 = vshrl.u32 %v5795, 7
        %v5797 = vsub.s32 %v5794, %v5796
        %v5798 = vrot.slane %v5191, %v5797
        %v5800 = vunpack.c.l.s4 1966171168
        %v5801 = vunpack.c.0.s8 %v5800
        %v5802 = vlaneseq
        %v5803 = vshrl.u32 %v5802, 7
        %v5804 = vsub.s32 %v5801, %v5803
        %v5805 = vrot.slane %v5798, %v5804
        %v5807 = vunpack.c.l.s4 1966171168
        %v5808 = vunpack.c.0.s8 %v5807
        %v5809 = vlaneseq
        %v5810 = vshrl.u32 %v5809, 7
        %v5811 = vsub.s32 %v5808, %v5810
        %v5812 = vrot.slane %v5192, %v5811
        %v5814 = vunpack.c.l.s4 1966171168
        %v5815 = vunpack.c.0.s8 %v5814
        %v5816 = vlaneseq
        %v5817 = vshrl.u32 %v5816, 7
        %v5818 = vsub.s32 %v5815, %v5817
        %v5819 = vrot.slane %v5812, %v5818
        %v5821 = vunpack.c.l.s4 1966171168
        %v5822 = vunpack.c.0.s8 %v5821
        %v5823 = vlaneseq
        %v5824 = vshrl.u32 %v5823, 7
        %v5825 = vsub.s32 %v5822, %v5824
        %v5826 = vrot.slane %v5193, %v5825
        %v5828 = vunpack.c.l.s4 1966171168
        %v5829 = vunpack.c.0.s8 %v5828
        %v5830 = vlaneseq
        %v5831 = vshrl.u32 %v5830, 7
        %v5832 = vsub.s32 %v5829, %v5831
        %v5833 = vrot.slane %v5826, %v5832
        %v5835 = vunpack.c.l.s4 1966171168
        %v5836 = vunpack.c.0.s8 %v5835
        %v5837 = vlaneseq
        %v5838 = vshrl.u32 %v5837, 7
        %v5839 = vsub.s32 %v5836, %v5838
        %v5840 = vrot.slane %v5208, %v5839
        %v5842 = vunpack.c.l.s4 1966171168
        %v5843 = vunpack.c.0.s8 %v5842
        %v5844 = vlaneseq
        %v5845 = vshrl.u32 %v5844, 7
        %v5846 = vsub.s32 %v5843, %v5845
        %v5847 = vrot.slane %v5840, %v5846
        %v5849 = vunpack.c.l.s4 1966171168
        %v5850 = vunpack.c.0.s8 %v5849
        %v5851 = vlaneseq
        %v5852 = vshrl.u32 %v5851, 7
        %v5853 = vsub.s32 %v5850, %v5852
        %v5854 = vrot.slane %v5215, %v5853
        %v5856 = vunpack.c.l.s4 1966171168
        %v5857 = vunpack.c.0.s8 %v5856
        %v5858 = vlaneseq
        %v5859 = vshrl.u32 %v5858, 7
        %v5860 = vsub.s32 %v5857, %v5859
        %v5861 = vrot.slane %v5854, %v5860
        %v5863 = vunpack.c.l.s4 1966171168
        %v5864 = vunpack.c.0.s8 %v5863
        %v5865 = vlaneseq
        %v5866 = vshrl.u32 %v5865, 7
        %v5867 = vsub.s32 %v5864, %v5866
        %v5868 = vrot.slane %v5216, %v5867
        %v5870 = vunpack.c.l.s4 1966171168
        %v5871 = vunpack.c.0.s8 %v5870
        %v5872 = vlaneseq
        %v5873 = vshrl.u32 %v5872, 7
        %v5874 = vsub.s32 %v5871, %v5873
        %v5875 = vrot.slane %v5868, %v5874
        %v5877 = vunpack.c.l.s4 1966171168
        %v5878 = vunpack.c.0.s8 %v5877
        %v5879 = vlaneseq
        %v5880 = vshrl.u32 %v5879, 7
        %v5881 = vsub.s32 %v5878, %v5880
        %v5882 = vrot.slane %v5217, %v5881
        %v5884 = vunpack.c.l.s4 1966171168
        %v5885 = vunpack.c.0.s8 %v5884
        %v5886 = vlaneseq
        %v5887 = vshrl.u32 %v5886, 7
        %v5888 = vsub.s32 %v5885, %v5887
        %v5889 = vrot.slane %v5882, %v5888
        %v5891 = vunpack.c.l.s4 1966171168
        %v5892 = vunpack.c.0.s8 %v5891
        %v5893 = vlaneseq
        %v5894 = vshrl.u32 %v5893, 7
        %v5895 = vsub.s32 %v5892, %v5894
        %v5896 = vrot.slane %v5232, %v5895
        %v5898 = vunpack.c.l.s4 1966171168
        %v5899 = vunpack.c.0.s8 %v5898
        %v5900 = vlaneseq
        %v5901 = vshrl.u32 %v5900, 7
        %v5902 = vsub.s32 %v5899, %v5901
        %v5903 = vrot.slane %v5896, %v5902
        %v5905 = vunpack.c.l.s4 1966171168
        %v5906 = vunpack.c.0.s8 %v5905
        %v5907 = vlaneseq
        %v5908 = vshrl.u32 %v5907, 7
        %v5909 = vsub.s32 %v5906, %v5908
        %v5910 = vrot.slane %v5239, %v5909
        %v5912 = vunpack.c.l.s4 1966171168
        %v5913 = vunpack.c.0.s8 %v5912
        %v5914 = vlaneseq
        %v5915 = vshrl.u32 %v5914, 7
        %v5916 = vsub.s32 %v5913, %v5915
        %v5917 = vrot.slane %v5910, %v5916
        %v5919 = vunpack.c.l.s4 1966171168
        %v5920 = vunpack.c.0.s8 %v5919
        %v5921 = vlaneseq
        %v5922 = vshrl.u32 %v5921, 7
        %v5923 = vsub.s32 %v5920, %v5922
        %v5924 = vrot.slane %v5240, %v5923
        %v5926 = vunpack.c.l.s4 1966171168
        %v5927 = vunpack.c.0.s8 %v5926
        %v5928 = vlaneseq
        %v5929 = vshrl.u32 %v5928, 7
        %v5930 = vsub.s32 %v5927, %v5929
        %v5931 = vrot.slane %v5924, %v5930
        %v5933 = vunpack.c.l.s4 1966171168
        %v5934 = vunpack.c.0.s8 %v5933
        %v5935 = vlaneseq
        %v5936 = vshrl.u32 %v5935, 7
        %v5937 = vsub.s32 %v5934, %v5936
        %v5938 = vrot.slane %v5241, %v5937
        %v5940 = vunpack.c.l.s4 1966171168
        %v5941 = vunpack.c.0.s8 %v5940
        %v5942 = vlaneseq
        %v5943 = vshrl.u32 %v5942, 7
        %v5944 = vsub.s32 %v5941, %v5943
        %v5945 = vrot.slane %v5938, %v5944
        %v5947 = vunpack.c.l.s4 1966171168
        %v5948 = vunpack.c.0.s8 %v5947
        %v5949 = vlaneseq
        %v5950 = vshrl.u32 %v5949, 7
        %v5951 = vsub.s32 %v5948, %v5950
        %v5952 = vrot.slane %v5256, %v5951
        %v5954 = vunpack.c.l.s4 1966171168
        %v5955 = vunpack.c.0.s8 %v5954
        %v5956 = vlaneseq
        %v5957 = vshrl.u32 %v5956, 7
        %v5958 = vsub.s32 %v5955, %v5957
        %v5959 = vrot.slane %v5952, %v5958
        %v5961 = vunpack.c.l.s4 1966171168
        %v5962 = vunpack.c.0.s8 %v5961
        %v5963 = vlaneseq
        %v5964 = vshrl.u32 %v5963, 7
        %v5965 = vsub.s32 %v5962, %v5964
        %v5966 = vrot.slane %v5263, %v5965
        %v5968 = vunpack.c.l.s4 1966171168
        %v5969 = vunpack.c.0.s8 %v5968
        %v5970 = vlaneseq
        %v5971 = vshrl.u32 %v5970, 7
        %v5972 = vsub.s32 %v5969, %v5971
        %v5973 = vrot.slane %v5966, %v5972
        %v5975 = vunpack.c.l.s4 1966171168
        %v5976 = vunpack.c.0.s8 %v5975
        %v5977 = vlaneseq
        %v5978 = vshrl.u32 %v5977, 7
        %v5979 = vsub.s32 %v5976, %v5978
        %v5980 = vrot.slane %v5264, %v5979
        %v5982 = vunpack.c.l.s4 1966171168
        %v5983 = vunpack.c.0.s8 %v5982
        %v5984 = vlaneseq
        %v5985 = vshrl.u32 %v5984, 7
        %v5986 = vsub.s32 %v5983, %v5985
        %v5987 = vrot.slane %v5980, %v5986
        %v5989 = vunpack.c.l.s4 1966171168
        %v5990 = vunpack.c.0.s8 %v5989
        %v5991 = vlaneseq
        %v5992 = vshrl.u32 %v5991, 7
        %v5993 = vsub.s32 %v5990, %v5992
        %v5994 = vrot.slane %v5265, %v5993
        %v5996 = vunpack.c.l.s4 1966171168
        %v5997 = vunpack.c.0.s8 %v5996
        %v5998 = vlaneseq
        %v5999 = vshrl.u32 %v5998, 7
        %v6000 = vsub.s32 %v5997, %v5999
        %v6001 = vrot.slane %v5994, %v6000
        %v6003 = vunpack.c.l.s4 1966171168
        %v6004 = vunpack.c.0.s8 %v6003
        %v6005 = vlaneseq
        %v6006 = vshrl.u32 %v6005, 7
        %v6007 = vsub.s32 %v6004, %v6006
        %v6008 = vrot.slane %v5280, %v6007
        %v6010 = vunpack.c.l.s4 1966171168
        %v6011 = vunpack.c.0.s8 %v6010
        %v6012 = vlaneseq
        %v6013 = vshrl.u32 %v6012, 7
        %v6014 = vsub.s32 %v6011, %v6013
        %v6015 = vrot.slane %v6008, %v6014
        %v6017 = vunpack.c.l.s4 1966171168
        %v6018 = vunpack.c.0.s8 %v6017
        %v6019 = vlaneseq
        %v6020 = vshrl.u32 %v6019, 7
        %v6021 = vsub.s32 %v6018, %v6020
        %v6022 = vrot.slane %v5287, %v6021
        %v6024 = vunpack.c.l.s4 1966171168
        %v6025 = vunpack.c.0.s8 %v6024
        %v6026 = vlaneseq
        %v6027 = vshrl.u32 %v6026, 7
        %v6028 = vsub.s32 %v6025, %v6027
        %v6029 = vrot.slane %v6022, %v6028
        %v6031 = vunpack.c.l.s4 1966171168
        %v6032 = vunpack.c.0.s8 %v6031
        %v6033 = vlaneseq
        %v6034 = vshrl.u32 %v6033, 7
        %v6035 = vsub.s32 %v6032, %v6034
        %v6036 = vrot.slane %v5288, %v6035
        %v6038 = vunpack.c.l.s4 1966171168
        %v6039 = vunpack.c.0.s8 %v6038
        %v6040 = vlaneseq
        %v6041 = vshrl.u32 %v6040, 7
        %v6042 = vsub.s32 %v6039, %v6041
        %v6043 = vrot.slane %v6036, %v6042
        %v6045 = vunpack.c.l.s4 1966171168
        %v6046 = vunpack.c.0.s8 %v6045
        %v6047 = vlaneseq
        %v6048 = vshrl.u32 %v6047, 7
        %v6049 = vsub.s32 %v6046, %v6048
        %v6050 = vrot.slane %v5289, %v6049
        %v6052 = vunpack.c.l.s4 1966171168
        %v6053 = vunpack.c.0.s8 %v6052
        %v6054 = vlaneseq
        %v6055 = vshrl.u32 %v6054, 7
        %v6056 = vsub.s32 %v6053, %v6055
        %v6057 = vrot.slane %v6050, %v6056
        %v6059 = vunpack.c.l.s4 1966171168
        %v6060 = vunpack.c.0.s8 %v6059
        %v6061 = vlaneseq
        %v6062 = vshrl.u32 %v6061, 7
        %v6063 = vsub.s32 %v6060, %v6062
        %v6064 = vrot.slane %v5304, %v6063
        %v6066 = vunpack.c.l.s4 1966171168
        %v6067 = vunpack.c.0.s8 %v6066
        %v6068 = vlaneseq
        %v6069 = vshrl.u32 %v6068, 7
        %v6070 = vsub.s32 %v6067, %v6069
        %v6071 = vrot.slane %v6064, %v6070
        %v6073 = vunpack.c.l.s4 1966171168
        %v6074 = vunpack.c.0.s8 %v6073
        %v6075 = vlaneseq
        %v6076 = vshrl.u32 %v6075, 7
        %v6077 = vsub.s32 %v6074, %v6076
        %v6078 = vrot.slane %v5311, %v6077
        %v6080 = vunpack.c.l.s4 1966171168
        %v6081 = vunpack.c.0.s8 %v6080
        %v6082 = vlaneseq
        %v6083 = vshrl.u32 %v6082, 7
        %v6084 = vsub.s32 %v6081, %v6083
        %v6085 = vrot.slane %v6078, %v6084
        %v6087 = vunpack.c.l.s4 1966171168
        %v6088 = vunpack.c.0.s8 %v6087
        %v6089 = vlaneseq
        %v6090 = vshrl.u32 %v6089, 7
        %v6091 = vsub.s32 %v6088, %v6090
        %v6092 = vrot.slane %v5312, %v6091
        %v6094 = vunpack.c.l.s4 1966171168
        %v6095 = vunpack.c.0.s8 %v6094
        %v6096 = vlaneseq
        %v6097 = vshrl.u32 %v6096, 7
        %v6098 = vsub.s32 %v6095, %v6097
        %v6099 = vrot.slane %v6092, %v6098
        %v6101 = vunpack.c.l.s4 1966171168
        %v6102 = vunpack.c.0.s8 %v6101
        %v6103 = vlaneseq
        %v6104 = vshrl.u32 %v6103, 7
        %v6105 = vsub.s32 %v6102, %v6104
        %v6106 = vrot.slane %v5313, %v6105
        %v6108 = vunpack.c.l.s4 1966171168
        %v6109 = vunpack.c.0.s8 %v6108
        %v6110 = vlaneseq
        %v6111 = vshrl.u32 %v6110, 7
        %v6112 = vsub.s32 %v6109, %v6111
        %v6113 = vrot.slane %v6106, %v6112
        %v6115 = vunpack.c.l.s4 1966171168
        %v6116 = vunpack.c.0.s8 %v6115
        %v6117 = vlaneseq
        %v6118 = vshrl.u32 %v6117, 7
        %v6119 = vsub.s32 %v6116, %v6118
        %v6120 = vrot.slane %v5328, %v6119
        %v6122 = vunpack.c.l.s4 1966171168
        %v6123 = vunpack.c.0.s8 %v6122
        %v6124 = vlaneseq
        %v6125 = vshrl.u32 %v6124, 7
        %v6126 = vsub.s32 %v6123, %v6125
        %v6127 = vrot.slane %v6120, %v6126
        %v6129 = vunpack.c.l.s4 1966171168
        %v6130 = vunpack.c.0.s8 %v6129
        %v6131 = vlaneseq
        %v6132 = vshrl.u32 %v6131, 7
        %v6133 = vsub.s32 %v6130, %v6132
        %v6134 = vrot.slane %v5335, %v6133
        %v6136 = vunpack.c.l.s4 1966171168
        %v6137 = vunpack.c.0.s8 %v6136
        %v6138 = vlaneseq
        %v6139 = vshrl.u32 %v6138, 7
        %v6140 = vsub.s32 %v6137, %v6139
        %v6141 = vrot.slane %v6134, %v6140
        %v6143 = vunpack.c.l.s4 1966171168
        %v6144 = vunpack.c.0.s8 %v6143
        %v6145 = vlaneseq
        %v6146 = vshrl.u32 %v6145, 7
        %v6147 = vsub.s32 %v6144, %v6146
        %v6148 = vrot.slane %v5336, %v6147
        %v6150 = vunpack.c.l.s4 1966171168
        %v6151 = vunpack.c.0.s8 %v6150
        %v6152 = vlaneseq
        %v6153 = vshrl.u32 %v6152, 7
        %v6154 = vsub.s32 %v6151, %v6153
        %v6155 = vrot.slane %v6148, %v6154
        %v6157 = vunpack.c.l.s4 1966171168
        %v6158 = vunpack.c.0.s8 %v6157
        %v6159 = vlaneseq
        %v6160 = vshrl.u32 %v6159, 7
        %v6161 = vsub.s32 %v6158, %v6160
        %v6162 = vrot.slane %v5337, %v6161
        %v6164 = vunpack.c.l.s4 1966171168
        %v6165 = vunpack.c.0.s8 %v6164
        %v6166 = vlaneseq
        %v6167 = vshrl.u32 %v6166, 7
        %v6168 = vsub.s32 %v6165, %v6167
        %v6169 = vrot.slane %v6162, %v6168
        %v6171 = vunpack.c.l.s4 1966171168
        %v6172 = vunpack.c.0.s8 %v6171
        %v6173 = vlaneseq
        %v6174 = vshrl.u32 %v6173, 7
        %v6175 = vsub.s32 %v6172, %v6174
        %v6176 = vrot.slane %v5352, %v6175
        %v6178 = vunpack.c.l.s4 1966171168
        %v6179 = vunpack.c.0.s8 %v6178
        %v6180 = vlaneseq
        %v6181 = vshrl.u32 %v6180, 7
        %v6182 = vsub.s32 %v6179, %v6181
        %v6183 = vrot.slane %v6176, %v6182
        %v6185 = vunpack.c.l.s4 1966171168
        %v6186 = vunpack.c.0.s8 %v6185
        %v6187 = vlaneseq
        %v6188 = vshrl.u32 %v6187, 7
        %v6189 = vsub.s32 %v6186, %v6188
        %v6190 = vrot.slane %v5359, %v6189
        %v6192 = vunpack.c.l.s4 1966171168
        %v6193 = vunpack.c.0.s8 %v6192
        %v6194 = vlaneseq
        %v6195 = vshrl.u32 %v6194, 7
        %v6196 = vsub.s32 %v6193, %v6195
        %v6197 = vrot.slane %v6190, %v6196
        %v6199 = vunpack.c.l.s4 1966171168
        %v6200 = vunpack.c.0.s8 %v6199
        %v6201 = vlaneseq
        %v6202 = vshrl.u32 %v6201, 7
        %v6203 = vsub.s32 %v6200, %v6202
        %v6204 = vrot.slane %v5360, %v6203
        %v6206 = vunpack.c.l.s4 1966171168
        %v6207 = vunpack.c.0.s8 %v6206
        %v6208 = vlaneseq
        %v6209 = vshrl.u32 %v6208, 7
        %v6210 = vsub.s32 %v6207, %v6209
        %v6211 = vrot.slane %v6204, %v6210
        %v6213 = vunpack.c.l.s4 1966171168
        %v6214 = vunpack.c.0.s8 %v6213
        %v6215 = vlaneseq
        %v6216 = vshrl.u32 %v6215, 7
        %v6217 = vsub.s32 %v6214, %v6216
        %v6218 = vrot.slane %v5361, %v6217
        %v6220 = vunpack.c.l.s4 1966171168
        %v6221 = vunpack.c.0.s8 %v6220
        %v6222 = vlaneseq
        %v6223 = vshrl.u32 %v6222, 7
        %v6224 = vsub.s32 %v6221, %v6223
        %v6225 = vrot.slane %v6218, %v6224
        %v6227 = vunpack.c.l.s4 1966171168
        %v6228 = vunpack.c.0.s8 %v6227
        %v6229 = vlaneseq
        %v6230 = vshrl.u32 %v6229, 7
        %v6231 = vsub.s32 %v6228, %v6230
        %v6232 = vrot.slane %v5376, %v6231
        %v6234 = vunpack.c.l.s4 1966171168
        %v6235 = vunpack.c.0.s8 %v6234
        %v6236 = vlaneseq
        %v6237 = vshrl.u32 %v6236, 7
        %v6238 = vsub.s32 %v6235, %v6237
        %v6239 = vrot.slane %v6232, %v6238
        %v6241 = vunpack.c.l.s4 1966171168
        %v6242 = vunpack.c.0.s8 %v6241
        %v6243 = vlaneseq
        %v6244 = vshrl.u32 %v6243, 7
        %v6245 = vsub.s32 %v6242, %v6244
        %v6246 = vrot.slane %v5383, %v6245
        %v6248 = vunpack.c.l.s4 1966171168
        %v6249 = vunpack.c.0.s8 %v6248
        %v6250 = vlaneseq
        %v6251 = vshrl.u32 %v6250, 7
        %v6252 = vsub.s32 %v6249, %v6251
        %v6253 = vrot.slane %v6246, %v6252
        %v6255 = vunpack.c.l.s4 1966171168
        %v6256 = vunpack.c.0.s8 %v6255
        %v6257 = vlaneseq
        %v6258 = vshrl.u32 %v6257, 7
        %v6259 = vsub.s32 %v6256, %v6258
        %v6260 = vrot.slane %v5384, %v6259
        %v6262 = vunpack.c.l.s4 1966171168
        %v6263 = vunpack.c.0.s8 %v6262
        %v6264 = vlaneseq
        %v6265 = vshrl.u32 %v6264, 7
        %v6266 = vsub.s32 %v6263, %v6265
        %v6267 = vrot.slane %v6260, %v6266
        %v6269 = vunpack.c.l.s4 1966171168
        %v6270 = vunpack.c.0.s8 %v6269
        %v6271 = vlaneseq
        %v6272 = vshrl.u32 %v6271, 7
        %v6273 = vsub.s32 %v6270, %v6272
        %v6274 = vrot.slane %v5385, %v6273
        %v6276 = vunpack.c.l.s4 1966171168
        %v6277 = vunpack.c.0.s8 %v6276
        %v6278 = vlaneseq
        %v6279 = vshrl.u32 %v6278, 7
        %v6280 = vsub.s32 %v6277, %v6279
        %v6281 = vrot.slane %v6274, %v6280
        %v6282 = vunpack.c.l.b16 %v5399
        %v6283 = vunpack.c.l.b16 %v5413
        %v6284 = vunpack.c.l.b16 %v5427
        %v6285 = vunpack.c.l.b16 %v5441
        %v6286 = vunpack.c.l.b16 %v5455
        %v6287 = vunpack.c.l.b16 %v5469
        %v6288 = vunpack.c.l.b16 %v5483
        %v6289 = vunpack.c.l.b16 %v5497
        %v6290 = vunpack.c.l.b16 %v5511
        %v6291 = vunpack.c.l.b16 %v5525
        %v6292 = vunpack.c.l.b16 %v5539
        %v6293 = vunpack.c.l.b16 %v5553
        %v6294 = vunpack.c.l.b16 %v5567
        %v6295 = vunpack.c.l.b16 %v5581
        %v6296 = vunpack.c.l.b16 %v5595
        %v6297 = vunpack.c.l.b16 %v5609
        %v6298 = vunpack.c.l.b16 %v5623
        %v6299 = vunpack.c.l.b16 %v5637
        %v6300 = vunpack.c.l.b16 %v5651
        %v6301 = vunpack.c.l.b16 %v5665
        %v6302 = vunpack.c.l.b16 %v5679
        %v6303 = vunpack.c.l.b16 %v5693
        %v6304 = vunpack.c.l.b16 %v5707
        %v6305 = vunpack.c.l.b16 %v5721
        %v6306 = vunpack.c.l.b16 %v5735
        %v6307 = vunpack.c.l.b16 %v5749
        %v6308 = vunpack.c.l.b16 %v5763
        %v6309 = vunpack.c.l.b16 %v5777
        %v6310 = vunpack.c.l.b16 %v5791
        %v6311 = vunpack.c.l.b16 %v5805
        %v6312 = vunpack.c.l.b16 %v5819
        %v6313 = vunpack.c.l.b16 %v5833
        %v6314 = vunpack.c.l.b16 %v5847
        %v6315 = vunpack.c.l.b16 %v5861
        %v6316 = vunpack.c.l.b16 %v5875
        %v6317 = vunpack.c.l.b16 %v5889
        %v6318 = vunpack.c.l.b16 %v5903
        %v6319 = vunpack.c.l.b16 %v5917
        %v6320 = vunpack.c.l.b16 %v5931
        %v6321 = vunpack.c.l.b16 %v5945
        %v6322 = vunpack.c.l.b16 %v5959
        %v6323 = vunpack.c.l.b16 %v5973
        %v6324 = vunpack.c.l.b16 %v5987
        %v6325 = vunpack.c.l.b16 %v6001
        %v6326 = vunpack.c.l.b16 %v6015
        %v6327 = vunpack.c.l.b16 %v6029
        %v6328 = vunpack.c.l.b16 %v6043
        %v6329 = vunpack.c.l.b16 %v6057
        %v6330 = vunpack.c.l.b16 %v6071
        %v6331 = vunpack.c.l.b16 %v6085
        %v6332 = vunpack.c.l.b16 %v6099
        %v6333 = vunpack.c.l.b16 %v6113
        %v6334 = vunpack.c.l.b16 %v6127
        %v6335 = vunpack.c.l.b16 %v6141
        %v6336 = vunpack.c.l.b16 %v6155
        %v6337 = vunpack.c.l.b16 %v6169
        %v6338 = vunpack.c.l.b16 %v6183
        %v6339 = vunpack.c.l.b16 %v6197
        %v6340 = vunpack.c.l.b16 %v6211
        %v6341 = vunpack.c.l.b16 %v6225
        %v6342 = vunpack.c.l.b16 %v6239
        %v6343 = vunpack.c.l.b16 %v6253
        %v6344 = vunpack.c.l.b16 %v6267
        %v6345 = vunpack.c.l.b16 %v6281
        %v6346 = vrot.slane %v6283, 7
        %v6347 = vsel %vm2517, %v6346, %v6282
        %v6348 = vrot.slane %v6284, 6
        %v6349 = vsel %vm2520, %v6348, %v6347
        %v6350 = vrot.slane %v6285, 5
        %v6351 = vsel %vm2523, %v6350, %v6349
        %v6352 = vrot.slane %v6286, 4
        %v6353 = vsel %vm2526, %v6352, %v6351
        %v6354 = vrot.slane %v6287, 3
        %v6355 = vsel %vm2529, %v6354, %v6353
        %v6356 = vrot.slane %v6288, 2
        %v6357 = vsel %vm2532, %v6356, %v6355
        %v6358 = vrot.slane %v6289, 1
        %v6359 = vsel %vm2535, %v6358, %v6357
        %v6360 = vrot.slane %v6291, 7
        %v6361 = vsel %vm2517, %v6360, %v6290
        %v6362 = vrot.slane %v6292, 6
        %v6363 = vsel %vm2520, %v6362, %v6361
        %v6364 = vrot.slane %v6293, 5
        %v6365 = vsel %vm2523, %v6364, %v6363
        %v6366 = vrot.slane %v6294, 4
        %v6367 = vsel %vm2526, %v6366, %v6365
        %v6368 = vrot.slane %v6295, 3
        %v6369 = vsel %vm2529, %v6368, %v6367
        %v6370 = vrot.slane %v6296, 2
        %v6371 = vsel %vm2532, %v6370, %v6369
        %v6372 = vrot.slane %v6297, 1
        %v6373 = vsel %vm2535, %v6372, %v6371
        %v6374 = vrot.slane %v6299, 7
        %v6375 = vsel %vm2517, %v6374, %v6298
        %v6376 = vrot.slane %v6300, 6
        %v6377 = vsel %vm2520, %v6376, %v6375
        %v6378 = vrot.slane %v6301, 5
        %v6379 = vsel %vm2523, %v6378, %v6377
        %v6380 = vrot.slane %v6302, 4
        %v6381 = vsel %vm2526, %v6380, %v6379
        %v6382 = vrot.slane %v6303, 3
        %v6383 = vsel %vm2529, %v6382, %v6381
        %v6384 = vrot.slane %v6304, 2
        %v6385 = vsel %vm2532, %v6384, %v6383
        %v6386 = vrot.slane %v6305, 1
        %v6387 = vsel %vm2535, %v6386, %v6385
        %v6388 = vrot.slane %v6307, 7
        %v6389 = vsel %vm2517, %v6388, %v6306
        %v6390 = vrot.slane %v6308, 6
        %v6391 = vsel %vm2520, %v6390, %v6389
        %v6392 = vrot.slane %v6309, 5
        %v6393 = vsel %vm2523, %v6392, %v6391
        %v6394 = vrot.slane %v6310, 4
        %v6395 = vsel %vm2526, %v6394, %v6393
        %v6396 = vrot.slane %v6311, 3
        %v6397 = vsel %vm2529, %v6396, %v6395
        %v6398 = vrot.slane %v6312, 2
        %v6399 = vsel %vm2532, %v6398, %v6397
        %v6400 = vrot.slane %v6313, 1
        %v6401 = vsel %vm2535, %v6400, %v6399
        %v6402 = vrot.slane %v6315, 7
        %v6403 = vsel %vm2517, %v6402, %v6314
        %v6404 = vrot.slane %v6316, 6
        %v6405 = vsel %vm2520, %v6404, %v6403
        %v6406 = vrot.slane %v6317, 5
        %v6407 = vsel %vm2523, %v6406, %v6405
        %v6408 = vrot.slane %v6318, 4
        %v6409 = vsel %vm2526, %v6408, %v6407
        %v6410 = vrot.slane %v6319, 3
        %v6411 = vsel %vm2529, %v6410, %v6409
        %v6412 = vrot.slane %v6320, 2
        %v6413 = vsel %vm2532, %v6412, %v6411
        %v6414 = vrot.slane %v6321, 1
        %v6415 = vsel %vm2535, %v6414, %v6413
        %v6416 = vrot.slane %v6323, 7
        %v6417 = vsel %vm2517, %v6416, %v6322
        %v6418 = vrot.slane %v6324, 6
        %v6419 = vsel %vm2520, %v6418, %v6417
        %v6420 = vrot.slane %v6325, 5
        %v6421 = vsel %vm2523, %v6420, %v6419
        %v6422 = vrot.slane %v6326, 4
        %v6423 = vsel %vm2526, %v6422, %v6421
        %v6424 = vrot.slane %v6327, 3
        %v6425 = vsel %vm2529, %v6424, %v6423
        %v6426 = vrot.slane %v6328, 2
        %v6427 = vsel %vm2532, %v6426, %v6425
        %v6428 = vrot.slane %v6329, 1
        %v6429 = vsel %vm2535, %v6428, %v6427
        %v6430 = vrot.slane %v6331, 7
        %v6431 = vsel %vm2517, %v6430, %v6330
        %v6432 = vrot.slane %v6332, 6
        %v6433 = vsel %vm2520, %v6432, %v6431
        %v6434 = vrot.slane %v6333, 5
        %v6435 = vsel %vm2523, %v6434, %v6433
        %v6436 = vrot.slane %v6334, 4
        %v6437 = vsel %vm2526, %v6436, %v6435
        %v6438 = vrot.slane %v6335, 3
        %v6439 = vsel %vm2529, %v6438, %v6437
        %v6440 = vrot.slane %v6336, 2
        %v6441 = vsel %vm2532, %v6440, %v6439
        %v6442 = vrot.slane %v6337, 1
        %v6443 = vsel %vm2535, %v6442, %v6441
        %v6444 = vrot.slane %v6339, 7
        %v6445 = vsel %vm2517, %v6444, %v6338
        %v6446 = vrot.slane %v6340, 6
        %v6447 = vsel %vm2520, %v6446, %v6445
        %v6448 = vrot.slane %v6341, 5
        %v6449 = vsel %vm2523, %v6448, %v6447
        %v6450 = vrot.slane %v6342, 4
        %v6451 = vsel %vm2526, %v6450, %v6449
        %v6452 = vrot.slane %v6343, 3
        %v6453 = vsel %vm2529, %v6452, %v6451
        %v6454 = vrot.slane %v6344, 2
        %v6455 = vsel %vm2532, %v6454, %v6453
        %v6456 = vrot.slane %v6345, 1
        %v6457 = vsel %vm2535, %v6456, %v6455
        %v6458 = vpack.c.b16 %v6373, %v6359
        %v6459 = vpack.c.b16 %v6401, %v6387
        %v6460 = vpack.c.b16 %v6429, %v6415
        %v6461 = vpack.c.b16 %v6457, %v6443
        %6462 = vrot.lane.b32.xlu0 %v6458, 32
        %v6463 = vpop.permute.xlu0 %6462
        %6464 = vrot.lane.b32.xlu0 %v6459, 32
        %v6465 = vpop.permute.xlu0 %6464
        %6466 = vrot.lane.b32.xlu0 %v6460, 32
        %v6467 = vpop.permute.xlu0 %6466
        %6468 = vrot.lane.b32.xlu0 %v6461, 32
        %v6469 = vpop.permute.xlu0 %6468
        %v6472 = vsel %vm4631, %v4998, %v6463
        %v6475 = vsel %vm4631, %v4999, %v6465
        %v6478 = vsel %vm4631, %v5000, %v6467
        %v6481 = vsel %vm4631, %v5001, %v6469
        %v6482 = vld [vmem:[%s5] sm:$0xf]
        %v6483 = vld [vmem:[%s5 + $0x4] sm:$0xf]
        %v6484 = vld [vmem:[%s5 + $0x8] sm:$0xf]
        %v6485 = vld [vmem:[%s5 + $0xc] sm:$0xf]
        %v6486 = vld [vmem:[%s5 + $0x10] sm:$0xf]
        %v6487 = vld [vmem:[%s5 + $0x14] sm:$0xf]
        %v6488 = vld [vmem:[%s5 + $0x18] sm:$0xf]
        %v6489 = vld [vmem:[%s5 + $0x1c] sm:$0xf]
        %v6490 = vld [vmem:[%s5 + $0x20] sm:$0xf]
        %v6491 = vld [vmem:[%s5 + $0x24] sm:$0xf]
        %v6492 = vld [vmem:[%s5 + $0x28] sm:$0xf]
        %v6493 = vld [vmem:[%s5 + $0x2c] sm:$0xf]
        %v6494 = vld [vmem:[%s6] sm:$0x1]
        %v6496 = vlaneseq
        %v6497 = vshrl.u32 %v6496, 7
        %v6498 = vsub.s32 0, %v6497
        %v6499 = vrot.slane %v6494, %v6498
        %v6513 = vunpack.c.l.b16 %v6482
        %v6514 = vunpack.c.l.b16 %v6483
        %v6515 = vunpack.c.l.b16 %v6484
        %v6516 = vunpack.c.l.b16 %v6485
        %v6517 = vunpack.c.l.b16 %v6486
        %v6518 = vunpack.c.l.b16 %v6487
        %v6519 = vunpack.c.l.b16 %v6488
        %v6520 = vunpack.c.l.b16 %v6489
        %v6521 = vunpack.c.l.b16 %v6490
        %v6522 = vunpack.c.l.b16 %v6491
        %v6523 = vunpack.c.l.b16 %v6492
        %v6524 = vunpack.c.l.b16 %v6493
        %v6525 = vpack.c.b16 %v6514, %v6513
        %v6526 = vpack.c.b16 %v6516, %v6515
        %v6527 = vpack.c.b16 %v6518, %v6517
        %v6528 = vpack.c.b16 %v6520, %v6519
        %v6529 = vpack.c.b16 %v6522, %v6521
        %v6530 = vpack.c.b16 %v6524, %v6523
        %v6537 = vsel %vm4652, %v6472, 0
        %v6539 = vsel %vm4652, %v6475, 0
        %v6541 = vsel %vm4652, %v6478, 0
        %v6543 = vsel %vm4652, %v6481, 0
        %6545 = vmatprep.subr.bf16.mxu0 0
        %6546 = vmatpush1.bf16.msra.mxu0 %v6525
        %6547 = vmatprep.subr.bf16.mxu0 0
        %6548 = vmatpush1.bf16.msra.mxu0 %v6526
        %6549 = vmatprep.subr.bf16.mxu0 0
        %6550 = vmatpush1.bf16.msra.mxu0 %v6527
        %6551 = vmatprep.subr.bf16.mxu0 0
        %6552 = vmatpush1.bf16.msra.mxu0 %v6528
        %6553 = vmatprep.subr.bf16.mxu0 0
        %6554 = vmatpush1.bf16.msra.mxu0 %v6529
        %6555 = vmatprep.subr.bf16.mxu0 0
        %6556 = vmatpush1.bf16.msra.mxu0 %v6530
        %6557 = vmatprep.subr.bf16.mxu0 0
        %6558 = vmatpush1.bf16.msra.mxu0 0
        %6559 = vmatprep.subr.bf16.mxu0 0
        %6560 = vmatpush1.bf16.msra.mxu0 0
        %6561 = vmatprep.subr.bf16.mxu0 0
        %6562 = vmatpush1.bf16.msra.mxu0 0
        %6563 = vmatprep.subr.bf16.mxu0 0
        %6564 = vmatpush1.bf16.msra.mxu0 0
        %6565 = vmatprep.subr.bf16.mxu0 0
        %6566 = vmatpush1.bf16.msra.mxu0 0
        %6567 = vmatprep.subr.bf16.mxu0 0
        %6568 = vmatpush1.bf16.msra.mxu0 0
        %6569 = vmatprep.subr.bf16.mxu0 0
        %6570 = vmatpush1.bf16.msra.mxu0 0
        %6571 = vmatprep.subr.bf16.mxu0 0
        %6572 = vmatpush1.bf16.msra.mxu0 0
        %6573 = vmatprep.subr.bf16.mxu0 0
        %6574 = vmatpush1.bf16.msra.mxu0 0
        %6575 = vmatprep.subr.bf16.mxu0 0
        %6576 = vmatpush1.bf16.msra.mxu0 0
        %6577 = vmatprep.mubr.bf16.mxu0 0
        %6578 = vmatmul.mubr.bf16.gmra.mrb[0].mxu0 %v6537
        %v6579 = vpop.f32.mrb[0].mxu0
        %v6580 = vadd.f32 %v6499, %v6579
        %v6581 = vpop.f32.mrb[0].mxu0
        %v6582 = vpop.f32.mrb[0].mxu0
        %v6583 = vadd.f32 %v6499, %v6582
        %v6584 = vpop.f32.mrb[0].mxu0
        %6585 = vmatprep.mubr.bf16.mxu0 0
        %6586 = vmatmul.mubr.bf16.gmra.mrb[0].mxu0 %v6539
        %v6587 = vpop.f32.mrb[0].mxu0
        %v6588 = vadd.f32 %v6499, %v6587
        %v6589 = vpop.f32.mrb[0].mxu0
        %v6590 = vpop.f32.mrb[0].mxu0
        %v6591 = vadd.f32 %v6499, %v6590
        %v6592 = vpop.f32.mrb[0].mxu0
        %6593 = vmatprep.mubr.bf16.mxu0 0
        %6594 = vmatmul.mubr.bf16.gmra.mrb[0].mxu0 %v6541
        %v6595 = vpop.f32.mrb[0].mxu0
        %v6596 = vadd.f32 %v6499, %v6595
        %v6597 = vpop.f32.mrb[0].mxu0
        %v6598 = vpop.f32.mrb[0].mxu0
        %v6599 = vadd.f32 %v6499, %v6598
        %v6600 = vpop.f32.mrb[0].mxu0
        %6601 = vmatprep.mubr.bf16.mxu0 0
        %6602 = vmatmul.mubr.bf16.gmra.mrb[0].mxu0 %v6543
        %v6603 = vpop.f32.mrb[0].mxu0
        %v6604 = vadd.f32 %v6499, %v6603
        %v6605 = vpop.f32.mrb[0].mxu0
        %v6606 = vpop.f32.mrb[0].mxu0
        %v6607 = vadd.f32 %v6499, %v6606
        %v6608 = vpop.f32.mrb[0].mxu0
        %6609 = vdwg.mxu0
        %v6610 = vmax.f32 %v6580, 0.0
        %v6611 = vmax.f32 %v6583, 0.0
        %v6612 = vmax.f32 %v6588, 0.0
        %v6613 = vmax.f32 %v6591, 0.0
        %v6614 = vmax.f32 %v6596, 0.0
        %v6615 = vmax.f32 %v6599, 0.0
        %v6616 = vmax.f32 %v6604, 0.0
        %v6617 = vmax.f32 %v6607, 0.0
        %6618 = vst [vmem:[%s271] sm:$0xff] %v6610
        %6619 = vst [vmem:[%s271 + $0x8] sm:$0xff] %v6611
        %6620 = vst [vmem:[%s271 + $0x10] sm:$0xff] %v6612
        %6621 = vst [vmem:[%s271 + $0x18] sm:$0xff] %v6613
        %6622 = vst [vmem:[%s271 + $0x20] sm:$0xff] %v6614
        %6623 = vst [vmem:[%s271 + $0x28] sm:$0xff] %v6615
        %6624 = vst [vmem:[%s271 + $0x30] sm:$0xff] %v6616
        %6625 = vst [vmem:[%s271 + $0x38] sm:$0xff] %v6617
        %s6626 = sand.u32 %s181, 1
        %s6627 = scalar_lea.sflag [#allocation4], %s6626
        %s6628 = sand.u32 %s181, 1
        %s6629 = smul.addr %s6628, 64
        %s6630 = scalar_lea.vmem [#allocation3], %s6629
        // Predicated region
        $region49: #{bottleneck_forward.1} parent=47 // pred_check
          %p6631 = pneg %p191
        $region50: #{bottleneck_forward.1} parent=47 // pred_check_branch
          %6633 = sbr.rel (%p6631) target = $region52
        $region51: #{bottleneck_forward.1} parent=47 // pred_region
          %s6635 = ssub.s32 1024, 1024
          %6636 = vsyncadd %s6627, %s6635
          %s6637 = smul.addr %s21, 8
          %s6638 = smul.addr %s6637, 128
          %s6639 = scalar_lea.hbm %s7, %s6638
          %s6640 = sshll.u32 %s6630, 4
          %s6641 = int_to_ptr.vmem [resolvable:$true] %s6640
          %6646 = dma.vmem_to_hbm [thread:$0]  %s6641, 1024, %s6639, %s6627, 128, 128, 8
        $region52: #{bottleneck_forward.1} parent=47 // pred_fallthru
          _
      $region48: #{bottleneck_forward.1} parent=5 // pred_fallthru
        _
      %p6647 = scmp.le.s32.totalorder 2, %s16
      // Predicated region
      $region53: #{bottleneck_forward.1} parent=5 // pred_check
        %p6648 = pneg %p6647
      $region54: #{bottleneck_forward.1} parent=5 // pred_check_branch
        %6650 = sbr.rel (%p6648) target = $region56
      $region55: #{bottleneck_forward.1} parent=5 // pred_region
        %s6651 = ssub.s32 %s16, 2
        // Predicated region
        $region57: #{bottleneck_forward.1} parent=55 // pred_check
          %p6652 = pneg %p197
        $region58: #{bottleneck_forward.1} parent=55 // pred_check_branch
          %6654 = sbr.rel (%p6652) target = $region60
        $region59: #{bottleneck_forward.1} parent=55 // pred_region
          %s6655 = sand.u32 %s182, 1
          %s6656 = scalar_lea.sflag [#allocation4], %s6655
          %s6657 = sand.u32 %s182, 1
          %s6658 = smul.addr %s6657, 64
          %s6659 = scalar_lea.vmem [#allocation3], %s6658
          %6660 = dma.done %s6656, 1024
        $region60: #{bottleneck_forward.1} parent=55 // pred_fallthru
          _
      $region56: #{bottleneck_forward.1} parent=5 // pred_fallthru
        _
    $region6: #{bottleneck_forward.1} parent=1 // loop_footer
      %s20 = sadd.s32 1, %s16
    $region7: #{bottleneck_forward.1} parent=1 // loop_footer_branch
      %15 = sbr.rel target = $region3
    $region8: #{bottleneck_forward.1} parent=1 // loop_exit
      _
    %6661 = vsyncpa [#allocation4], 1
    %s6662 = scalar_lea.sflag [#allocation4], 1
    %6663 = vsyncpa %s6662, 1

</llo_original>
